<compile_context>
chip_gen: v6e
topology: v6e:2x2x1
jax: 0.10.0
libtpu: 0.0.40
codegen_flags: <defaults>
</compile_context>

<pallas_src>
import jax
import jax.numpy as jnp
from jax.experimental import pallas as pl
from jax.experimental.pallas import tpu as pltpu

N_INPUTS1 = 11   # n_state
N_INPUTS2 = 5    # n_obs  (channels of each observation point)
N_OUTPUT = 4     # n_action
N_POINTS = 16    # number of observation points (the Conv1d length dim)

T_DIM = 64                       # T is (64, 64)
T_COLS = T_DIM * T_DIM           # 4096 outputs of the t_net2 Linear
T_CHUNK = 512                    # columns of the permuted t_net2 weight / step
N_T_CHUNKS = T_COLS // T_CHUNK   # 8 grid steps
ROWS_PER_CHUNK = T_CHUNK // T_DIM  # 8 rows of T^T per step

_BN_EPS = 1e-5
_BN_SCALE = (1.0 + _BN_EPS) ** -0.5   # eval-mode BatchNorm1d fold factor
# TODO(synk): for a trained PyTorch checkpoint, fold the real BatchNorm running
# stats / affine params here instead of the default-init identity-stats factor.


# ---------------------------------------------------------------------------
# Fused kernel: whole ActorNetwork forward, grid of N_T_CHUNKS steps that
# stream the t_net2 weight while the rest of the network computes.
# ---------------------------------------------------------------------------
def actor_kernel(s_ref, obs_ref, eps_ref,
                 w1_ref, b1_ref, w2_ref, b2_ref, w3_ref, b3_ref,
                 wo1_ref, bo1_ref,
                 wt1_ref, bt1_ref, wt2_ref, bt2_ref,
                 wt3_ref, bt3_ref,                     # 512-col chunk per step
                 wb1_ref, bb1_ref, wb2_ref, bb2_ref,
                 wc1_ref, bc1_ref, wc2_ref, bc2_ref,
                 wlx_ref, wlg_ref, bl_ref,
                 wmu_ref, bmu_ref, wstd_ref, bstd_ref,
                 action_ref,
                 x_sc, obs64_sc, tmax_sc, tt_ref):
    f32 = jnp.float32
    bf16 = jnp.bfloat16
    c = pl.program_id(0)

    def dense(x, w_ref, b_ref):
        # bf16 x bf16 MXU matmul, f32 accumulation, f32 bias, ReLU.
        y = jnp.dot(x.astype(bf16), w_ref[...],
                    preferred_element_type=f32) + b_ref[...]
        return jnp.maximum(y, 0.0)

    # ---- Stage A (grid step 0 only): everything up to the pooled t_net1
    #      feature; results persist in VMEM scratch across grid steps.
    @pl.when(c == 0)
    def _():
        # self.layer: Linear(11,128)+ReLU -> Linear(128,256)+ReLU -> Linear(256,256)+ReLU
        x = dense(s_ref[...], w1_ref, b1_ref)
        x = dense(x, w2_ref, b2_ref)
        x = dense(x, w3_ref, b3_ref)                  # (1, 256)
        x_sc[...] = x

        # obs1_layer: Conv1d(5,64,k=1)+BN+ReLU, channels-last -> (N,5) @ (5,64)
        obs64 = dense(obs_ref[...], wo1_ref, bo1_ref)  # (N, 64)
        obs64_sc[...] = obs64

        # t_net1: Conv1d(64,64)+BN+ReLU -> Conv1d(64,256)+BN+ReLU
        t = dense(obs64, wt1_ref, bt1_ref)             # (N, 64)
        t = dense(t, wt2_ref, bt2_ref)                 # (N, 256)
        # torch.max(_t, dim=2, keepdim=True) == max over the point axis
        tmax_sc[...] = jnp.max(t, axis=0, keepdims=True)  # (1, 256)

    # ---- Stage B (every grid step): one 512-wide chunk of the t_net2
    #      Linear(256,4096)+ReLU over the offline-permuted weight.  Chunk c
    #      holds columns [c*512, (c+1)*512) of T^T flattened row-major, i.e.
    #      rows c*8 .. c*8+7 of T^T, so they drop straight into the (64,64)
    #      VMEM scratch with no in-kernel reshape/transpose.
    tmax_b = tmax_sc[...].astype(bf16)                            # (1, 256)
    chunk = jnp.dot(tmax_b, wt3_ref[...],
                    preferred_element_type=f32) + bt3_ref[...]    # (1, 512)
    chunk = jnp.maximum(chunk, 0.0)
    for r in range(ROWS_PER_CHUNK):
        tt_ref[pl.ds(c * ROWS_PER_CHUNK + r, 1), :] = \
            chunk[:, r * T_DIM:(r + 1) * T_DIM]

    # ---- Stage C (last grid step): bmm + obs2/obs3 + last_layer + heads.
    @pl.when(c == pl.num_programs(0) - 1)
    def _():
        obs64 = obs64_sc[...]                                     # (N, 64)
        # torch.bmm(T, obs) in channels-last layout: obs_new = obs64 @ T^T
        obs = jnp.dot(obs64.astype(bf16), tt_ref[...].astype(bf16),
                      preferred_element_type=f32)                 # (N, 64)

        # obs2_layer: Conv1d(64,128)+BN+ReLU -> Conv1d(128,512)+BN+ReLU
        obs = dense(obs, wb1_ref, bb1_ref)                        # (N, 128)
        obs = dense(obs, wb2_ref, bb2_ref)                        # (N, 512)

        # torch.max(obs, dim=2, keepdim=True)
        obs = jnp.max(obs, axis=0, keepdims=True)                 # (1, 512)

        # obs3_layer: Linear(512,256)+ReLU -> Linear(256,256)+ReLU
        obs = dense(obs, wc1_ref, bc1_ref)
        obs = dense(obs, wc2_ref, bc2_ref)                        # (1, 256)

        # last_layer on cat([x, obs], dim=1): cat @ W == x @ W[:256] + obs @ W[256:]
        z = jnp.maximum(
            jnp.dot(x_sc[...].astype(bf16), wlx_ref[...],
                    preferred_element_type=f32)
            + jnp.dot(obs.astype(bf16), wlg_ref[...],
                      preferred_element_type=f32)
            + bl_ref[...], 0.0)                                   # (1, 256)

        zb = z.astype(bf16)
        mu = jnp.dot(zb, wmu_ref[...], preferred_element_type=f32) + bmu_ref[...]
        pre = jnp.dot(zb, wstd_ref[...], preferred_element_type=f32) + bstd_ref[...]
        # numerically stable softplus: max(x,0) + log1p(exp(-|x|))
        std = jnp.maximum(pre, 0.0) + jnp.log1p(jnp.exp(-jnp.abs(pre)))

        # Normal(mu, std).rsample() -> tanh   (eps supplied from outside)
        u = mu + std * eps_ref[...]
        action_ref[...] = jnp.tanh(u)


# ---------------------------------------------------------------------------
# Parameter init (deterministic, mimics PyTorch default Linear/Conv1d init)
# and offline preparation (BN fold, weight permutations, bf16 cast).
# ---------------------------------------------------------------------------
def _linear_init(key, fan_in, fan_out):
    kw, kb = jax.random.split(key)
    bound = 1.0 / (fan_in ** 0.5)
    w = jax.random.uniform(kw, (fan_in, fan_out), jnp.float32, -bound, bound)
    b = jax.random.uniform(kb, (1, fan_out), jnp.float32, -bound, bound)
    return w, b


def init_raw_params(seed=0):
    keys = jax.random.split(jax.random.PRNGKey(seed), 14)
    r = {}
    r["w1"], r["b1"] = _linear_init(keys[0], N_INPUTS1, 128)
    r["w2"], r["b2"] = _linear_init(keys[1], 128, 256)
    r["w3"], r["b3"] = _linear_init(keys[2], 256, 256)
    r["wo1"], r["bo1"] = _linear_init(keys[3], N_INPUTS2, 64)
    r["wt1"], r["bt1"] = _linear_init(keys[4], 64, 64)
    r["wt2"], r["bt2"] = _linear_init(keys[5], 64, 256)
    r["wt3"], r["bt3"] = _linear_init(keys[6], 256, T_COLS)
    r["wb1"], r["bb1"] = _linear_init(keys[7], 64, 128)
    r["wb2"], r["bb2"] = _linear_init(keys[8], 128, 512)
    r["wc1"], r["bc1"] = _linear_init(keys[9], 512, 256)
    r["wc2"], r["bc2"] = _linear_init(keys[10], 256, 256)
    r["wl"], r["bl"] = _linear_init(keys[11], 512, 256)
    r["wmu"], r["bmu"] = _linear_init(keys[12], 256, N_OUTPUT)
    r["wstd"], r["bstd"] = _linear_init(keys[13], 256, N_OUTPUT)
    return r


def prepare_params(raw, weight_dtype=jnp.bfloat16):
    """Fold eval-mode BatchNorm, split last_layer at the concat boundary,
    permute the t_net2 weight so its output is T^T flattened row-major, and
    cast weight matrices to bf16 (biases stay f32)."""
    bn = jnp.float32(_BN_SCALE)
    f32 = jnp.float32
    p = {}

    def put(wk, bk, bn_fold=False):
        w, b = raw[wk], raw[bk]
        if bn_fold:
            w, b = w * bn, b * bn
        p[wk], p[bk] = w.astype(weight_dtype), b.astype(f32)

    put("w1", "b1"); put("w2", "b2"); put("w3", "b3")
    put("wo1", "bo1", bn_fold=True)
    put("wt1", "bt1", bn_fold=True); put("wt2", "bt2", bn_fold=True)
    put("wb1", "bb1", bn_fold=True); put("wb2", "bb2", bn_fold=True)
    put("wc1", "bc1"); put("wc2", "bc2")
    put("wmu", "bmu"); put("wstd", "bstd")

    # t_net2 Linear(256, 4096): permute columns so that
    #   (tmax @ wt3tt)[0, a*64 + b] == (tmax @ wt3)[0, b*64 + a] == T^T[a, b]
    # i.e. every contiguous 64-lane slice of the kernel's chunk output is one
    # row of T^T (no in-kernel reshape/transpose needed).
    p["wt3tt"] = (raw["wt3"].reshape(256, T_DIM, T_DIM)
                  .transpose(0, 2, 1).reshape(256, T_COLS).astype(weight_dtype))
    p["bt3tt"] = raw["bt3"].reshape(T_DIM, T_DIM).T.reshape(1, T_COLS).astype(f32)

    # last_layer Linear(512, 256): split along the cat([x, obs]) boundary.
    p["wlx"] = raw["wl"][:256].astype(weight_dtype)
    p["wlg"] = raw["wl"][256:].astype(weight_dtype)
    p["bl"] = raw["bl"].astype(f32)
    return p


_PARAM_ORDER = ("w1", "b1", "w2", "b2", "w3", "b3",
                "wo1", "bo1",
                "wt1", "bt1", "wt2", "bt2",
                "wt3tt", "bt3tt",
                "wb1", "bb1", "wb2", "bb2",
                "wc1", "bc1", "wc2", "bc2",
                "wlx", "wlg", "bl",
                "wmu", "bmu", "wstd", "bstd")


# ---------------------------------------------------------------------------
# Forward wrapper
# ---------------------------------------------------------------------------
def actor_forward(params, state_vec, obs_points, eps):
    """state_vec: (11,) f32 (== torch state[0]); obs_points: (N_POINTS, 5) f32
    (== torch state[1]); eps: (1, 4) standard-normal noise for rsample()."""
    s = state_vec.reshape(1, N_INPUTS1).astype(jnp.float32)
    obs_nc = obs_points.astype(jnp.float32)
    eps = eps.astype(jnp.float32)

    names = ("s", "obs", "eps") + _PARAM_ORDER
    inputs = (s, obs_nc, eps) + tuple(params[k] for k in _PARAM_ORDER)

    in_specs = []
    for name, arr in zip(names, inputs):
        if name == "wt3tt":     # streamed 512-column chunks of the big weight
            in_specs.append(pl.BlockSpec((256, T_CHUNK), lambda c: (0, c)))
        elif name == "bt3tt":
            in_specs.append(pl.BlockSpec((1, T_CHUNK), lambda c: (0, c)))
        else:                   # whole array resident in VMEM, fetched once
            in_specs.append(pl.BlockSpec(arr.shape, lambda c: (0, 0)))

    grid_spec = pltpu.PrefetchScalarGridSpec(
        num_scalar_prefetch=0,
        grid=(N_T_CHUNKS,),
        in_specs=in_specs,
        out_specs=pl.BlockSpec((1, N_OUTPUT), lambda c: (0, 0)),
        scratch_shapes=[
            pltpu.VMEM((1, 256), jnp.float32),          # x (state branch)
            pltpu.VMEM((N_POINTS, 64), jnp.float32),    # obs64 (per-point feats)
            pltpu.VMEM((1, 256), jnp.float32),          # tmax (pooled t_net1)
            pltpu.VMEM((T_DIM, T_DIM), jnp.float32),    # T^T matrix
        ])

    action = pl.pallas_call(
        actor_kernel,
        out_shape=jax.ShapeDtypeStruct((1, N_OUTPUT), jnp.float32),
        grid_spec=grid_spec,
        compiler_params=pltpu.CompilerParams(
            dimension_semantics=("arbitrary",)),
    )(*inputs)
    return action[0]   # == action[0].tolist() in the torch module (as jnp array)


# ---------------------------------------------------------------------------
# Pure-JAX f32 reference (mirrors the PyTorch forward, eval-mode BN)
# ---------------------------------------------------------------------------
def actor_reference(raw, state_vec, obs_points, eps):
    relu = lambda v: jnp.maximum(v, 0.0)
    bn = jnp.float32(_BN_SCALE)
    s = state_vec.reshape(1, N_INPUTS1)
    x = relu(s @ raw["w1"] + raw["b1"])
    x = relu(x @ raw["w2"] + raw["b2"])
    x = relu(x @ raw["w3"] + raw["b3"])
    obs = relu((obs_points @ raw["wo1"] + raw["bo1"]) * bn)     # (N, 64)
    t = relu((obs @ raw["wt1"] + raw["bt1"]) * bn)
    t = relu((t @ raw["wt2"] + raw["bt2"]) * bn)
    tmax = jnp.max(t, axis=0, keepdims=True)                    # (1, 256)
    tvec = relu(tmax @ raw["wt3"] + raw["bt3"])                 # (1, 4096)
    T = tvec.reshape(T_DIM, T_DIM)                              # torch .view(-1,64,64)
    obs = obs @ T.T                                             # bmm(T, obs), channels-last
    obs = relu((obs @ raw["wb1"] + raw["bb1"]) * bn)
    obs = relu((obs @ raw["wb2"] + raw["bb2"]) * bn)
    obs = jnp.max(obs, axis=0, keepdims=True)                   # (1, 512)
    obs = relu(obs @ raw["wc1"] + raw["bc1"])
    obs = relu(obs @ raw["wc2"] + raw["bc2"])
    z = relu(jnp.concatenate([x, obs], axis=1) @ raw["wl"] + raw["bl"])
    mu = z @ raw["wmu"] + raw["bmu"]
    std = jax.nn.softplus(z @ raw["wstd"] + raw["bstd"])
    return jnp.tanh(mu + std * eps)[0]


if __name__ == "__main__":
    raw = init_raw_params(seed=0)
    params = prepare_params(raw)

    key = jax.random.PRNGKey(0)
    k_state, k_obs, k_eps = jax.random.split(key, 3)
    state_vec = jax.random.normal(k_state, (N_INPUTS1,), jnp.float32)          # state[0]
    obs_points = jax.random.normal(k_obs, (N_POINTS, N_INPUTS2), jnp.float32)  # state[1]
    eps = jax.random.normal(k_eps, (1, N_OUTPUT), jnp.float32)                 # rsample noise

    action = jax.jit(actor_forward)(params, state_vec, obs_points, eps)
    action = jax.block_until_ready(action)

    ref = actor_reference(raw, state_vec, obs_points, eps)

    assert action.shape == (N_OUTPUT,)
    assert bool(jnp.all(jnp.isfinite(action)))
    assert bool(jnp.all(jnp.abs(action) <= 1.0))        # tanh-squashed actions
    err = float(jnp.max(jnp.abs(action - ref)))
    assert err < 0.1, f"kernel deviates from f32 reference by {err}"
    print("KERNEL_OK")
</pallas_src>

<mosaic_0001>
module attributes {stable_mosaic.version = 11 : i64} {
  func.func @actor_kernel(%arg0: i32, %arg1: memref<1x11xf32, #tpu.memory_space<vmem>>, %arg2: memref<16x5xf32, #tpu.memory_space<vmem>>, %arg3: memref<1x4xf32, #tpu.memory_space<vmem>>, %arg4: memref<11x128xbf16, #tpu.memory_space<vmem>>, %arg5: memref<1x128xf32, #tpu.memory_space<vmem>>, %arg6: memref<128x256xbf16, #tpu.memory_space<vmem>>, %arg7: memref<1x256xf32, #tpu.memory_space<vmem>>, %arg8: memref<256x256xbf16, #tpu.memory_space<vmem>>, %arg9: memref<1x256xf32, #tpu.memory_space<vmem>>, %arg10: memref<5x64xbf16, #tpu.memory_space<vmem>>, %arg11: memref<1x64xf32, #tpu.memory_space<vmem>>, %arg12: memref<64x64xbf16, #tpu.memory_space<vmem>>, %arg13: memref<1x64xf32, #tpu.memory_space<vmem>>, %arg14: memref<64x256xbf16, #tpu.memory_space<vmem>>, %arg15: memref<1x256xf32, #tpu.memory_space<vmem>>, %arg16: memref<256x512xbf16, #tpu.memory_space<vmem>>, %arg17: memref<1x512xf32, #tpu.memory_space<vmem>>, %arg18: memref<64x128xbf16, #tpu.memory_space<vmem>>, %arg19: memref<1x128xf32, #tpu.memory_space<vmem>>, %arg20: memref<128x512xbf16, #tpu.memory_space<vmem>>, %arg21: memref<1x512xf32, #tpu.memory_space<vmem>>, %arg22: memref<512x256xbf16, #tpu.memory_space<vmem>>, %arg23: memref<1x256xf32, #tpu.memory_space<vmem>>, %arg24: memref<256x256xbf16, #tpu.memory_space<vmem>>, %arg25: memref<1x256xf32, #tpu.memory_space<vmem>>, %arg26: memref<256x256xbf16, #tpu.memory_space<vmem>>, %arg27: memref<256x256xbf16, #tpu.memory_space<vmem>>, %arg28: memref<1x256xf32, #tpu.memory_space<vmem>>, %arg29: memref<256x4xbf16, #tpu.memory_space<vmem>>, %arg30: memref<1x4xf32, #tpu.memory_space<vmem>>, %arg31: memref<256x4xbf16, #tpu.memory_space<vmem>>, %arg32: memref<1x4xf32, #tpu.memory_space<vmem>>, %arg33: memref<1x4xf32, #tpu.memory_space<vmem>>, %arg34: memref<1x256xf32, #tpu.memory_space<vmem>>, %arg35: memref<16x64xf32, #tpu.memory_space<vmem>>, %arg36: memref<1x256xf32, #tpu.memory_space<vmem>>, %arg37: memref<64x64xf32, #tpu.memory_space<vmem>>) attributes {dimension_semantics = [#tpu.dimension_semantics<arbitrary>], iteration_bounds = array<i64: 8>, scalar_prefetch = 0 : i64, scratch_operands = 4 : i64, tpu.core_type = #tpu.core_type<tc>, window_params = [{pipeline_mode = #tpu.pipeline_mode<synchronous>, transform_indices = @transform_0, window_bounds = array<i64: 1, 11>}, {pipeline_mode = #tpu.pipeline_mode<synchronous>, transform_indices = @transform_1, window_bounds = array<i64: 16, 5>}, {pipeline_mode = #tpu.pipeline_mode<synchronous>, transform_indices = @transform_2, window_bounds = array<i64: 1, 4>}, {pipeline_mode = #tpu.pipeline_mode<synchronous>, transform_indices = @transform_3, window_bounds = array<i64: 11, 128>}, {pipeline_mode = #tpu.pipeline_mode<synchronous>, transform_indices = @transform_4, window_bounds = array<i64: 1, 128>}, {pipeline_mode = #tpu.pipeline_mode<synchronous>, transform_indices = @transform_5, window_bounds = array<i64: 128, 256>}, {pipeline_mode = #tpu.pipeline_mode<synchronous>, transform_indices = @transform_6, window_bounds = array<i64: 1, 256>}, {pipeline_mode = #tpu.pipeline_mode<synchronous>, transform_indices = @transform_7, window_bounds = array<i64: 256, 256>}, {pipeline_mode = #tpu.pipeline_mode<synchronous>, transform_indices = @transform_8, window_bounds = array<i64: 1, 256>}, {pipeline_mode = #tpu.pipeline_mode<synchronous>, transform_indices = @transform_9, window_bounds = array<i64: 5, 64>}, {pipeline_mode = #tpu.pipeline_mode<synchronous>, transform_indices = @transform_10, window_bounds = array<i64: 1, 64>}, {pipeline_mode = #tpu.pipeline_mode<synchronous>, transform_indices = @transform_11, window_bounds = array<i64: 64, 64>}, {pipeline_mode = #tpu.pipeline_mode<synchronous>, transform_indices = @transform_12, window_bounds = array<i64: 1, 64>}, {pipeline_mode = #tpu.pipeline_mode<synchronous>, transform_indices = @transform_13, window_bounds = array<i64: 64, 256>}, {pipeline_mode = #tpu.pipeline_mode<synchronous>, transform_indices = @transform_14, window_bounds = array<i64: 1, 256>}, {transform_indices = @transform_15, window_bounds = array<i64: 256, 512>}, {transform_indices = @transform_16, window_bounds = array<i64: 1, 512>}, {pipeline_mode = #tpu.pipeline_mode<synchronous>, transform_indices = @transform_17, window_bounds = array<i64: 64, 128>}, {pipeline_mode = #tpu.pipeline_mode<synchronous>, transform_indices = @transform_18, window_bounds = array<i64: 1, 128>}, {pipeline_mode = #tpu.pipeline_mode<synchronous>, transform_indices = @transform_19, window_bounds = array<i64: 128, 512>}, {pipeline_mode = #tpu.pipeline_mode<synchronous>, transform_indices = @transform_20, window_bounds = array<i64: 1, 512>}, {pipeline_mode = #tpu.pipeline_mode<synchronous>, transform_indices = @transform_21, window_bounds = array<i64: 512, 256>}, {pipeline_mode = #tpu.pipeline_mode<synchronous>, transform_indices = @transform_22, window_bounds = array<i64: 1, 256>}, {pipeline_mode = #tpu.pipeline_mode<synchronous>, transform_indices = @transform_23, window_bounds = array<i64: 256, 256>}, {pipeline_mode = #tpu.pipeline_mode<synchronous>, transform_indices = @transform_24, window_bounds = array<i64: 1, 256>}, {pipeline_mode = #tpu.pipeline_mode<synchronous>, transform_indices = @transform_25, window_bounds = array<i64: 256, 256>}, {pipeline_mode = #tpu.pipeline_mode<synchronous>, transform_indices = @transform_26, window_bounds = array<i64: 256, 256>}, {pipeline_mode = #tpu.pipeline_mode<synchronous>, transform_indices = @transform_27, window_bounds = array<i64: 1, 256>}, {pipeline_mode = #tpu.pipeline_mode<synchronous>, transform_indices = @transform_28, window_bounds = array<i64: 256, 4>}, {pipeline_mode = #tpu.pipeline_mode<synchronous>, transform_indices = @transform_29, window_bounds = array<i64: 1, 4>}, {pipeline_mode = #tpu.pipeline_mode<synchronous>, transform_indices = @transform_30, window_bounds = array<i64: 256, 4>}, {pipeline_mode = #tpu.pipeline_mode<synchronous>, transform_indices = @transform_31, window_bounds = array<i64: 1, 4>}, {pipeline_mode = #tpu.pipeline_mode<synchronous>, transform_indices = @transform_32, window_bounds = array<i64: 1, 4>}]} {
    %c0_i32 = arith.constant 0 : i32
    %0 = arith.cmpi eq, %arg0, %c0_i32 : i32
    %1 = arith.extui %0 : i1 to i32
    %c0_i32_0 = arith.constant 0 : i32
    %2 = arith.cmpi ne, %1, %c0_i32_0 : i32
    scf.if %2 {
      %c0_25 = arith.constant 0 : index
      %c0_26 = arith.constant 0 : index
      %54 = vector.load %arg1[%c0_25, %c0_26] : memref<1x11xf32, #tpu.memory_space<vmem>>, vector<1x11xf32>
      %55 = arith.truncf %54 : vector<1x11xf32> to vector<1x11xbf16>
      %c0_27 = arith.constant 0 : index
      %c0_28 = arith.constant 0 : index
      %56 = vector.load %arg4[%c0_27, %c0_28] : memref<11x128xbf16, #tpu.memory_space<vmem>>, vector<11x128xbf16>
      %cst_29 = arith.constant dense<0.000000e+00> : vector<1x128xf32>
      %57 = tpu.matmul %55, %56, %cst_29 {dimension_numbers = #tpu.dot_dimension_numbers<[1], [0], [0], [1], [0, 0, 1, 1], [], []>} : vector<1x11xbf16>, vector<11x128xbf16>, vector<1x128xf32> -> vector<1x128xf32>
      %c0_30 = arith.constant 0 : index
      %c0_31 = arith.constant 0 : index
      %58 = vector.load %arg5[%c0_30, %c0_31] : memref<1x128xf32, #tpu.memory_space<vmem>>, vector<1x128xf32>
      %59 = arith.addf %57, %58 : vector<1x128xf32>
      %cst_32 = arith.constant 0.000000e+00 : f32
      %60 = vector.broadcast %cst_32 : f32 to vector<1x128xf32>
      %61 = arith.maximumf %59, %60 : vector<1x128xf32>
      %62 = arith.truncf %61 : vector<1x128xf32> to vector<1x128xbf16>
      %c0_33 = arith.constant 0 : index
      %c0_34 = arith.constant 0 : index
      %63 = vector.load %arg6[%c0_33, %c0_34] : memref<128x256xbf16, #tpu.memory_space<vmem>>, vector<128x256xbf16>
      %cst_35 = arith.constant dense<0.000000e+00> : vector<1x256xf32>
      %64 = tpu.matmul %62, %63, %cst_35 {dimension_numbers = #tpu.dot_dimension_numbers<[1], [0], [0], [1], [0, 0, 1, 1], [], []>} : vector<1x128xbf16>, vector<128x256xbf16>, vector<1x256xf32> -> vector<1x256xf32>
      %c0_36 = arith.constant 0 : index
      %c0_37 = arith.constant 0 : index
      %65 = vector.load %arg7[%c0_36, %c0_37] : memref<1x256xf32, #tpu.memory_space<vmem>>, vector<1x256xf32>
      %66 = arith.addf %64, %65 : vector<1x256xf32>
      %cst_38 = arith.constant 0.000000e+00 : f32
      %67 = vector.broadcast %cst_38 : f32 to vector<1x256xf32>
      %68 = arith.maximumf %66, %67 : vector<1x256xf32>
      %69 = arith.truncf %68 : vector<1x256xf32> to vector<1x256xbf16>
      %c0_39 = arith.constant 0 : index
      %c0_40 = arith.constant 0 : index
      %70 = vector.load %arg8[%c0_39, %c0_40] : memref<256x256xbf16, #tpu.memory_space<vmem>>, vector<256x256xbf16>
      %cst_41 = arith.constant dense<0.000000e+00> : vector<1x256xf32>
      %71 = tpu.matmul %69, %70, %cst_41 {dimension_numbers = #tpu.dot_dimension_numbers<[1], [0], [0], [1], [0, 0, 1, 1], [], []>} : vector<1x256xbf16>, vector<256x256xbf16>, vector<1x256xf32> -> vector<1x256xf32>
      %c0_42 = arith.constant 0 : index
      %c0_43 = arith.constant 0 : index
      %72 = vector.load %arg9[%c0_42, %c0_43] : memref<1x256xf32, #tpu.memory_space<vmem>>, vector<1x256xf32>
      %73 = arith.addf %71, %72 : vector<1x256xf32>
      %cst_44 = arith.constant 0.000000e+00 : f32
      %74 = vector.broadcast %cst_44 : f32 to vector<1x256xf32>
      %75 = arith.maximumf %73, %74 : vector<1x256xf32>
      %c0_45 = arith.constant 0 : index
      %c0_46 = arith.constant 0 : index
      %76 = vector.load %arg34[%c0_45, %c0_46] : memref<1x256xf32, #tpu.memory_space<vmem>>, vector<1x256xf32>
      tpu.vector_store %arg34[%c0_45, %c0_46], %75 {strides = array<i32>} : memref<1x256xf32, #tpu.memory_space<vmem>>, vector<1x256xf32>,
      %c0_47 = arith.constant 0 : index
      %c0_48 = arith.constant 0 : index
      %77 = vector.load %arg2[%c0_47, %c0_48] : memref<16x5xf32, #tpu.memory_space<vmem>>, vector<16x5xf32>
      %78 = arith.truncf %77 : vector<16x5xf32> to vector<16x5xbf16>
      %c0_49 = arith.constant 0 : index
      %c0_50 = arith.constant 0 : index
      %79 = vector.load %arg10[%c0_49, %c0_50] : memref<5x64xbf16, #tpu.memory_space<vmem>>, vector<5x64xbf16>
      %cst_51 = arith.constant dense<0.000000e+00> : vector<16x64xf32>
      %80 = tpu.matmul %78, %79, %cst_51 {dimension_numbers = #tpu.dot_dimension_numbers<[1], [0], [0], [1], [0, 0, 1, 1], [], []>} : vector<16x5xbf16>, vector<5x64xbf16>, vector<16x64xf32> -> vector<16x64xf32>
      %c0_52 = arith.constant 0 : index
      %c0_53 = arith.constant 0 : index
      %81 = vector.load %arg11[%c0_52, %c0_53] : memref<1x64xf32, #tpu.memory_space<vmem>>, vector<1x64xf32>
      %82 = vector.broadcast %81 : vector<1x64xf32> to vector<16x64xf32>
      %83 = arith.addf %80, %82 : vector<16x64xf32>
      %cst_54 = arith.constant 0.000000e+00 : f32
      %84 = vector.broadcast %cst_54 : f32 to vector<16x64xf32>
      %85 = arith.maximumf %83, %84 : vector<16x64xf32>
      %c0_55 = arith.constant 0 : index
      %c0_56 = arith.constant 0 : index
      %86 = vector.load %arg35[%c0_55, %c0_56] : memref<16x64xf32, #tpu.memory_space<vmem>>, vector<16x64xf32>
      tpu.vector_store %arg35[%c0_55, %c0_56], %85 {strides = array<i32>} : memref<16x64xf32, #tpu.memory_space<vmem>>, vector<16x64xf32>,
      %87 = arith.truncf %85 : vector<16x64xf32> to vector<16x64xbf16>
      %c0_57 = arith.constant 0 : index
      %c0_58 = arith.constant 0 : index
      %88 = vector.load %arg12[%c0_57, %c0_58] : memref<64x64xbf16, #tpu.memory_space<vmem>>, vector<64x64xbf16>
      %cst_59 = arith.constant dense<0.000000e+00> : vector<16x64xf32>
      %89 = tpu.matmul %87, %88, %cst_59 {dimension_numbers = #tpu.dot_dimension_numbers<[1], [0], [0], [1], [0, 0, 1, 1], [], []>} : vector<16x64xbf16>, vector<64x64xbf16>, vector<16x64xf32> -> vector<16x64xf32>
      %c0_60 = arith.constant 0 : index
      %c0_61 = arith.constant 0 : index
      %90 = vector.load %arg13[%c0_60, %c0_61] : memref<1x64xf32, #tpu.memory_space<vmem>>, vector<1x64xf32>
      %91 = vector.broadcast %90 : vector<1x64xf32> to vector<16x64xf32>
      %92 = arith.addf %89, %91 : vector<16x64xf32>
      %cst_62 = arith.constant 0.000000e+00 : f32
      %93 = vector.broadcast %cst_62 : f32 to vector<16x64xf32>
      %94 = arith.maximumf %92, %93 : vector<16x64xf32>
      %95 = arith.truncf %94 : vector<16x64xf32> to vector<16x64xbf16>
      %c0_63 = arith.constant 0 : index
      %c0_64 = arith.constant 0 : index
      %96 = vector.load %arg14[%c0_63, %c0_64] : memref<64x256xbf16, #tpu.memory_space<vmem>>, vector<64x256xbf16>
      %cst_65 = arith.constant dense<0.000000e+00> : vector<16x256xf32>
      %97 = tpu.matmul %95, %96, %cst_65 {dimension_numbers = #tpu.dot_dimension_numbers<[1], [0], [0], [1], [0, 0, 1, 1], [], []>} : vector<16x64xbf16>, vector<64x256xbf16>, vector<16x256xf32> -> vector<16x256xf32>
      %c0_66 = arith.constant 0 : index
      %c0_67 = arith.constant 0 : index
      %98 = vector.load %arg15[%c0_66, %c0_67] : memref<1x256xf32, #tpu.memory_space<vmem>>, vector<1x256xf32>
      %99 = vector.broadcast %98 : vector<1x256xf32> to vector<16x256xf32>
      %100 = arith.addf %97, %99 : vector<16x256xf32>
      %cst_68 = arith.constant 0.000000e+00 : f32
      %101 = vector.broadcast %cst_68 : f32 to vector<16x256xf32>
      %102 = arith.maximumf %100, %101 : vector<16x256xf32>
      %cst_69 = arith.constant dense<0xFF800000> : vector<256xf32>
      %103 = vector.multi_reduction <maximumf>, %102, %cst_69 [0] : vector<16x256xf32> to vector<256xf32>
      %104 = vector.shape_cast %103 : vector<256xf32> to vector<1x256xf32>
      %c0_70 = arith.constant 0 : index
      %c0_71 = arith.constant 0 : index
      %105 = vector.load %arg36[%c0_70, %c0_71] : memref<1x256xf32, #tpu.memory_space<vmem>>, vector<1x256xf32>
      tpu.vector_store %arg36[%c0_70, %c0_71], %104 {strides = array<i32>} : memref<1x256xf32, #tpu.memory_space<vmem>>, vector<1x256xf32>,
    } else {
    }
    %c0 = arith.constant 0 : index
    %c0_1 = arith.constant 0 : index
    %3 = vector.load %arg36[%c0, %c0_1] : memref<1x256xf32, #tpu.memory_space<vmem>>, vector<1x256xf32>
    %4 = arith.truncf %3 : vector<1x256xf32> to vector<1x256xbf16>
    %c0_2 = arith.constant 0 : index
    %c0_3 = arith.constant 0 : index
    %5 = vector.load %arg16[%c0_2, %c0_3] : memref<256x512xbf16, #tpu.memory_space<vmem>>, vector<256x512xbf16>
    %cst = arith.constant dense<0.000000e+00> : vector<1x512xf32>
    %6 = tpu.matmul %4, %5, %cst {dimension_numbers = #tpu.dot_dimension_numbers<[1], [0], [0], [1], [0, 0, 1, 1], [], []>} : vector<1x256xbf16>, vector<256x512xbf16>, vector<1x512xf32> -> vector<1x512xf32>
    %c0_4 = arith.constant 0 : index
    %c0_5 = arith.constant 0 : index
    %7 = vector.load %arg17[%c0_4, %c0_5] : memref<1x512xf32, #tpu.memory_space<vmem>>, vector<1x512xf32>
    %8 = arith.addf %6, %7 : vector<1x512xf32>
    %cst_6 = arith.constant 0.000000e+00 : f32
    %9 = vector.broadcast %cst_6 : f32 to vector<1x512xf32>
    %10 = arith.maximumf %8, %9 : vector<1x512xf32>
    %11 = vector.extract_strided_slice %10 {offsets = [0, 0], sizes = [1, 64], strides = [1, 1]} : vector<1x512xf32> to vector<1x64xf32>
    %c8_i32 = arith.constant 8 : i32
    %12 = arith.muli %arg0, %c8_i32 : i32
    %c0_i32_7 = arith.constant 0 : i32
    %13 = arith.addi %12, %c0_i32_7 : i32
    %14 = arith.index_cast %13 : i32 to index
    %c0_8 = arith.constant 0 : index
    %15 = vector.load %arg37[%14, %c0_8] : memref<64x64xf32, #tpu.memory_space<vmem>>, vector<1x64xf32>
    tpu.vector_store %arg37[%14, %c0_8], %11 {strides = array<i32>} : memref<64x64xf32, #tpu.memory_space<vmem>>, vector<1x64xf32>,
    %16 = vector.extract_strided_slice %10 {offsets = [0, 64], sizes = [1, 64], strides = [1, 1]} : vector<1x512xf32> to vector<1x64xf32>
    %c8_i32_9 = arith.constant 8 : i32
    %17 = arith.muli %arg0, %c8_i32_9 : i32
    %c1_i32 = arith.constant 1 : i32
    %18 = arith.addi %17, %c1_i32 : i32
    %19 = arith.index_cast %18 : i32 to index
    %c0_10 = arith.constant 0 : index
    %20 = vector.load %arg37[%19, %c0_10] : memref<64x64xf32, #tpu.memory_space<vmem>>, vector<1x64xf32>
    tpu.vector_store %arg37[%19, %c0_10], %16 {strides = array<i32>} : memref<64x64xf32, #tpu.memory_space<vmem>>, vector<1x64xf32>,
    %21 = vector.extract_strided_slice %10 {offsets = [0, 128], sizes = [1, 64], strides = [1, 1]} : vector<1x512xf32> to vector<1x64xf32>
    %c8_i32_11 = arith.constant 8 : i32
    %22 = arith.muli %arg0, %c8_i32_11 : i32
    %c2_i32 = arith.constant 2 : i32
    %23 = arith.addi %22, %c2_i32 : i32
    %24 = arith.index_cast %23 : i32 to index
    %c0_12 = arith.constant 0 : index
    %25 = vector.load %arg37[%24, %c0_12] : memref<64x64xf32, #tpu.memory_space<vmem>>, vector<1x64xf32>
    tpu.vector_store %arg37[%24, %c0_12], %21 {strides = array<i32>} : memref<64x64xf32, #tpu.memory_space<vmem>>, vector<1x64xf32>,
    %26 = vector.extract_strided_slice %10 {offsets = [0, 192], sizes = [1, 64], strides = [1, 1]} : vector<1x512xf32> to vector<1x64xf32>
    %c8_i32_13 = arith.constant 8 : i32
    %27 = arith.muli %arg0, %c8_i32_13 : i32
    %c3_i32 = arith.constant 3 : i32
    %28 = arith.addi %27, %c3_i32 : i32
    %29 = arith.index_cast %28 : i32 to index
    %c0_14 = arith.constant 0 : index
    %30 = vector.load %arg37[%29, %c0_14] : memref<64x64xf32, #tpu.memory_space<vmem>>, vector<1x64xf32>
    tpu.vector_store %arg37[%29, %c0_14], %26 {strides = array<i32>} : memref<64x64xf32, #tpu.memory_space<vmem>>, vector<1x64xf32>,
    %31 = vector.extract_strided_slice %10 {offsets = [0, 256], sizes = [1, 64], strides = [1, 1]} : vector<1x512xf32> to vector<1x64xf32>
    %c8_i32_15 = arith.constant 8 : i32
    %32 = arith.muli %arg0, %c8_i32_15 : i32
    %c4_i32 = arith.constant 4 : i32
    %33 = arith.addi %32, %c4_i32 : i32
    %34 = arith.index_cast %33 : i32 to index
    %c0_16 = arith.constant 0 : index
    %35 = vector.load %arg37[%34, %c0_16] : memref<64x64xf32, #tpu.memory_space<vmem>>, vector<1x64xf32>
    tpu.vector_store %arg37[%34, %c0_16], %31 {strides = array<i32>} : memref<64x64xf32, #tpu.memory_space<vmem>>, vector<1x64xf32>,
    %36 = vector.extract_strided_slice %10 {offsets = [0, 320], sizes = [1, 64], strides = [1, 1]} : vector<1x512xf32> to vector<1x64xf32>
    %c8_i32_17 = arith.constant 8 : i32
    %37 = arith.muli %arg0, %c8_i32_17 : i32
    %c5_i32 = arith.constant 5 : i32
    %38 = arith.addi %37, %c5_i32 : i32
    %39 = arith.index_cast %38 : i32 to index
    %c0_18 = arith.constant 0 : index
    %40 = vector.load %arg37[%39, %c0_18] : memref<64x64xf32, #tpu.memory_space<vmem>>, vector<1x64xf32>
    tpu.vector_store %arg37[%39, %c0_18], %36 {strides = array<i32>} : memref<64x64xf32, #tpu.memory_space<vmem>>, vector<1x64xf32>,
    %41 = vector.extract_strided_slice %10 {offsets = [0, 384], sizes = [1, 64], strides = [1, 1]} : vector<1x512xf32> to vector<1x64xf32>
    %c8_i32_19 = arith.constant 8 : i32
    %42 = arith.muli %arg0, %c8_i32_19 : i32
    %c6_i32 = arith.constant 6 : i32
    %43 = arith.addi %42, %c6_i32 : i32
    %44 = arith.index_cast %43 : i32 to index
    %c0_20 = arith.constant 0 : index
    %45 = vector.load %arg37[%44, %c0_20] : memref<64x64xf32, #tpu.memory_space<vmem>>, vector<1x64xf32>
    tpu.vector_store %arg37[%44, %c0_20], %41 {strides = array<i32>} : memref<64x64xf32, #tpu.memory_space<vmem>>, vector<1x64xf32>,
    %46 = vector.extract_strided_slice %10 {offsets = [0, 448], sizes = [1, 64], strides = [1, 1]} : vector<1x512xf32> to vector<1x64xf32>
    %c8_i32_21 = arith.constant 8 : i32
    %47 = arith.muli %arg0, %c8_i32_21 : i32
    %c7_i32 = arith.constant 7 : i32
    %48 = arith.addi %47, %c7_i32 : i32
    %49 = arith.index_cast %48 : i32 to index
    %c0_22 = arith.constant 0 : index
    %50 = vector.load %arg37[%49, %c0_22] : memref<64x64xf32, #tpu.memory_space<vmem>>, vector<1x64xf32>
    tpu.vector_store %arg37[%49, %c0_22], %46 {strides = array<i32>} : memref<64x64xf32, #tpu.memory_space<vmem>>, vector<1x64xf32>,
    %c7_i32_23 = arith.constant 7 : i32
    %51 = arith.cmpi eq, %arg0, %c7_i32_23 : i32
    %52 = arith.extui %51 : i1 to i32
    %c0_i32_24 = arith.constant 0 : i32
    %53 = arith.cmpi ne, %52, %c0_i32_24 : i32
    scf.if %53 {
      %c0_25 = arith.constant 0 : index
      %c0_26 = arith.constant 0 : index
      %54 = vector.load %arg35[%c0_25, %c0_26] : memref<16x64xf32, #tpu.memory_space<vmem>>, vector<16x64xf32>
      %55 = arith.truncf %54 : vector<16x64xf32> to vector<16x64xbf16>
      %c0_27 = arith.constant 0 : index
      %c0_28 = arith.constant 0 : index
      %56 = vector.load %arg37[%c0_27, %c0_28] : memref<64x64xf32, #tpu.memory_space<vmem>>, vector<64x64xf32>
      %57 = arith.truncf %56 : vector<64x64xf32> to vector<64x64xbf16>
      %cst_29 = arith.constant dense<0.000000e+00> : vector<16x64xf32>
      %58 = tpu.matmul %55, %57, %cst_29 {dimension_numbers = #tpu.dot_dimension_numbers<[1], [0], [0], [1], [0, 0, 1, 1], [], []>} : vector<16x64xbf16>, vector<64x64xbf16>, vector<16x64xf32> -> vector<16x64xf32>
      %59 = arith.truncf %58 : vector<16x64xf32> to vector<16x64xbf16>
      %c0_30 = arith.constant 0 : index
      %c0_31 = arith.constant 0 : index
      %60 = vector.load %arg18[%c0_30, %c0_31] : memref<64x128xbf16, #tpu.memory_space<vmem>>, vector<64x128xbf16>
      %cst_32 = arith.constant dense<0.000000e+00> : vector<16x128xf32>
      %61 = tpu.matmul %59, %60, %cst_32 {dimension_numbers = #tpu.dot_dimension_numbers<[1], [0], [0], [1], [0, 0, 1, 1], [], []>} : vector<16x64xbf16>, vector<64x128xbf16>, vector<16x128xf32> -> vector<16x128xf32>
      %c0_33 = arith.constant 0 : index
      %c0_34 = arith.constant 0 : index
      %62 = vector.load %arg19[%c0_33, %c0_34] : memref<1x128xf32, #tpu.memory_space<vmem>>, vector<1x128xf32>
      %63 = vector.broadcast %62 : vector<1x128xf32> to vector<16x128xf32>
      %64 = arith.addf %61, %63 : vector<16x128xf32>
      %cst_35 = arith.constant 0.000000e+00 : f32
      %65 = vector.broadcast %cst_35 : f32 to vector<16x128xf32>
      %66 = arith.maximumf %64, %65 : vector<16x128xf32>
      %67 = arith.truncf %66 : vector<16x128xf32> to vector<16x128xbf16>
      %c0_36 = arith.constant 0 : index
      %c0_37 = arith.constant 0 : index
      %68 = vector.load %arg20[%c0_36, %c0_37] : memref<128x512xbf16, #tpu.memory_space<vmem>>, vector<128x512xbf16>
      %cst_38 = arith.constant dense<0.000000e+00> : vector<16x512xf32>
      %69 = tpu.matmul %67, %68, %cst_38 {dimension_numbers = #tpu.dot_dimension_numbers<[1], [0], [0], [1], [0, 0, 1, 1], [], []>} : vector<16x128xbf16>, vector<128x512xbf16>, vector<16x512xf32> -> vector<16x512xf32>
      %c0_39 = arith.constant 0 : index
      %c0_40 = arith.constant 0 : index
      %70 = vector.load %arg21[%c0_39, %c0_40] : memref<1x512xf32, #tpu.memory_space<vmem>>, vector<1x512xf32>
      %71 = vector.broadcast %70 : vector<1x512xf32> to vector<16x512xf32>
      %72 = arith.addf %69, %71 : vector<16x512xf32>
      %cst_41 = arith.constant 0.000000e+00 : f32
      %73 = vector.broadcast %cst_41 : f32 to vector<16x512xf32>
      %74 = arith.maximumf %72, %73 : vector<16x512xf32>
      %cst_42 = arith.constant dense<0xFF800000> : vector<512xf32>
      %75 = vector.multi_reduction <maximumf>, %74, %cst_42 [0] : vector<16x512xf32> to vector<512xf32>
      %76 = vector.shape_cast %75 : vector<512xf32> to vector<1x512xf32>
      %77 = arith.truncf %76 : vector<1x512xf32> to vector<1x512xbf16>
      %c0_43 = arith.constant 0 : index
      %c0_44 = arith.constant 0 : index
      %78 = vector.load %arg22[%c0_43, %c0_44] : memref<512x256xbf16, #tpu.memory_space<vmem>>, vector<512x256xbf16>
      %cst_45 = arith.constant dense<0.000000e+00> : vector<1x256xf32>
      %79 = tpu.matmul %77, %78, %cst_45 {dimension_numbers = #tpu.dot_dimension_numbers<[1], [0], [0], [1], [0, 0, 1, 1], [], []>} : vector<1x512xbf16>, vector<512x256xbf16>, vector<1x256xf32> -> vector<1x256xf32>
      %c0_46 = arith.constant 0 : index
      %c0_47 = arith.constant 0 : index
      %80 = vector.load %arg23[%c0_46, %c0_47] : memref<1x256xf32, #tpu.memory_space<vmem>>, vector<1x256xf32>
      %81 = arith.addf %79, %80 : vector<1x256xf32>
      %cst_48 = arith.constant 0.000000e+00 : f32
      %82 = vector.broadcast %cst_48 : f32 to vector<1x256xf32>
      %83 = arith.maximumf %81, %82 : vector<1x256xf32>
      %84 = arith.truncf %83 : vector<1x256xf32> to vector<1x256xbf16>
      %c0_49 = arith.constant 0 : index
      %c0_50 = arith.constant 0 : index
      %85 = vector.load %arg24[%c0_49, %c0_50] : memref<256x256xbf16, #tpu.memory_space<vmem>>, vector<256x256xbf16>
      %cst_51 = arith.constant dense<0.000000e+00> : vector<1x256xf32>
      %86 = tpu.matmul %84, %85, %cst_51 {dimension_numbers = #tpu.dot_dimension_numbers<[1], [0], [0], [1], [0, 0, 1, 1], [], []>} : vector<1x256xbf16>, vector<256x256xbf16>, vector<1x256xf32> -> vector<1x256xf32>
      %c0_52 = arith.constant 0 : index
      %c0_53 = arith.constant 0 : index
      %87 = vector.load %arg25[%c0_52, %c0_53] : memref<1x256xf32, #tpu.memory_space<vmem>>, vector<1x256xf32>
      %88 = arith.addf %86, %87 : vector<1x256xf32>
      %cst_54 = arith.constant 0.000000e+00 : f32
      %89 = vector.broadcast %cst_54 : f32 to vector<1x256xf32>
      %90 = arith.maximumf %88, %89 : vector<1x256xf32>
      %c0_55 = arith.constant 0 : index
      %c0_56 = arith.constant 0 : index
      %91 = vector.load %arg34[%c0_55, %c0_56] : memref<1x256xf32, #tpu.memory_space<vmem>>, vector<1x256xf32>
      %92 = arith.truncf %91 : vector<1x256xf32> to vector<1x256xbf16>
      %c0_57 = arith.constant 0 : index
      %c0_58 = arith.constant 0 : index
      %93 = vector.load %arg26[%c0_57, %c0_58] : memref<256x256xbf16, #tpu.memory_space<vmem>>, vector<256x256xbf16>
      %cst_59 = arith.constant dense<0.000000e+00> : vector<1x256xf32>
      %94 = tpu.matmul %92, %93, %cst_59 {dimension_numbers = #tpu.dot_dimension_numbers<[1], [0], [0], [1], [0, 0, 1, 1], [], []>} : vector<1x256xbf16>, vector<256x256xbf16>, vector<1x256xf32> -> vector<1x256xf32>
      %95 = arith.truncf %90 : vector<1x256xf32> to vector<1x256xbf16>
      %c0_60 = arith.constant 0 : index
      %c0_61 = arith.constant 0 : index
      %96 = vector.load %arg27[%c0_60, %c0_61] : memref<256x256xbf16, #tpu.memory_space<vmem>>, vector<256x256xbf16>
      %cst_62 = arith.constant dense<0.000000e+00> : vector<1x256xf32>
      %97 = tpu.matmul %95, %96, %cst_62 {dimension_numbers = #tpu.dot_dimension_numbers<[1], [0], [0], [1], [0, 0, 1, 1], [], []>} : vector<1x256xbf16>, vector<256x256xbf16>, vector<1x256xf32> -> vector<1x256xf32>
      %98 = arith.addf %94, %97 : vector<1x256xf32>
      %c0_63 = arith.constant 0 : index
      %c0_64 = arith.constant 0 : index
      %99 = vector.load %arg28[%c0_63, %c0_64] : memref<1x256xf32, #tpu.memory_space<vmem>>, vector<1x256xf32>
      %100 = arith.addf %98, %99 : vector<1x256xf32>
      %cst_65 = arith.constant 0.000000e+00 : f32
      %101 = vector.broadcast %cst_65 : f32 to vector<1x256xf32>
      %102 = arith.maximumf %100, %101 : vector<1x256xf32>
      %103 = arith.truncf %102 : vector<1x256xf32> to vector<1x256xbf16>
      %c0_66 = arith.constant 0 : index
      %c0_67 = arith.constant 0 : index
      %104 = vector.load %arg29[%c0_66, %c0_67] : memref<256x4xbf16, #tpu.memory_space<vmem>>, vector<256x4xbf16>
      %cst_68 = arith.constant dense<0.000000e+00> : vector<1x4xf32>
      %105 = tpu.matmul %103, %104, %cst_68 {dimension_numbers = #tpu.dot_dimension_numbers<[1], [0], [0], [1], [0, 0, 1, 1], [], []>} : vector<1x256xbf16>, vector<256x4xbf16>, vector<1x4xf32> -> vector<1x4xf32>
      %c0_69 = arith.constant 0 : index
      %c0_70 = arith.constant 0 : index
      %106 = vector.load %arg30[%c0_69, %c0_70] : memref<1x4xf32, #tpu.memory_space<vmem>>, vector<1x4xf32>
      %107 = arith.addf %105, %106 : vector<1x4xf32>
      %c0_71 = arith.constant 0 : index
      %c0_72 = arith.constant 0 : index
      %108 = vector.load %arg31[%c0_71, %c0_72] : memref<256x4xbf16, #tpu.memory_space<vmem>>, vector<256x4xbf16>
      %cst_73 = arith.constant dense<0.000000e+00> : vector<1x4xf32>
      %109 = tpu.matmul %103, %108, %cst_73 {dimension_numbers = #tpu.dot_dimension_numbers<[1], [0], [0], [1], [0, 0, 1, 1], [], []>} : vector<1x256xbf16>, vector<256x4xbf16>, vector<1x4xf32> -> vector<1x4xf32>
      %c0_74 = arith.constant 0 : index
      %c0_75 = arith.constant 0 : index
      %110 = vector.load %arg32[%c0_74, %c0_75] : memref<1x4xf32, #tpu.memory_space<vmem>>, vector<1x4xf32>
      %111 = arith.addf %109, %110 : vector<1x4xf32>
      %cst_76 = arith.constant 0.000000e+00 : f32
      %112 = vector.broadcast %cst_76 : f32 to vector<1x4xf32>
      %113 = arith.maximumf %111, %112 : vector<1x4xf32>
      %114 = math.absf %111 : vector<1x4xf32>
      %cst_77 = arith.constant 0.000000e+00 : f32
      %115 = vector.broadcast %cst_77 : f32 to vector<1x4xf32>
      %116 = arith.subf %115, %114 : vector<1x4xf32>
      %117 = math.exp %116 : vector<1x4xf32>
      %118 = math.log1p %117 : vector<1x4xf32>
      %119 = arith.addf %113, %118 : vector<1x4xf32>
      %c0_78 = arith.constant 0 : index
      %c0_79 = arith.constant 0 : index
      %120 = vector.load %arg3[%c0_78, %c0_79] : memref<1x4xf32, #tpu.memory_space<vmem>>, vector<1x4xf32>
      %121 = arith.mulf %119, %120 : vector<1x4xf32>
      %122 = arith.addf %107, %121 : vector<1x4xf32>
      %123 = math.tanh %122 : vector<1x4xf32>
      %c0_80 = arith.constant 0 : index
      %c0_81 = arith.constant 0 : index
      %124 = vector.load %arg33[%c0_80, %c0_81] : memref<1x4xf32, #tpu.memory_space<vmem>>, vector<1x4xf32>
      tpu.vector_store %arg33[%c0_80, %c0_81], %123 {strides = array<i32>} : memref<1x4xf32, #tpu.memory_space<vmem>>, vector<1x4xf32>,
    } else {
    }
    return
  }
  func.func @transform_0(%arg0: i32) -> (i32, i32) {
    %c0_i32 = arith.constant 0 : i32
    %c0_i32_0 = arith.constant 0 : i32
    %c0_i32_1 = arith.constant 0 : i32
    return %c0_i32, %c0_i32_0 : i32, i32
  }
  func.func @transform_1(%arg0: i32) -> (i32, i32) {
    %c0_i32 = arith.constant 0 : i32
    %c0_i32_0 = arith.constant 0 : i32
    %c0_i32_1 = arith.constant 0 : i32
    return %c0_i32, %c0_i32_0 : i32, i32
  }
  func.func @transform_2(%arg0: i32) -> (i32, i32) {
    %c0_i32 = arith.constant 0 : i32
    %c0_i32_0 = arith.constant 0 : i32
    %c0_i32_1 = arith.constant 0 : i32
    return %c0_i32, %c0_i32_0 : i32, i32
  }
  func.func @transform_3(%arg0: i32) -> (i32, i32) {
    %c0_i32 = arith.constant 0 : i32
    %c0_i32_0 = arith.constant 0 : i32
    %c0_i32_1 = arith.constant 0 : i32
    return %c0_i32, %c0_i32_0 : i32, i32
  }
  func.func @transform_4(%arg0: i32) -> (i32, i32) {
    %c0_i32 = arith.constant 0 : i32
    %c0_i32_0 = arith.constant 0 : i32
    %c0_i32_1 = arith.constant 0 : i32
    return %c0_i32, %c0_i32_0 : i32, i32
  }
  func.func @transform_5(%arg0: i32) -> (i32, i32) {
    %c0_i32 = arith.constant 0 : i32
    %c0_i32_0 = arith.constant 0 : i32
    %c0_i32_1 = arith.constant 0 : i32
    return %c0_i32, %c0_i32_0 : i32, i32
  }
  func.func @transform_6(%arg0: i32) -> (i32, i32) {
    %c0_i32 = arith.constant 0 : i32
    %c0_i32_0 = arith.constant 0 : i32
    %c0_i32_1 = arith.constant 0 : i32
    return %c0_i32, %c0_i32_0 : i32, i32
  }
  func.func @transform_7(%arg0: i32) -> (i32, i32) {
    %c0_i32 = arith.constant 0 : i32
    %c0_i32_0 = arith.constant 0 : i32
    %c0_i32_1 = arith.constant 0 : i32
    return %c0_i32, %c0_i32_0 : i32, i32
  }
  func.func @transform_8(%arg0: i32) -> (i32, i32) {
    %c0_i32 = arith.constant 0 : i32
    %c0_i32_0 = arith.constant 0 : i32
    %c0_i32_1 = arith.constant 0 : i32
    return %c0_i32, %c0_i32_0 : i32, i32
  }
  func.func @transform_9(%arg0: i32) -> (i32, i32) {
    %c0_i32 = arith.constant 0 : i32
    %c0_i32_0 = arith.constant 0 : i32
    %c0_i32_1 = arith.constant 0 : i32
    return %c0_i32, %c0_i32_0 : i32, i32
  }
  func.func @transform_10(%arg0: i32) -> (i32, i32) {
    %c0_i32 = arith.constant 0 : i32
    %c0_i32_0 = arith.constant 0 : i32
    %c0_i32_1 = arith.constant 0 : i32
    return %c0_i32, %c0_i32_0 : i32, i32
  }
  func.func @transform_11(%arg0: i32) -> (i32, i32) {
    %c0_i32 = arith.constant 0 : i32
    %c0_i32_0 = arith.constant 0 : i32
    %c0_i32_1 = arith.constant 0 : i32
    return %c0_i32, %c0_i32_0 : i32, i32
  }
  func.func @transform_12(%arg0: i32) -> (i32, i32) {
    %c0_i32 = arith.constant 0 : i32
    %c0_i32_0 = arith.constant 0 : i32
    %c0_i32_1 = arith.constant 0 : i32
    return %c0_i32, %c0_i32_0 : i32, i32
  }
  func.func @transform_13(%arg0: i32) -> (i32, i32) {
    %c0_i32 = arith.constant 0 : i32
    %c0_i32_0 = arith.constant 0 : i32
    %c0_i32_1 = arith.constant 0 : i32
    return %c0_i32, %c0_i32_0 : i32, i32
  }
  func.func @transform_14(%arg0: i32) -> (i32, i32) {
    %c0_i32 = arith.constant 0 : i32
    %c0_i32_0 = arith.constant 0 : i32
    %c0_i32_1 = arith.constant 0 : i32
    return %c0_i32, %c0_i32_0 : i32, i32
  }
  func.func @transform_15(%arg0: i32) -> (i32, i32) {
    %c0_i32 = arith.constant 0 : i32
    %c0_i32_0 = arith.constant 0 : i32
    return %c0_i32, %arg0 : i32, i32
  }
  func.func @transform_16(%arg0: i32) -> (i32, i32) {
    %c0_i32 = arith.constant 0 : i32
    %c0_i32_0 = arith.constant 0 : i32
    return %c0_i32, %arg0 : i32, i32
  }
  func.func @transform_17(%arg0: i32) -> (i32, i32) {
    %c0_i32 = arith.constant 0 : i32
    %c0_i32_0 = arith.constant 0 : i32
    %c0_i32_1 = arith.constant 0 : i32
    return %c0_i32, %c0_i32_0 : i32, i32
  }
  func.func @transform_18(%arg0: i32) -> (i32, i32) {
    %c0_i32 = arith.constant 0 : i32
    %c0_i32_0 = arith.constant 0 : i32
    %c0_i32_1 = arith.constant 0 : i32
    return %c0_i32, %c0_i32_0 : i32, i32
  }
  func.func @transform_19(%arg0: i32) -> (i32, i32) {
    %c0_i32 = arith.constant 0 : i32
    %c0_i32_0 = arith.constant 0 : i32
    %c0_i32_1 = arith.constant 0 : i32
    return %c0_i32, %c0_i32_0 : i32, i32
  }
  func.func @transform_20(%arg0: i32) -> (i32, i32) {
    %c0_i32 = arith.constant 0 : i32
    %c0_i32_0 = arith.constant 0 : i32
    %c0_i32_1 = arith.constant 0 : i32
    return %c0_i32, %c0_i32_0 : i32, i32
  }
  func.func @transform_21(%arg0: i32) -> (i32, i32) {
    %c0_i32 = arith.constant 0 : i32
    %c0_i32_0 = arith.constant 0 : i32
    %c0_i32_1 = arith.constant 0 : i32
    return %c0_i32, %c0_i32_0 : i32, i32
  }
  func.func @transform_22(%arg0: i32) -> (i32, i32) {
    %c0_i32 = arith.constant 0 : i32
    %c0_i32_0 = arith.constant 0 : i32
    %c0_i32_1 = arith.constant 0 : i32
    return %c0_i32, %c0_i32_0 : i32, i32
  }
  func.func @transform_23(%arg0: i32) -> (i32, i32) {
    %c0_i32 = arith.constant 0 : i32
    %c0_i32_0 = arith.constant 0 : i32
    %c0_i32_1 = arith.constant 0 : i32
    return %c0_i32, %c0_i32_0 : i32, i32
  }
  func.func @transform_24(%arg0: i32) -> (i32, i32) {
    %c0_i32 = arith.constant 0 : i32
    %c0_i32_0 = arith.constant 0 : i32
    %c0_i32_1 = arith.constant 0 : i32
    return %c0_i32, %c0_i32_0 : i32, i32
  }
  func.func @transform_25(%arg0: i32) -> (i32, i32) {
    %c0_i32 = arith.constant 0 : i32
    %c0_i32_0 = arith.constant 0 : i32
    %c0_i32_1 = arith.constant 0 : i32
    return %c0_i32, %c0_i32_0 : i32, i32
  }
  func.func @transform_26(%arg0: i32) -> (i32, i32) {
    %c0_i32 = arith.constant 0 : i32
    %c0_i32_0 = arith.constant 0 : i32
    %c0_i32_1 = arith.constant 0 : i32
    return %c0_i32, %c0_i32_0 : i32, i32
  }
  func.func @transform_27(%arg0: i32) -> (i32, i32) {
    %c0_i32 = arith.constant 0 : i32
    %c0_i32_0 = arith.constant 0 : i32
    %c0_i32_1 = arith.constant 0 : i32
    return %c0_i32, %c0_i32_0 : i32, i32
  }
  func.func @transform_28(%arg0: i32) -> (i32, i32) {
    %c0_i32 = arith.constant 0 : i32
    %c0_i32_0 = arith.constant 0 : i32
    %c0_i32_1 = arith.constant 0 : i32
    return %c0_i32, %c0_i32_0 : i32, i32
  }
  func.func @transform_29(%arg0: i32) -> (i32, i32) {
    %c0_i32 = arith.constant 0 : i32
    %c0_i32_0 = arith.constant 0 : i32
    %c0_i32_1 = arith.constant 0 : i32
    return %c0_i32, %c0_i32_0 : i32, i32
  }
  func.func @transform_30(%arg0: i32) -> (i32, i32) {
    %c0_i32 = arith.constant 0 : i32
    %c0_i32_0 = arith.constant 0 : i32
    %c0_i32_1 = arith.constant 0 : i32
    return %c0_i32, %c0_i32_0 : i32, i32
  }
  func.func @transform_31(%arg0: i32) -> (i32, i32) {
    %c0_i32 = arith.constant 0 : i32
    %c0_i32_0 = arith.constant 0 : i32
    %c0_i32_1 = arith.constant 0 : i32
    return %c0_i32, %c0_i32_0 : i32, i32
  }
  func.func @transform_32(%arg0: i32) -> (i32, i32) {
    %c0_i32 = arith.constant 0 : i32
    %c0_i32_0 = arith.constant 0 : i32
    %c0_i32_1 = arith.constant 0 : i32
    return %c0_i32, %c0_i32_0 : i32, i32
  }
}

</mosaic_0001>

<llo_original>
// kernel: actor_forward.1
$region0: #{actor_forward.1}
  #allocation0 [shape = 'u32[]', space=smem, size = 0x4, offset = 0x4, fixed_abs, tag = 'smem constant byte address 0x4 - core index']
  #allocation1 [shape = 'u32[144,128]{1,0:T(1,128)}', space=vmem, size = 0x12000, scoped, tag = 'internal scratch']
  #allocation2 [shape = 'f32[1,256]{1,0:T(1,128)}', space=vmem, size = 0x400, scoped, tag = 'scratch operand']
  #allocation3 [shape = 'f32[16,64]{1,0:T(8,128)}', space=vmem, size = 0x2000, scoped, tag = 'scratch operand']
  #allocation4 [shape = 'f32[1,256]{1,0:T(1,128)}', space=vmem, size = 0x400, scoped, tag = 'scratch operand']
  #allocation5 [shape = 'f32[64,64]{1,0:T(8,128)}', space=vmem, size = 0x8000, scoped, tag = 'scratch operand']
  %s0 = inlined_call_operand.smem [shape: u32[33], index: -1, kind: input, shape index: {}]
  %s1 = sld [smem:[%s0]]
  %s2 = scalar_lea.smem %s0, 1
  %s3 = sld [smem:[%s2]]
  %s4 = scalar_lea.smem %s0, 2
  %s5 = sld [smem:[%s4]]
  %s6 = scalar_lea.smem %s0, 3
  %s7 = sld [smem:[%s6]]
  %s8 = scalar_lea.smem %s0, 4
  %s9 = sld [smem:[%s8]]
  %s10 = scalar_lea.smem %s0, 5
  %s11 = sld [smem:[%s10]]
  %s12 = scalar_lea.smem %s0, 6
  %s13 = sld [smem:[%s12]]
  %s14 = scalar_lea.smem %s0, 7
  %s15 = sld [smem:[%s14]]
  %s16 = scalar_lea.smem %s0, 8
  %s17 = sld [smem:[%s16]]
  %s18 = scalar_lea.smem %s0, 9
  %s19 = sld [smem:[%s18]]
  %s20 = scalar_lea.smem %s0, 10
  %s21 = sld [smem:[%s20]]
  %s22 = scalar_lea.smem %s0, 11
  %s23 = sld [smem:[%s22]]
  %s24 = scalar_lea.smem %s0, 12
  %s25 = sld [smem:[%s24]]
  %s26 = scalar_lea.smem %s0, 13
  %s27 = sld [smem:[%s26]]
  %s28 = scalar_lea.smem %s0, 14
  %s29 = sld [smem:[%s28]]
  %s30 = scalar_lea.smem %s0, 15
  %s31 = sld [smem:[%s30]]
  %s32 = scalar_lea.smem %s0, 16
  %s33 = sld [smem:[%s32]]
  %s34 = scalar_lea.smem %s0, 17
  %s35 = sld [smem:[%s34]]
  %s36 = scalar_lea.smem %s0, 18
  %s37 = sld [smem:[%s36]]
  %s38 = scalar_lea.smem %s0, 19
  %s39 = sld [smem:[%s38]]
  %s40 = scalar_lea.smem %s0, 20
  %s41 = sld [smem:[%s40]]
  %s42 = scalar_lea.smem %s0, 21
  %s43 = sld [smem:[%s42]]
  %s44 = scalar_lea.smem %s0, 22
  %s45 = sld [smem:[%s44]]
  %s46 = scalar_lea.smem %s0, 23
  %s47 = sld [smem:[%s46]]
  %s48 = scalar_lea.smem %s0, 24
  %s49 = sld [smem:[%s48]]
  %s50 = scalar_lea.smem %s0, 25
  %s51 = sld [smem:[%s50]]
  %s52 = scalar_lea.smem %s0, 26
  %s53 = sld [smem:[%s52]]
  %s54 = scalar_lea.smem %s0, 27
  %s55 = sld [smem:[%s54]]
  %s56 = scalar_lea.smem %s0, 28
  %s57 = sld [smem:[%s56]]
  %s58 = scalar_lea.smem %s0, 29
  %s59 = sld [smem:[%s58]]
  %s60 = scalar_lea.smem %s0, 30
  %s61 = sld [smem:[%s60]]
  %s62 = scalar_lea.smem %s0, 31
  %s63 = sld [smem:[%s62]]
  %s64 = scalar_lea.smem %s0, 32
  %s65 = sld [smem:[%s64]]
  %s66 = sld [smem:[#allocation0]]
  $region285: #{actor_forward.1} parent=0
    _
  %s68 = ssub.s32 1, %s66
  %s69 = scalar_select 0, %s68, %s66
  $region1: #{actor_forward.1} parent=0
    #allocation6 [shape = 'u8[512]{0}', space=vmem, size = 0x400, scoped, tag = 'input window, operand 0, single buffered']
    #allocation7 [shape = 's32[2]{0}', space=sflag, size = 0x8, scoped, tag = 'scoped memory for actor_forward.1']
    #allocation8 [shape = 's32[2]{0}', space=sflag, size = 0x8, scoped, tag = 'scoped memory for actor_forward.1']
    #allocation9 [shape = 'u8[512]{0}', space=vmem, size = 0x400, scoped, tag = 'input window, operand 2, single buffered']
    #allocation10 [shape = 's32[1]{0}', space=sflag, size = 0x4, scoped, tag = 'scoped memory for actor_forward.1']
    #allocation11 [shape = 'u8[4096]{0}', space=vmem, size = 0x1000, scoped, tag = 'input window, operand 3, single buffered']
    #allocation12 [shape = 'u8[512]{0}', space=vmem, size = 0x400, scoped, tag = 'input window, operand 4, single buffered']
    #allocation13 [shape = 's32[1]{0}', space=sflag, size = 0x4, scoped, tag = 'scoped memory for actor_forward.1']
    #allocation14 [shape = 'u8[65536]{0}', space=vmem, size = 0x10000, scoped, tag = 'input window, operand 5, single buffered']
    #allocation15 [shape = 'u8[1024]{0}', space=vmem, size = 0x400, scoped, tag = 'input window, operand 6, single buffered']
    #allocation16 [shape = 's32[1]{0}', space=sflag, size = 0x4, scoped, tag = 'scoped memory for actor_forward.1']
    #allocation17 [shape = 'u8[131072]{0}', space=vmem, size = 0x20000, scoped, tag = 'input window, operand 7, single buffered']
    #allocation18 [shape = 'u8[1024]{0}', space=vmem, size = 0x400, scoped, tag = 'input window, operand 8, single buffered']
    #allocation19 [shape = 's32[1]{0}', space=sflag, size = 0x4, scoped, tag = 'scoped memory for actor_forward.1']
    #allocation20 [shape = 'u8[2048]{0}', space=vmem, size = 0x800, scoped, tag = 'input window, operand 9, single buffered']
    #allocation21 [shape = 'u8[512]{0}', space=vmem, size = 0x400, scoped, tag = 'input window, operand 10, single buffered']
    #allocation22 [shape = 's32[1]{0}', space=sflag, size = 0x4, scoped, tag = 'scoped memory for actor_forward.1']
    #allocation23 [shape = 'u8[16384]{0}', space=vmem, size = 0x4000, scoped, tag = 'input window, operand 11, single buffered']
    #allocation24 [shape = 'u8[512]{0}', space=vmem, size = 0x400, scoped, tag = 'input window, operand 12, single buffered']
    #allocation25 [shape = 's32[1]{0}', space=sflag, size = 0x4, scoped, tag = 'scoped memory for actor_forward.1']
    #allocation26 [shape = 'u8[32768]{0}', space=vmem, size = 0x8000, scoped, tag = 'input window, operand 13, single buffered']
    #allocation27 [shape = 'u8[1024]{0}', space=vmem, size = 0x400, scoped, tag = 'input window, operand 14, single buffered']
    #allocation28 [shape = 's32[1]{0}', space=sflag, size = 0x4, scoped, tag = 'scoped memory for actor_forward.1']
    #allocation29 [shape = 'u8[524288]{0}', space=vmem, size = 0x80000, scoped, tag = 'input window, operand 15']
    #allocation30 [shape = 'u8[4096]{0}', space=vmem, size = 0x1000, scoped, tag = 'input window, operand 16']
    #allocation31 [shape = 'u8[16384]{0}', space=vmem, size = 0x4000, scoped, tag = 'input window, operand 17, single buffered']
    #allocation32 [shape = 'u8[512]{0}', space=vmem, size = 0x400, scoped, tag = 'input window, operand 18, single buffered']
    #allocation33 [shape = 'u8[131072]{0}', space=vmem, size = 0x20000, scoped, tag = 'input window, operand 19, single buffered']
    #allocation34 [shape = 'u8[2048]{0}', space=vmem, size = 0x800, scoped, tag = 'input window, operand 20, single buffered']
    #allocation35 [shape = 'u8[262144]{0}', space=vmem, size = 0x40000, scoped, tag = 'input window, operand 21, single buffered']
    #allocation36 [shape = 'u8[1024]{0}', space=vmem, size = 0x400, scoped, tag = 'input window, operand 22, single buffered']
    #allocation37 [shape = 'u8[131072]{0}', space=vmem, size = 0x20000, scoped, tag = 'input window, operand 23, single buffered']
    #allocation38 [shape = 'u8[1024]{0}', space=vmem, size = 0x400, scoped, tag = 'input window, operand 24, single buffered']
    #allocation39 [shape = 's32[1]{0}', space=sflag, size = 0x4, scoped, tag = 'scoped memory for actor_forward.1']
    #allocation40 [shape = 'u8[131072]{0}', space=vmem, size = 0x20000, scoped, tag = 'input window, operand 25, single buffered']
    #allocation41 [shape = 'u8[131072]{0}', space=vmem, size = 0x20000, scoped, tag = 'input window, operand 26, single buffered']
    #allocation42 [shape = 's32[1]{0}', space=sflag, size = 0x4, scoped, tag = 'scoped memory for actor_forward.1']
    #allocation43 [shape = 'u8[1024]{0}', space=vmem, size = 0x400, scoped, tag = 'input window, operand 27, single buffered']
    #allocation44 [shape = 'u8[512]{0}', space=vmem, size = 0x400, scoped, tag = 'input window, operand 29, single buffered']
    #allocation45 [shape = 's32[1]{0}', space=sflag, size = 0x4, scoped, tag = 'scoped memory for actor_forward.1']
    #allocation46 [shape = 'u8[512]{0}', space=vmem, size = 0x400, scoped, tag = 'input window, operand 31, single buffered']
    #allocation47 [shape = 'u8[512]{0}', space=vmem, size = 0x400, scoped, tag = 'output window, operand 0, single buffered']
    %70 = vsyncpa [#allocation7], 0
    %71 = vsyncpa [#allocation10], 0
    %72 = vsyncpa [#allocation13], 0
    %73 = vsyncpa [#allocation16], 0
    %74 = vsyncpa [#allocation19], 0
    %75 = vsyncpa [#allocation22], 0
    %76 = vsyncpa [#allocation25], 0
    %77 = vsyncpa [#allocation28], 0
    %78 = vsyncpa [#allocation39], 0
    %79 = vsyncpa [#allocation42], 0
    %80 = vsyncpa [#allocation45], 0
    %81 = vsyncpa [#allocation8], 0
    loop: start=0, step=1, limit=10
    $region2: #{actor_forward.1} parent=1 // loop_pre_header
      _
    $region3: #{actor_forward.1} parent=1 // loop_header
      %s83 = sphi 0, %s87
      %p84 = scmp.ge.s32.totalorder %s83, 10
      %s91 = sphi 0, %s91
      %s93 = sphi 0, %s91
      %s94 = sphi 0, %s93
      %s108 = sphi 0, %s94
      %s112 = sphi 0, %s112
      %s114 = sphi 0, %s112
      %s115 = sphi 0, %s114
      %s129 = sphi 0, %s115
      %s133 = sphi 0, %s133
      %s135 = sphi 0, %s133
      %s136 = sphi 0, %s135
      %s150 = sphi 0, %s136
      %s154 = sphi 0, %s154
      %s156 = sphi 0, %s154
      %s157 = sphi 0, %s156
      %s171 = sphi 0, %s157
      %s175 = sphi 0, %s175
      %s177 = sphi 0, %s175
      %s178 = sphi 0, %s177
      %s192 = sphi 0, %s178
      %s196 = sphi 0, %s196
      %s198 = sphi 0, %s196
      %s199 = sphi 0, %s198
      %s213 = sphi 0, %s199
      %s217 = sphi 0, %s217
      %s219 = sphi 0, %s217
      %s220 = sphi 0, %s219
      %s234 = sphi 0, %s220
      %s238 = sphi 0, %s238
      %s240 = sphi 0, %s238
      %s241 = sphi 0, %s240
      %s255 = sphi 0, %s241
      %s259 = sphi 0, %s259
      %s261 = sphi 0, %s259
      %s262 = sphi 0, %s261
      %s276 = sphi 0, %s262
      %s280 = sphi 0, %s280
      %s282 = sphi 0, %s280
      %s283 = sphi 0, %s282
      %s297 = sphi 0, %s283
      %s301 = sphi 0, %s301
      %s303 = sphi 0, %s301
      %s304 = sphi 0, %s303
      %s318 = sphi 0, %s304
      %s322 = sphi 0, %s322
      %s324 = sphi 0, %s322
      %s325 = sphi 0, %s324
      %s339 = sphi 0, %s325
      %s343 = sphi 0, %s343
      %s345 = sphi 0, %s343
      %s346 = sphi 0, %s345
      %s360 = sphi 0, %s346
      %s364 = sphi 0, %s364
      %s366 = sphi 0, %s364
      %s367 = sphi 0, %s366
      %s381 = sphi 0, %s367
      %s385 = sphi 0, %s385
      %s387 = sphi 0, %s385
      %s388 = sphi 0, %s387
      %s402 = sphi 0, %s388
      %s408 = sphi 0, %s410
      %s411 = sphi 0, %s408
      %s412 = sphi 0, %s411
      %s428 = sphi 0, %s412
      %s434 = sphi 0, %s436
      %s437 = sphi 0, %s434
      %s438 = sphi 0, %s437
      %s454 = sphi 0, %s438
      %s458 = sphi 0, %s458
      %s460 = sphi 0, %s458
      %s461 = sphi 0, %s460
      %s475 = sphi 0, %s461
      %s479 = sphi 0, %s479
      %s481 = sphi 0, %s479
      %s482 = sphi 0, %s481
      %s496 = sphi 0, %s482
      %s500 = sphi 0, %s500
      %s502 = sphi 0, %s500
      %s503 = sphi 0, %s502
      %s517 = sphi 0, %s503
      %s521 = sphi 0, %s521
      %s523 = sphi 0, %s521
      %s524 = sphi 0, %s523
      %s538 = sphi 0, %s524
      %s542 = sphi 0, %s542
      %s544 = sphi 0, %s542
      %s545 = sphi 0, %s544
      %s559 = sphi 0, %s545
      %s563 = sphi 0, %s563
      %s565 = sphi 0, %s563
      %s566 = sphi 0, %s565
      %s580 = sphi 0, %s566
      %s584 = sphi 0, %s584
      %s586 = sphi 0, %s584
      %s587 = sphi 0, %s586
      %s601 = sphi 0, %s587
      %s605 = sphi 0, %s605
      %s607 = sphi 0, %s605
      %s608 = sphi 0, %s607
      %s622 = sphi 0, %s608
      %s626 = sphi 0, %s626
      %s628 = sphi 0, %s626
      %s629 = sphi 0, %s628
      %s643 = sphi 0, %s629
      %s647 = sphi 0, %s647
      %s649 = sphi 0, %s647
      %s650 = sphi 0, %s649
      %s664 = sphi 0, %s650
      %s668 = sphi 0, %s668
      %s670 = sphi 0, %s668
      %s671 = sphi 0, %s670
      %s685 = sphi 0, %s671
      %s689 = sphi 0, %s689
      %s691 = sphi 0, %s689
      %s692 = sphi 0, %s691
      %s706 = sphi 0, %s692
      %s710 = sphi 0, %s710
      %s712 = sphi 0, %s710
      %s713 = sphi 0, %s712
      %s727 = sphi 0, %s713
      %s731 = sphi 0, %s731
      %s733 = sphi 0, %s731
      %s734 = sphi 0, %s733
      %s748 = sphi 0, %s734
      %s752 = sphi 0, %s752
      %s754 = sphi 0, %s752
      %s755 = sphi 0, %s754
      %s769 = sphi 0, %s755
      %s773 = sphi 0, %s773
      %s775 = sphi 0, %s773
      %s776 = sphi 0, %s775
      %s790 = sphi 0, %s776
    $region4: #{actor_forward.1} parent=1 // loop_header_branch
      %86 = sbr.rel (%p84) target = $region8
    $region5: #{actor_forward.1} parent=1 // loop_body
      %s88 = ssub.s32 %s83, 1
      %s89 = ssub.s32 %s83, 2
      %s90 = sadd.s32 %s83, 1
      %s92 = sadd.s32 %s91, 1
      %p95 = scmp.eq.s32.totalorder %s83, 7
      %p96 = scmp.ne.s32.totalorder %s91, %s93
      %p97 = scmp.eq.s32.totalorder %s83, 0
      %p98 = por %p96, %p97
      %p99 = scmp.ne.s32.totalorder %s91, %s93
      %p100 = scmp.eq.s32.totalorder %s88, 7
      %p101 = por %p99, %p100
      %p102 = scmp.ne.s32.totalorder %s93, %s94
      %p103 = scmp.eq.s32.totalorder %s88, 0
      %p104 = por %p102, %p103
      %p105 = scmp.ne.s32.totalorder %s93, %s94
      %p106 = scmp.eq.s32.totalorder %s89, 7
      %p107 = por %p105, %p106
      %p109 = scmp.ne.s32.totalorder %s94, %s108
      %p110 = scmp.eq.s32.totalorder %s89, 0
      %p111 = por %p109, %p110
      %s113 = sadd.s32 %s112, 1
      %p116 = scmp.eq.s32.totalorder %s83, 7
      %p117 = scmp.ne.s32.totalorder %s112, %s114
      %p118 = scmp.eq.s32.totalorder %s83, 0
      %p119 = por %p117, %p118
      %p120 = scmp.ne.s32.totalorder %s112, %s114
      %p121 = scmp.eq.s32.totalorder %s88, 7
      %p122 = por %p120, %p121
      %p123 = scmp.ne.s32.totalorder %s114, %s115
      %p124 = scmp.eq.s32.totalorder %s88, 0
      %p125 = por %p123, %p124
      %p126 = scmp.ne.s32.totalorder %s114, %s115
      %p127 = scmp.eq.s32.totalorder %s89, 7
      %p128 = por %p126, %p127
      %p130 = scmp.ne.s32.totalorder %s115, %s129
      %p131 = scmp.eq.s32.totalorder %s89, 0
      %p132 = por %p130, %p131
      %s134 = sadd.s32 %s133, 1
      %p137 = scmp.eq.s32.totalorder %s83, 7
      %p138 = scmp.ne.s32.totalorder %s133, %s135
      %p139 = scmp.eq.s32.totalorder %s83, 0
      %p140 = por %p138, %p139
      %p141 = scmp.ne.s32.totalorder %s133, %s135
      %p142 = scmp.eq.s32.totalorder %s88, 7
      %p143 = por %p141, %p142
      %p144 = scmp.ne.s32.totalorder %s135, %s136
      %p145 = scmp.eq.s32.totalorder %s88, 0
      %p146 = por %p144, %p145
      %p147 = scmp.ne.s32.totalorder %s135, %s136
      %p148 = scmp.eq.s32.totalorder %s89, 7
      %p149 = por %p147, %p148
      %p151 = scmp.ne.s32.totalorder %s136, %s150
      %p152 = scmp.eq.s32.totalorder %s89, 0
      %p153 = por %p151, %p152
      %s155 = sadd.s32 %s154, 1
      %p158 = scmp.eq.s32.totalorder %s83, 7
      %p159 = scmp.ne.s32.totalorder %s154, %s156
      %p160 = scmp.eq.s32.totalorder %s83, 0
      %p161 = por %p159, %p160
      %p162 = scmp.ne.s32.totalorder %s154, %s156
      %p163 = scmp.eq.s32.totalorder %s88, 7
      %p164 = por %p162, %p163
      %p165 = scmp.ne.s32.totalorder %s156, %s157
      %p166 = scmp.eq.s32.totalorder %s88, 0
      %p167 = por %p165, %p166
      %p168 = scmp.ne.s32.totalorder %s156, %s157
      %p169 = scmp.eq.s32.totalorder %s89, 7
      %p170 = por %p168, %p169
      %p172 = scmp.ne.s32.totalorder %s157, %s171
      %p173 = scmp.eq.s32.totalorder %s89, 0
      %p174 = por %p172, %p173
      %s176 = sadd.s32 %s175, 1
      %p179 = scmp.eq.s32.totalorder %s83, 7
      %p180 = scmp.ne.s32.totalorder %s175, %s177
      %p181 = scmp.eq.s32.totalorder %s83, 0
      %p182 = por %p180, %p181
      %p183 = scmp.ne.s32.totalorder %s175, %s177
      %p184 = scmp.eq.s32.totalorder %s88, 7
      %p185 = por %p183, %p184
      %p186 = scmp.ne.s32.totalorder %s177, %s178
      %p187 = scmp.eq.s32.totalorder %s88, 0
      %p188 = por %p186, %p187
      %p189 = scmp.ne.s32.totalorder %s177, %s178
      %p190 = scmp.eq.s32.totalorder %s89, 7
      %p191 = por %p189, %p190
      %p193 = scmp.ne.s32.totalorder %s178, %s192
      %p194 = scmp.eq.s32.totalorder %s89, 0
      %p195 = por %p193, %p194
      %s197 = sadd.s32 %s196, 1
      %p200 = scmp.eq.s32.totalorder %s83, 7
      %p201 = scmp.ne.s32.totalorder %s196, %s198
      %p202 = scmp.eq.s32.totalorder %s83, 0
      %p203 = por %p201, %p202
      %p204 = scmp.ne.s32.totalorder %s196, %s198
      %p205 = scmp.eq.s32.totalorder %s88, 7
      %p206 = por %p204, %p205
      %p207 = scmp.ne.s32.totalorder %s198, %s199
      %p208 = scmp.eq.s32.totalorder %s88, 0
      %p209 = por %p207, %p208
      %p210 = scmp.ne.s32.totalorder %s198, %s199
      %p211 = scmp.eq.s32.totalorder %s89, 7
      %p212 = por %p210, %p211
      %p214 = scmp.ne.s32.totalorder %s199, %s213
      %p215 = scmp.eq.s32.totalorder %s89, 0
      %p216 = por %p214, %p215
      %s218 = sadd.s32 %s217, 1
      %p221 = scmp.eq.s32.totalorder %s83, 7
      %p222 = scmp.ne.s32.totalorder %s217, %s219
      %p223 = scmp.eq.s32.totalorder %s83, 0
      %p224 = por %p222, %p223
      %p225 = scmp.ne.s32.totalorder %s217, %s219
      %p226 = scmp.eq.s32.totalorder %s88, 7
      %p227 = por %p225, %p226
      %p228 = scmp.ne.s32.totalorder %s219, %s220
      %p229 = scmp.eq.s32.totalorder %s88, 0
      %p230 = por %p228, %p229
      %p231 = scmp.ne.s32.totalorder %s219, %s220
      %p232 = scmp.eq.s32.totalorder %s89, 7
      %p233 = por %p231, %p232
      %p235 = scmp.ne.s32.totalorder %s220, %s234
      %p236 = scmp.eq.s32.totalorder %s89, 0
      %p237 = por %p235, %p236
      %s239 = sadd.s32 %s238, 1
      %p242 = scmp.eq.s32.totalorder %s83, 7
      %p243 = scmp.ne.s32.totalorder %s238, %s240
      %p244 = scmp.eq.s32.totalorder %s83, 0
      %p245 = por %p243, %p244
      %p246 = scmp.ne.s32.totalorder %s238, %s240
      %p247 = scmp.eq.s32.totalorder %s88, 7
      %p248 = por %p246, %p247
      %p249 = scmp.ne.s32.totalorder %s240, %s241
      %p250 = scmp.eq.s32.totalorder %s88, 0
      %p251 = por %p249, %p250
      %p252 = scmp.ne.s32.totalorder %s240, %s241
      %p253 = scmp.eq.s32.totalorder %s89, 7
      %p254 = por %p252, %p253
      %p256 = scmp.ne.s32.totalorder %s241, %s255
      %p257 = scmp.eq.s32.totalorder %s89, 0
      %p258 = por %p256, %p257
      %s260 = sadd.s32 %s259, 1
      %p263 = scmp.eq.s32.totalorder %s83, 7
      %p264 = scmp.ne.s32.totalorder %s259, %s261
      %p265 = scmp.eq.s32.totalorder %s83, 0
      %p266 = por %p264, %p265
      %p267 = scmp.ne.s32.totalorder %s259, %s261
      %p268 = scmp.eq.s32.totalorder %s88, 7
      %p269 = por %p267, %p268
      %p270 = scmp.ne.s32.totalorder %s261, %s262
      %p271 = scmp.eq.s32.totalorder %s88, 0
      %p272 = por %p270, %p271
      %p273 = scmp.ne.s32.totalorder %s261, %s262
      %p274 = scmp.eq.s32.totalorder %s89, 7
      %p275 = por %p273, %p274
      %p277 = scmp.ne.s32.totalorder %s262, %s276
      %p278 = scmp.eq.s32.totalorder %s89, 0
      %p279 = por %p277, %p278
      %s281 = sadd.s32 %s280, 1
      %p284 = scmp.eq.s32.totalorder %s83, 7
      %p285 = scmp.ne.s32.totalorder %s280, %s282
      %p286 = scmp.eq.s32.totalorder %s83, 0
      %p287 = por %p285, %p286
      %p288 = scmp.ne.s32.totalorder %s280, %s282
      %p289 = scmp.eq.s32.totalorder %s88, 7
      %p290 = por %p288, %p289
      %p291 = scmp.ne.s32.totalorder %s282, %s283
      %p292 = scmp.eq.s32.totalorder %s88, 0
      %p293 = por %p291, %p292
      %p294 = scmp.ne.s32.totalorder %s282, %s283
      %p295 = scmp.eq.s32.totalorder %s89, 7
      %p296 = por %p294, %p295
      %p298 = scmp.ne.s32.totalorder %s283, %s297
      %p299 = scmp.eq.s32.totalorder %s89, 0
      %p300 = por %p298, %p299
      %s302 = sadd.s32 %s301, 1
      %p305 = scmp.eq.s32.totalorder %s83, 7
      %p306 = scmp.ne.s32.totalorder %s301, %s303
      %p307 = scmp.eq.s32.totalorder %s83, 0
      %p308 = por %p306, %p307
      %p309 = scmp.ne.s32.totalorder %s301, %s303
      %p310 = scmp.eq.s32.totalorder %s88, 7
      %p311 = por %p309, %p310
      %p312 = scmp.ne.s32.totalorder %s303, %s304
      %p313 = scmp.eq.s32.totalorder %s88, 0
      %p314 = por %p312, %p313
      %p315 = scmp.ne.s32.totalorder %s303, %s304
      %p316 = scmp.eq.s32.totalorder %s89, 7
      %p317 = por %p315, %p316
      %p319 = scmp.ne.s32.totalorder %s304, %s318
      %p320 = scmp.eq.s32.totalorder %s89, 0
      %p321 = por %p319, %p320
      %s323 = sadd.s32 %s322, 1
      %p326 = scmp.eq.s32.totalorder %s83, 7
      %p327 = scmp.ne.s32.totalorder %s322, %s324
      %p328 = scmp.eq.s32.totalorder %s83, 0
      %p329 = por %p327, %p328
      %p330 = scmp.ne.s32.totalorder %s322, %s324
      %p331 = scmp.eq.s32.totalorder %s88, 7
      %p332 = por %p330, %p331
      %p333 = scmp.ne.s32.totalorder %s324, %s325
      %p334 = scmp.eq.s32.totalorder %s88, 0
      %p335 = por %p333, %p334
      %p336 = scmp.ne.s32.totalorder %s324, %s325
      %p337 = scmp.eq.s32.totalorder %s89, 7
      %p338 = por %p336, %p337
      %p340 = scmp.ne.s32.totalorder %s325, %s339
      %p341 = scmp.eq.s32.totalorder %s89, 0
      %p342 = por %p340, %p341
      %s344 = sadd.s32 %s343, 1
      %p347 = scmp.eq.s32.totalorder %s83, 7
      %p348 = scmp.ne.s32.totalorder %s343, %s345
      %p349 = scmp.eq.s32.totalorder %s83, 0
      %p350 = por %p348, %p349
      %p351 = scmp.ne.s32.totalorder %s343, %s345
      %p352 = scmp.eq.s32.totalorder %s88, 7
      %p353 = por %p351, %p352
      %p354 = scmp.ne.s32.totalorder %s345, %s346
      %p355 = scmp.eq.s32.totalorder %s88, 0
      %p356 = por %p354, %p355
      %p357 = scmp.ne.s32.totalorder %s345, %s346
      %p358 = scmp.eq.s32.totalorder %s89, 7
      %p359 = por %p357, %p358
      %p361 = scmp.ne.s32.totalorder %s346, %s360
      %p362 = scmp.eq.s32.totalorder %s89, 0
      %p363 = por %p361, %p362
      %s365 = sadd.s32 %s364, 1
      %p368 = scmp.eq.s32.totalorder %s83, 7
      %p369 = scmp.ne.s32.totalorder %s364, %s366
      %p370 = scmp.eq.s32.totalorder %s83, 0
      %p371 = por %p369, %p370
      %p372 = scmp.ne.s32.totalorder %s364, %s366
      %p373 = scmp.eq.s32.totalorder %s88, 7
      %p374 = por %p372, %p373
      %p375 = scmp.ne.s32.totalorder %s366, %s367
      %p376 = scmp.eq.s32.totalorder %s88, 0
      %p377 = por %p375, %p376
      %p378 = scmp.ne.s32.totalorder %s366, %s367
      %p379 = scmp.eq.s32.totalorder %s89, 7
      %p380 = por %p378, %p379
      %p382 = scmp.ne.s32.totalorder %s367, %s381
      %p383 = scmp.eq.s32.totalorder %s89, 0
      %p384 = por %p382, %p383
      %s386 = sadd.s32 %s385, 1
      %p389 = scmp.eq.s32.totalorder %s83, 7
      %p390 = scmp.ne.s32.totalorder %s385, %s387
      %p391 = scmp.eq.s32.totalorder %s83, 0
      %p392 = por %p390, %p391
      %p393 = scmp.ne.s32.totalorder %s385, %s387
      %p394 = scmp.eq.s32.totalorder %s88, 7
      %p395 = por %p393, %p394
      %p396 = scmp.ne.s32.totalorder %s387, %s388
      %p397 = scmp.eq.s32.totalorder %s88, 0
      %p398 = por %p396, %p397
      %p399 = scmp.ne.s32.totalorder %s387, %s388
      %p400 = scmp.eq.s32.totalorder %s89, 7
      %p401 = por %p399, %p400
      %p403 = scmp.ne.s32.totalorder %s388, %s402
      %p404 = scmp.eq.s32.totalorder %s89, 0
      %p405 = por %p403, %p404
      %s406 = ssub.s32 %s83, %s90
      %p407 = scmp.eq.s32.totalorder %s406, 0
      %s409 = sadd.s32 %s408, 1
      %s410 = scalar_select %p407, %s408, %s409
      %p413 = pneg %p407
      %p414 = scmp.eq.s32.totalorder %s83, 7
      %p415 = por %p413, %p414
      %p416 = scmp.ne.s32.totalorder %s408, %s411
      %p417 = scmp.eq.s32.totalorder %s83, 0
      %p418 = por %p416, %p417
      %p419 = scmp.ne.s32.totalorder %s408, %s411
      %p420 = scmp.eq.s32.totalorder %s88, 7
      %p421 = por %p419, %p420
      %p422 = scmp.ne.s32.totalorder %s411, %s412
      %p423 = scmp.eq.s32.totalorder %s88, 0
      %p424 = por %p422, %p423
      %p425 = scmp.ne.s32.totalorder %s411, %s412
      %p426 = scmp.eq.s32.totalorder %s89, 7
      %p427 = por %p425, %p426
      %p429 = scmp.ne.s32.totalorder %s412, %s428
      %p430 = scmp.eq.s32.totalorder %s89, 0
      %p431 = por %p429, %p430
      %s432 = ssub.s32 %s83, %s90
      %p433 = scmp.eq.s32.totalorder %s432, 0
      %s435 = sadd.s32 %s434, 1
      %s436 = scalar_select %p433, %s434, %s435
      %p439 = pneg %p433
      %p440 = scmp.eq.s32.totalorder %s83, 7
      %p441 = por %p439, %p440
      %p442 = scmp.ne.s32.totalorder %s434, %s437
      %p443 = scmp.eq.s32.totalorder %s83, 0
      %p444 = por %p442, %p443
      %p445 = scmp.ne.s32.totalorder %s434, %s437
      %p446 = scmp.eq.s32.totalorder %s88, 7
      %p447 = por %p445, %p446
      %p448 = scmp.ne.s32.totalorder %s437, %s438
      %p449 = scmp.eq.s32.totalorder %s88, 0
      %p450 = por %p448, %p449
      %p451 = scmp.ne.s32.totalorder %s437, %s438
      %p452 = scmp.eq.s32.totalorder %s89, 7
      %p453 = por %p451, %p452
      %p455 = scmp.ne.s32.totalorder %s438, %s454
      %p456 = scmp.eq.s32.totalorder %s89, 0
      %p457 = por %p455, %p456
      %s459 = sadd.s32 %s458, 1
      %p462 = scmp.eq.s32.totalorder %s83, 7
      %p463 = scmp.ne.s32.totalorder %s458, %s460
      %p464 = scmp.eq.s32.totalorder %s83, 0
      %p465 = por %p463, %p464
      %p466 = scmp.ne.s32.totalorder %s458, %s460
      %p467 = scmp.eq.s32.totalorder %s88, 7
      %p468 = por %p466, %p467
      %p469 = scmp.ne.s32.totalorder %s460, %s461
      %p470 = scmp.eq.s32.totalorder %s88, 0
      %p471 = por %p469, %p470
      %p472 = scmp.ne.s32.totalorder %s460, %s461
      %p473 = scmp.eq.s32.totalorder %s89, 7
      %p474 = por %p472, %p473
      %p476 = scmp.ne.s32.totalorder %s461, %s475
      %p477 = scmp.eq.s32.totalorder %s89, 0
      %p478 = por %p476, %p477
      %s480 = sadd.s32 %s479, 1
      %p483 = scmp.eq.s32.totalorder %s83, 7
      %p484 = scmp.ne.s32.totalorder %s479, %s481
      %p485 = scmp.eq.s32.totalorder %s83, 0
      %p486 = por %p484, %p485
      %p487 = scmp.ne.s32.totalorder %s479, %s481
      %p488 = scmp.eq.s32.totalorder %s88, 7
      %p489 = por %p487, %p488
      %p490 = scmp.ne.s32.totalorder %s481, %s482
      %p491 = scmp.eq.s32.totalorder %s88, 0
      %p492 = por %p490, %p491
      %p493 = scmp.ne.s32.totalorder %s481, %s482
      %p494 = scmp.eq.s32.totalorder %s89, 7
      %p495 = por %p493, %p494
      %p497 = scmp.ne.s32.totalorder %s482, %s496
      %p498 = scmp.eq.s32.totalorder %s89, 0
      %p499 = por %p497, %p498
      %s501 = sadd.s32 %s500, 1
      %p504 = scmp.eq.s32.totalorder %s83, 7
      %p505 = scmp.ne.s32.totalorder %s500, %s502
      %p506 = scmp.eq.s32.totalorder %s83, 0
      %p507 = por %p505, %p506
      %p508 = scmp.ne.s32.totalorder %s500, %s502
      %p509 = scmp.eq.s32.totalorder %s88, 7
      %p510 = por %p508, %p509
      %p511 = scmp.ne.s32.totalorder %s502, %s503
      %p512 = scmp.eq.s32.totalorder %s88, 0
      %p513 = por %p511, %p512
      %p514 = scmp.ne.s32.totalorder %s502, %s503
      %p515 = scmp.eq.s32.totalorder %s89, 7
      %p516 = por %p514, %p515
      %p518 = scmp.ne.s32.totalorder %s503, %s517
      %p519 = scmp.eq.s32.totalorder %s89, 0
      %p520 = por %p518, %p519
      %s522 = sadd.s32 %s521, 1
      %p525 = scmp.eq.s32.totalorder %s83, 7
      %p526 = scmp.ne.s32.totalorder %s521, %s523
      %p527 = scmp.eq.s32.totalorder %s83, 0
      %p528 = por %p526, %p527
      %p529 = scmp.ne.s32.totalorder %s521, %s523
      %p530 = scmp.eq.s32.totalorder %s88, 7
      %p531 = por %p529, %p530
      %p532 = scmp.ne.s32.totalorder %s523, %s524
      %p533 = scmp.eq.s32.totalorder %s88, 0
      %p534 = por %p532, %p533
      %p535 = scmp.ne.s32.totalorder %s523, %s524
      %p536 = scmp.eq.s32.totalorder %s89, 7
      %p537 = por %p535, %p536
      %p539 = scmp.ne.s32.totalorder %s524, %s538
      %p540 = scmp.eq.s32.totalorder %s89, 0
      %p541 = por %p539, %p540
      %s543 = sadd.s32 %s542, 1
      %p546 = scmp.eq.s32.totalorder %s83, 7
      %p547 = scmp.ne.s32.totalorder %s542, %s544
      %p548 = scmp.eq.s32.totalorder %s83, 0
      %p549 = por %p547, %p548
      %p550 = scmp.ne.s32.totalorder %s542, %s544
      %p551 = scmp.eq.s32.totalorder %s88, 7
      %p552 = por %p550, %p551
      %p553 = scmp.ne.s32.totalorder %s544, %s545
      %p554 = scmp.eq.s32.totalorder %s88, 0
      %p555 = por %p553, %p554
      %p556 = scmp.ne.s32.totalorder %s544, %s545
      %p557 = scmp.eq.s32.totalorder %s89, 7
      %p558 = por %p556, %p557
      %p560 = scmp.ne.s32.totalorder %s545, %s559
      %p561 = scmp.eq.s32.totalorder %s89, 0
      %p562 = por %p560, %p561
      %s564 = sadd.s32 %s563, 1
      %p567 = scmp.eq.s32.totalorder %s83, 7
      %p568 = scmp.ne.s32.totalorder %s563, %s565
      %p569 = scmp.eq.s32.totalorder %s83, 0
      %p570 = por %p568, %p569
      %p571 = scmp.ne.s32.totalorder %s563, %s565
      %p572 = scmp.eq.s32.totalorder %s88, 7
      %p573 = por %p571, %p572
      %p574 = scmp.ne.s32.totalorder %s565, %s566
      %p575 = scmp.eq.s32.totalorder %s88, 0
      %p576 = por %p574, %p575
      %p577 = scmp.ne.s32.totalorder %s565, %s566
      %p578 = scmp.eq.s32.totalorder %s89, 7
      %p579 = por %p577, %p578
      %p581 = scmp.ne.s32.totalorder %s566, %s580
      %p582 = scmp.eq.s32.totalorder %s89, 0
      %p583 = por %p581, %p582
      %s585 = sadd.s32 %s584, 1
      %p588 = scmp.eq.s32.totalorder %s83, 7
      %p589 = scmp.ne.s32.totalorder %s584, %s586
      %p590 = scmp.eq.s32.totalorder %s83, 0
      %p591 = por %p589, %p590
      %p592 = scmp.ne.s32.totalorder %s584, %s586
      %p593 = scmp.eq.s32.totalorder %s88, 7
      %p594 = por %p592, %p593
      %p595 = scmp.ne.s32.totalorder %s586, %s587
      %p596 = scmp.eq.s32.totalorder %s88, 0
      %p597 = por %p595, %p596
      %p598 = scmp.ne.s32.totalorder %s586, %s587
      %p599 = scmp.eq.s32.totalorder %s89, 7
      %p600 = por %p598, %p599
      %p602 = scmp.ne.s32.totalorder %s587, %s601
      %p603 = scmp.eq.s32.totalorder %s89, 0
      %p604 = por %p602, %p603
      %s606 = sadd.s32 %s605, 1
      %p609 = scmp.eq.s32.totalorder %s83, 7
      %p610 = scmp.ne.s32.totalorder %s605, %s607
      %p611 = scmp.eq.s32.totalorder %s83, 0
      %p612 = por %p610, %p611
      %p613 = scmp.ne.s32.totalorder %s605, %s607
      %p614 = scmp.eq.s32.totalorder %s88, 7
      %p615 = por %p613, %p614
      %p616 = scmp.ne.s32.totalorder %s607, %s608
      %p617 = scmp.eq.s32.totalorder %s88, 0
      %p618 = por %p616, %p617
      %p619 = scmp.ne.s32.totalorder %s607, %s608
      %p620 = scmp.eq.s32.totalorder %s89, 7
      %p621 = por %p619, %p620
      %p623 = scmp.ne.s32.totalorder %s608, %s622
      %p624 = scmp.eq.s32.totalorder %s89, 0
      %p625 = por %p623, %p624
      %s627 = sadd.s32 %s626, 1
      %p630 = scmp.eq.s32.totalorder %s83, 7
      %p631 = scmp.ne.s32.totalorder %s626, %s628
      %p632 = scmp.eq.s32.totalorder %s83, 0
      %p633 = por %p631, %p632
      %p634 = scmp.ne.s32.totalorder %s626, %s628
      %p635 = scmp.eq.s32.totalorder %s88, 7
      %p636 = por %p634, %p635
      %p637 = scmp.ne.s32.totalorder %s628, %s629
      %p638 = scmp.eq.s32.totalorder %s88, 0
      %p639 = por %p637, %p638
      %p640 = scmp.ne.s32.totalorder %s628, %s629
      %p641 = scmp.eq.s32.totalorder %s89, 7
      %p642 = por %p640, %p641
      %p644 = scmp.ne.s32.totalorder %s629, %s643
      %p645 = scmp.eq.s32.totalorder %s89, 0
      %p646 = por %p644, %p645
      %s648 = sadd.s32 %s647, 1
      %p651 = scmp.eq.s32.totalorder %s83, 7
      %p652 = scmp.ne.s32.totalorder %s647, %s649
      %p653 = scmp.eq.s32.totalorder %s83, 0
      %p654 = por %p652, %p653
      %p655 = scmp.ne.s32.totalorder %s647, %s649
      %p656 = scmp.eq.s32.totalorder %s88, 7
      %p657 = por %p655, %p656
      %p658 = scmp.ne.s32.totalorder %s649, %s650
      %p659 = scmp.eq.s32.totalorder %s88, 0
      %p660 = por %p658, %p659
      %p661 = scmp.ne.s32.totalorder %s649, %s650
      %p662 = scmp.eq.s32.totalorder %s89, 7
      %p663 = por %p661, %p662
      %p665 = scmp.ne.s32.totalorder %s650, %s664
      %p666 = scmp.eq.s32.totalorder %s89, 0
      %p667 = por %p665, %p666
      %s669 = sadd.s32 %s668, 1
      %p672 = scmp.eq.s32.totalorder %s83, 7
      %p673 = scmp.ne.s32.totalorder %s668, %s670
      %p674 = scmp.eq.s32.totalorder %s83, 0
      %p675 = por %p673, %p674
      %p676 = scmp.ne.s32.totalorder %s668, %s670
      %p677 = scmp.eq.s32.totalorder %s88, 7
      %p678 = por %p676, %p677
      %p679 = scmp.ne.s32.totalorder %s670, %s671
      %p680 = scmp.eq.s32.totalorder %s88, 0
      %p681 = por %p679, %p680
      %p682 = scmp.ne.s32.totalorder %s670, %s671
      %p683 = scmp.eq.s32.totalorder %s89, 7
      %p684 = por %p682, %p683
      %p686 = scmp.ne.s32.totalorder %s671, %s685
      %p687 = scmp.eq.s32.totalorder %s89, 0
      %p688 = por %p686, %p687
      %s690 = sadd.s32 %s689, 1
      %p693 = scmp.eq.s32.totalorder %s83, 7
      %p694 = scmp.ne.s32.totalorder %s689, %s691
      %p695 = scmp.eq.s32.totalorder %s83, 0
      %p696 = por %p694, %p695
      %p697 = scmp.ne.s32.totalorder %s689, %s691
      %p698 = scmp.eq.s32.totalorder %s88, 7
      %p699 = por %p697, %p698
      %p700 = scmp.ne.s32.totalorder %s691, %s692
      %p701 = scmp.eq.s32.totalorder %s88, 0
      %p702 = por %p700, %p701
      %p703 = scmp.ne.s32.totalorder %s691, %s692
      %p704 = scmp.eq.s32.totalorder %s89, 7
      %p705 = por %p703, %p704
      %p707 = scmp.ne.s32.totalorder %s692, %s706
      %p708 = scmp.eq.s32.totalorder %s89, 0
      %p709 = por %p707, %p708
      %s711 = sadd.s32 %s710, 1
      %p714 = scmp.eq.s32.totalorder %s83, 7
      %p715 = scmp.ne.s32.totalorder %s710, %s712
      %p716 = scmp.eq.s32.totalorder %s83, 0
      %p717 = por %p715, %p716
      %p718 = scmp.ne.s32.totalorder %s710, %s712
      %p719 = scmp.eq.s32.totalorder %s88, 7
      %p720 = por %p718, %p719
      %p721 = scmp.ne.s32.totalorder %s712, %s713
      %p722 = scmp.eq.s32.totalorder %s88, 0
      %p723 = por %p721, %p722
      %p724 = scmp.ne.s32.totalorder %s712, %s713
      %p725 = scmp.eq.s32.totalorder %s89, 7
      %p726 = por %p724, %p725
      %p728 = scmp.ne.s32.totalorder %s713, %s727
      %p729 = scmp.eq.s32.totalorder %s89, 0
      %p730 = por %p728, %p729
      %s732 = sadd.s32 %s731, 1
      %p735 = scmp.eq.s32.totalorder %s83, 7
      %p736 = scmp.ne.s32.totalorder %s731, %s733
      %p737 = scmp.eq.s32.totalorder %s83, 0
      %p738 = por %p736, %p737
      %p739 = scmp.ne.s32.totalorder %s731, %s733
      %p740 = scmp.eq.s32.totalorder %s88, 7
      %p741 = por %p739, %p740
      %p742 = scmp.ne.s32.totalorder %s733, %s734
      %p743 = scmp.eq.s32.totalorder %s88, 0
      %p744 = por %p742, %p743
      %p745 = scmp.ne.s32.totalorder %s733, %s734
      %p746 = scmp.eq.s32.totalorder %s89, 7
      %p747 = por %p745, %p746
      %p749 = scmp.ne.s32.totalorder %s734, %s748
      %p750 = scmp.eq.s32.totalorder %s89, 0
      %p751 = por %p749, %p750
      %s753 = sadd.s32 %s752, 1
      %p756 = scmp.eq.s32.totalorder %s83, 7
      %p757 = scmp.ne.s32.totalorder %s752, %s754
      %p758 = scmp.eq.s32.totalorder %s83, 0
      %p759 = por %p757, %p758
      %p760 = scmp.ne.s32.totalorder %s752, %s754
      %p761 = scmp.eq.s32.totalorder %s88, 7
      %p762 = por %p760, %p761
      %p763 = scmp.ne.s32.totalorder %s754, %s755
      %p764 = scmp.eq.s32.totalorder %s88, 0
      %p765 = por %p763, %p764
      %p766 = scmp.ne.s32.totalorder %s754, %s755
      %p767 = scmp.eq.s32.totalorder %s89, 7
      %p768 = por %p766, %p767
      %p770 = scmp.ne.s32.totalorder %s755, %s769
      %p771 = scmp.eq.s32.totalorder %s89, 0
      %p772 = por %p770, %p771
      %s774 = sadd.s32 %s773, 1
      %p777 = scmp.eq.s32.totalorder %s83, 7
      %p778 = scmp.ne.s32.totalorder %s773, %s775
      %p779 = scmp.eq.s32.totalorder %s83, 0
      %p780 = por %p778, %p779
      %p781 = scmp.ne.s32.totalorder %s773, %s775
      %p782 = scmp.eq.s32.totalorder %s88, 7
      %p783 = por %p781, %p782
      %p784 = scmp.ne.s32.totalorder %s775, %s776
      %p785 = scmp.eq.s32.totalorder %s88, 0
      %p786 = por %p784, %p785
      %p787 = scmp.ne.s32.totalorder %s775, %s776
      %p788 = scmp.eq.s32.totalorder %s89, 7
      %p789 = por %p787, %p788
      %p791 = scmp.ne.s32.totalorder %s776, %s790
      %p792 = scmp.eq.s32.totalorder %s89, 0
      %p793 = por %p791, %p792
      %p794 = scmp.le.s32.totalorder 1, %s83
      %p795 = scmp.lt.s32.totalorder %s83, 9
      %p796 = pnand %p794, %p795
      %p797 = pneg %p796
      // Predicated region
      $region9: #{actor_forward.1} parent=5 // pred_check
        _
      $region10: #{actor_forward.1} parent=5 // pred_check_branch
        %799 = sbr.rel (%p796) target = $region12
      $region11: #{actor_forward.1} parent=5 // pred_region
        %s800 = ssub.s32 %s83, 1
        // Predicated region
        $region13: #{actor_forward.1} parent=11 // pred_check
          %p801 = pneg %p104
        $region14: #{actor_forward.1} parent=11 // pred_check_branch
          %803 = sbr.rel (%p801) target = $region16
        $region15: #{actor_forward.1} parent=11 // pred_region
          %s805 = ssub.s32 16, 16
          %806 = vsyncadd [#allocation7], %s805
          %s808 = sshll.u32 [#allocation6], 4
          %s809 = int_to_ptr.vmem [resolvable:$true] %s808
          %811 = dma.hbm_to_vmem [thread:$0]  %s1, 16, %s809, [#allocation7]
        $region16: #{actor_forward.1} parent=11 // pred_fallthru
          _
        // Predicated region
        $region17: #{actor_forward.1} parent=11 // pred_check
          %p812 = pneg %p125
        $region18: #{actor_forward.1} parent=11 // pred_check_branch
          %814 = sbr.rel (%p812) target = $region20
        $region19: #{actor_forward.1} parent=11 // pred_region
          _
        $region20: #{actor_forward.1} parent=11 // pred_fallthru
          _
        // Predicated region
        $region21: #{actor_forward.1} parent=11 // pred_check
          %p815 = pneg %p146
        $region22: #{actor_forward.1} parent=11 // pred_check_branch
          %817 = sbr.rel (%p815) target = $region24
        $region23: #{actor_forward.1} parent=11 // pred_region
          %s819 = ssub.s32 16, 16
          %820 = vsyncadd [#allocation10], %s819
          %s822 = sshll.u32 [#allocation9], 4
          %s823 = int_to_ptr.vmem [resolvable:$true] %s822
          %825 = dma.hbm_to_vmem [thread:$0]  %s5, 16, %s823, [#allocation10]
        $region24: #{actor_forward.1} parent=11 // pred_fallthru
          _
        // Predicated region
        $region25: #{actor_forward.1} parent=11 // pred_check
          %p826 = pneg %p167
        $region26: #{actor_forward.1} parent=11 // pred_check_branch
          %828 = sbr.rel (%p826) target = $region28
        $region27: #{actor_forward.1} parent=11 // pred_region
          %s830 = ssub.s32 128, 128
          %831 = vsyncadd [#allocation10], %s830
          %s832 = sshll.u32 [#allocation11], 4
          %s833 = int_to_ptr.vmem [resolvable:$true] %s832
          %838 = dma.hbm_to_vmem [thread:$0]  %s7, 128, %s833, [#allocation10], 64, 64, 4
        $region28: #{actor_forward.1} parent=11 // pred_fallthru
          _
        // Predicated region
        $region29: #{actor_forward.1} parent=11 // pred_check
          %p839 = pneg %p188
        $region30: #{actor_forward.1} parent=11 // pred_check_branch
          %841 = sbr.rel (%p839) target = $region32
        $region31: #{actor_forward.1} parent=11 // pred_region
          %s843 = ssub.s32 16, 16
          %844 = vsyncadd [#allocation13], %s843
          %s846 = sshll.u32 [#allocation12], 4
          %s847 = int_to_ptr.vmem [resolvable:$true] %s846
          %849 = dma.hbm_to_vmem [thread:$0]  %s9, 16, %s847, [#allocation13]
        $region32: #{actor_forward.1} parent=11 // pred_fallthru
          _
        // Predicated region
        $region33: #{actor_forward.1} parent=11 // pred_check
          %p850 = pneg %p209
        $region34: #{actor_forward.1} parent=11 // pred_check_branch
          %852 = sbr.rel (%p850) target = $region36
        $region35: #{actor_forward.1} parent=11 // pred_region
          %s854 = ssub.s32 2048, 2048
          %855 = vsyncadd [#allocation13], %s854
          %s856 = sshll.u32 [#allocation14], 4
          %s857 = int_to_ptr.vmem [resolvable:$true] %s856
          %862 = dma.hbm_to_vmem [thread:$0]  %s11, 2048, %s857, [#allocation13], 128, 128, 8
        $region36: #{actor_forward.1} parent=11 // pred_fallthru
          _
        // Predicated region
        $region37: #{actor_forward.1} parent=11 // pred_check
          %p863 = pneg %p230
        $region38: #{actor_forward.1} parent=11 // pred_check_branch
          %865 = sbr.rel (%p863) target = $region40
        $region39: #{actor_forward.1} parent=11 // pred_region
          %s867 = ssub.s32 32, 32
          %868 = vsyncadd [#allocation16], %s867
          %s870 = sshll.u32 [#allocation15], 4
          %s871 = int_to_ptr.vmem [resolvable:$true] %s870
          %873 = dma.hbm_to_vmem [thread:$0]  %s13, 32, %s871, [#allocation16]
        $region40: #{actor_forward.1} parent=11 // pred_fallthru
          _
        // Predicated region
        $region41: #{actor_forward.1} parent=11 // pred_check
          %p874 = pneg %p251
        $region42: #{actor_forward.1} parent=11 // pred_check_branch
          %876 = sbr.rel (%p874) target = $region44
        $region43: #{actor_forward.1} parent=11 // pred_region
          %s878 = ssub.s32 4096, 4096
          %879 = vsyncadd [#allocation16], %s878
          %s880 = sshll.u32 [#allocation17], 4
          %s881 = int_to_ptr.vmem [resolvable:$true] %s880
          %886 = dma.hbm_to_vmem [thread:$0]  %s15, 4096, %s881, [#allocation16], 128, 128, 8
        $region44: #{actor_forward.1} parent=11 // pred_fallthru
          _
        // Predicated region
        $region45: #{actor_forward.1} parent=11 // pred_check
          %p887 = pneg %p272
        $region46: #{actor_forward.1} parent=11 // pred_check_branch
          %889 = sbr.rel (%p887) target = $region48
        $region47: #{actor_forward.1} parent=11 // pred_region
          %s891 = ssub.s32 32, 32
          %892 = vsyncadd [#allocation19], %s891
          %s894 = sshll.u32 [#allocation18], 4
          %s895 = int_to_ptr.vmem [resolvable:$true] %s894
          %897 = dma.hbm_to_vmem [thread:$0]  %s17, 32, %s895, [#allocation19]
        $region48: #{actor_forward.1} parent=11 // pred_fallthru
          _
        // Predicated region
        $region49: #{actor_forward.1} parent=11 // pred_check
          %p898 = pneg %p293
        $region50: #{actor_forward.1} parent=11 // pred_check_branch
          %900 = sbr.rel (%p898) target = $region52
        $region51: #{actor_forward.1} parent=11 // pred_region
          %s902 = ssub.s32 64, 64
          %903 = vsyncadd [#allocation19], %s902
          %s905 = sshll.u32 [#allocation20], 4
          %s906 = int_to_ptr.vmem [resolvable:$true] %s905
          %908 = dma.hbm_to_vmem [thread:$0]  %s19, 64, %s906, [#allocation19]
        $region52: #{actor_forward.1} parent=11 // pred_fallthru
          _
        // Predicated region
        $region53: #{actor_forward.1} parent=11 // pred_check
          %p909 = pneg %p314
        $region54: #{actor_forward.1} parent=11 // pred_check_branch
          %911 = sbr.rel (%p909) target = $region56
        $region55: #{actor_forward.1} parent=11 // pred_region
          %s913 = ssub.s32 16, 16
          %914 = vsyncadd [#allocation22], %s913
          %s916 = sshll.u32 [#allocation21], 4
          %s917 = int_to_ptr.vmem [resolvable:$true] %s916
          %919 = dma.hbm_to_vmem [thread:$0]  %s21, 16, %s917, [#allocation22]
        $region56: #{actor_forward.1} parent=11 // pred_fallthru
          _
        // Predicated region
        $region57: #{actor_forward.1} parent=11 // pred_check
          %p920 = pneg %p335
        $region58: #{actor_forward.1} parent=11 // pred_check_branch
          %922 = sbr.rel (%p920) target = $region60
        $region59: #{actor_forward.1} parent=11 // pred_region
          %s924 = ssub.s32 512, 512
          %925 = vsyncadd [#allocation22], %s924
          %s926 = sshll.u32 [#allocation23], 4
          %s927 = int_to_ptr.vmem [resolvable:$true] %s926
          %932 = dma.hbm_to_vmem [thread:$0]  %s23, 512, %s927, [#allocation22], 64, 64, 4
        $region60: #{actor_forward.1} parent=11 // pred_fallthru
          _
        // Predicated region
        $region61: #{actor_forward.1} parent=11 // pred_check
          %p933 = pneg %p356
        $region62: #{actor_forward.1} parent=11 // pred_check_branch
          %935 = sbr.rel (%p933) target = $region64
        $region63: #{actor_forward.1} parent=11 // pred_region
          %s937 = ssub.s32 16, 16
          %938 = vsyncadd [#allocation25], %s937
          %s940 = sshll.u32 [#allocation24], 4
          %s941 = int_to_ptr.vmem [resolvable:$true] %s940
          %943 = dma.hbm_to_vmem [thread:$0]  %s25, 16, %s941, [#allocation25]
        $region64: #{actor_forward.1} parent=11 // pred_fallthru
          _
        // Predicated region
        $region65: #{actor_forward.1} parent=11 // pred_check
          %p944 = pneg %p377
        $region66: #{actor_forward.1} parent=11 // pred_check_branch
          %946 = sbr.rel (%p944) target = $region68
        $region67: #{actor_forward.1} parent=11 // pred_region
          %s948 = ssub.s32 1024, 1024
          %949 = vsyncadd [#allocation25], %s948
          %s950 = sshll.u32 [#allocation26], 4
          %s951 = int_to_ptr.vmem [resolvable:$true] %s950
          %956 = dma.hbm_to_vmem [thread:$0]  %s27, 1024, %s951, [#allocation25], 128, 128, 8
        $region68: #{actor_forward.1} parent=11 // pred_fallthru
          _
        // Predicated region
        $region69: #{actor_forward.1} parent=11 // pred_check
          %p957 = pneg %p398
        $region70: #{actor_forward.1} parent=11 // pred_check_branch
          %959 = sbr.rel (%p957) target = $region72
        $region71: #{actor_forward.1} parent=11 // pred_region
          %s961 = ssub.s32 32, 32
          %962 = vsyncadd [#allocation28], %s961
          %s964 = sshll.u32 [#allocation27], 4
          %s965 = int_to_ptr.vmem [resolvable:$true] %s964
          %967 = dma.hbm_to_vmem [thread:$0]  %s29, 32, %s965, [#allocation28]
        $region72: #{actor_forward.1} parent=11 // pred_fallthru
          _
        // Predicated region
        $region73: #{actor_forward.1} parent=11 // pred_check
          %p968 = pneg %p471
        $region74: #{actor_forward.1} parent=11 // pred_check_branch
          %970 = sbr.rel (%p968) target = $region76
        $region75: #{actor_forward.1} parent=11 // pred_region
          %s972 = ssub.s32 512, 512
          %973 = vsyncadd [#allocation10], %s972
          %s974 = sshll.u32 [#allocation31], 4
          %s975 = int_to_ptr.vmem [resolvable:$true] %s974
          %980 = dma.hbm_to_vmem [thread:$0]  %s35, 512, %s975, [#allocation10], 64, 64, 4
        $region76: #{actor_forward.1} parent=11 // pred_fallthru
          _
        // Predicated region
        $region77: #{actor_forward.1} parent=11 // pred_check
          %p981 = pneg %p492
        $region78: #{actor_forward.1} parent=11 // pred_check_branch
          %983 = sbr.rel (%p981) target = $region80
        $region79: #{actor_forward.1} parent=11 // pred_region
          %s985 = ssub.s32 16, 16
          %986 = vsyncadd [#allocation13], %s985
          %s988 = sshll.u32 [#allocation32], 4
          %s989 = int_to_ptr.vmem [resolvable:$true] %s988
          %991 = dma.hbm_to_vmem [thread:$0]  %s37, 16, %s989, [#allocation13]
        $region80: #{actor_forward.1} parent=11 // pred_fallthru
          _
        // Predicated region
        $region81: #{actor_forward.1} parent=11 // pred_check
          %p992 = pneg %p513
        $region82: #{actor_forward.1} parent=11 // pred_check_branch
          %994 = sbr.rel (%p992) target = $region84
        $region83: #{actor_forward.1} parent=11 // pred_region
          %s996 = ssub.s32 4096, 4096
          %997 = vsyncadd [#allocation16], %s996
          %s998 = sshll.u32 [#allocation33], 4
          %s999 = int_to_ptr.vmem [resolvable:$true] %s998
          %1004 = dma.hbm_to_vmem [thread:$0]  %s39, 4096, %s999, [#allocation16], 256, 256, 16
        $region84: #{actor_forward.1} parent=11 // pred_fallthru
          _
        // Predicated region
        $region85: #{actor_forward.1} parent=11 // pred_check
          %p1005 = pneg %p534
        $region86: #{actor_forward.1} parent=11 // pred_check_branch
          %1007 = sbr.rel (%p1005) target = $region88
        $region87: #{actor_forward.1} parent=11 // pred_region
          %s1009 = ssub.s32 64, 64
          %1010 = vsyncadd [#allocation19], %s1009
          %s1012 = sshll.u32 [#allocation34], 4
          %s1013 = int_to_ptr.vmem [resolvable:$true] %s1012
          %1015 = dma.hbm_to_vmem [thread:$0]  %s41, 64, %s1013, [#allocation19]
        $region88: #{actor_forward.1} parent=11 // pred_fallthru
          _
        // Predicated region
        $region89: #{actor_forward.1} parent=11 // pred_check
          %p1016 = pneg %p555
        $region90: #{actor_forward.1} parent=11 // pred_check_branch
          %1018 = sbr.rel (%p1016) target = $region92
        $region91: #{actor_forward.1} parent=11 // pred_region
          %s1020 = ssub.s32 8192, 8192
          %1021 = vsyncadd [#allocation22], %s1020
          %s1022 = sshll.u32 [#allocation35], 4
          %s1023 = int_to_ptr.vmem [resolvable:$true] %s1022
          %1028 = dma.hbm_to_vmem [thread:$0]  %s43, 8192, %s1023, [#allocation22], 128, 128, 8
        $region92: #{actor_forward.1} parent=11 // pred_fallthru
          _
        // Predicated region
        $region93: #{actor_forward.1} parent=11 // pred_check
          %p1029 = pneg %p576
        $region94: #{actor_forward.1} parent=11 // pred_check_branch
          %1031 = sbr.rel (%p1029) target = $region96
        $region95: #{actor_forward.1} parent=11 // pred_region
          %s1033 = ssub.s32 32, 32
          %1034 = vsyncadd [#allocation25], %s1033
          %s1036 = sshll.u32 [#allocation36], 4
          %s1037 = int_to_ptr.vmem [resolvable:$true] %s1036
          %1039 = dma.hbm_to_vmem [thread:$0]  %s45, 32, %s1037, [#allocation25]
        $region96: #{actor_forward.1} parent=11 // pred_fallthru
          _
        // Predicated region
        $region97: #{actor_forward.1} parent=11 // pred_check
          %p1040 = pneg %p597
        $region98: #{actor_forward.1} parent=11 // pred_check_branch
          %1042 = sbr.rel (%p1040) target = $region100
        $region99: #{actor_forward.1} parent=11 // pred_region
          %s1044 = ssub.s32 4096, 4096
          %1045 = vsyncadd [#allocation28], %s1044
          %s1046 = sshll.u32 [#allocation37], 4
          %s1047 = int_to_ptr.vmem [resolvable:$true] %s1046
          %1052 = dma.hbm_to_vmem [thread:$0]  %s47, 4096, %s1047, [#allocation28], 128, 128, 8
        $region100: #{actor_forward.1} parent=11 // pred_fallthru
          _
        // Predicated region
        $region101: #{actor_forward.1} parent=11 // pred_check
          %p1053 = pneg %p618
        $region102: #{actor_forward.1} parent=11 // pred_check_branch
          %1055 = sbr.rel (%p1053) target = $region104
        $region103: #{actor_forward.1} parent=11 // pred_region
          %s1057 = ssub.s32 32, 32
          %1058 = vsyncadd [#allocation39], %s1057
          %s1060 = sshll.u32 [#allocation38], 4
          %s1061 = int_to_ptr.vmem [resolvable:$true] %s1060
          %1063 = dma.hbm_to_vmem [thread:$0]  %s49, 32, %s1061, [#allocation39]
        $region104: #{actor_forward.1} parent=11 // pred_fallthru
          _
        // Predicated region
        $region105: #{actor_forward.1} parent=11 // pred_check
          %p1064 = pneg %p639
        $region106: #{actor_forward.1} parent=11 // pred_check_branch
          %1066 = sbr.rel (%p1064) target = $region108
        $region107: #{actor_forward.1} parent=11 // pred_region
          %s1068 = ssub.s32 4096, 4096
          %1069 = vsyncadd [#allocation39], %s1068
          %s1070 = sshll.u32 [#allocation40], 4
          %s1071 = int_to_ptr.vmem [resolvable:$true] %s1070
          %1076 = dma.hbm_to_vmem [thread:$0]  %s51, 4096, %s1071, [#allocation39], 128, 128, 8
        $region108: #{actor_forward.1} parent=11 // pred_fallthru
          _
        // Predicated region
        $region109: #{actor_forward.1} parent=11 // pred_check
          %p1077 = pneg %p660
        $region110: #{actor_forward.1} parent=11 // pred_check_branch
          %1079 = sbr.rel (%p1077) target = $region112
        $region111: #{actor_forward.1} parent=11 // pred_region
          %s1081 = ssub.s32 4096, 4096
          %1082 = vsyncadd [#allocation42], %s1081
          %s1083 = sshll.u32 [#allocation41], 4
          %s1084 = int_to_ptr.vmem [resolvable:$true] %s1083
          %1089 = dma.hbm_to_vmem [thread:$0]  %s53, 4096, %s1084, [#allocation42], 128, 128, 8
        $region112: #{actor_forward.1} parent=11 // pred_fallthru
          _
        // Predicated region
        $region113: #{actor_forward.1} parent=11 // pred_check
          %p1090 = pneg %p681
        $region114: #{actor_forward.1} parent=11 // pred_check_branch
          %1092 = sbr.rel (%p1090) target = $region116
        $region115: #{actor_forward.1} parent=11 // pred_region
          %s1094 = ssub.s32 32, 32
          %1095 = vsyncadd [#allocation42], %s1094
          %s1097 = sshll.u32 [#allocation43], 4
          %s1098 = int_to_ptr.vmem [resolvable:$true] %s1097
          %1100 = dma.hbm_to_vmem [thread:$0]  %s55, 32, %s1098, [#allocation42]
        $region116: #{actor_forward.1} parent=11 // pred_fallthru
          _
        // Predicated region
        $region117: #{actor_forward.1} parent=11 // pred_check
          %p1101 = pneg %p702
        $region118: #{actor_forward.1} parent=11 // pred_check_branch
          %1103 = sbr.rel (%p1101) target = $region120
        $region119: #{actor_forward.1} parent=11 // pred_region
          _
        $region120: #{actor_forward.1} parent=11 // pred_fallthru
          _
        // Predicated region
        $region121: #{actor_forward.1} parent=11 // pred_check
          %p1104 = pneg %p723
        $region122: #{actor_forward.1} parent=11 // pred_check_branch
          %1106 = sbr.rel (%p1104) target = $region124
        $region123: #{actor_forward.1} parent=11 // pred_region
          %s1108 = ssub.s32 16, 16
          %1109 = vsyncadd [#allocation45], %s1108
          %s1111 = sshll.u32 [#allocation44], 4
          %s1112 = int_to_ptr.vmem [resolvable:$true] %s1111
          %1114 = dma.hbm_to_vmem [thread:$0]  %s59, 16, %s1112, [#allocation45]
        $region124: #{actor_forward.1} parent=11 // pred_fallthru
          _
        // Predicated region
        $region125: #{actor_forward.1} parent=11 // pred_check
          %p1115 = pneg %p744
        $region126: #{actor_forward.1} parent=11 // pred_check_branch
          %1117 = sbr.rel (%p1115) target = $region128
        $region127: #{actor_forward.1} parent=11 // pred_region
          _
        $region128: #{actor_forward.1} parent=11 // pred_fallthru
          _
        // Predicated region
        $region129: #{actor_forward.1} parent=11 // pred_check
          %p1118 = pneg %p765
        $region130: #{actor_forward.1} parent=11 // pred_check_branch
          %1120 = sbr.rel (%p1118) target = $region132
        $region131: #{actor_forward.1} parent=11 // pred_region
          %s1122 = ssub.s32 16, 16
          %1123 = vsyncadd [#allocation45], %s1122
          %s1125 = sshll.u32 [#allocation46], 4
          %s1126 = int_to_ptr.vmem [resolvable:$true] %s1125
          %1128 = dma.hbm_to_vmem [thread:$0]  %s63, 16, %s1126, [#allocation45]
        $region132: #{actor_forward.1} parent=11 // pred_fallthru
          _
      $region12: #{actor_forward.1} parent=5 // pred_fallthru
        _
      %p1129 = scmp.lt.s32.totalorder %s83, 8
      // Predicated region
      $region133: #{actor_forward.1} parent=5 // pred_check
        %p1130 = pneg %p1129
      $region134: #{actor_forward.1} parent=5 // pred_check_branch
        %1132 = sbr.rel (%p1130) target = $region136
      $region135: #{actor_forward.1} parent=5 // pred_region
        // Predicated region
        $region137: #{actor_forward.1} parent=135 // pred_check
          %p1133 = pneg %p418
        $region138: #{actor_forward.1} parent=135 // pred_check_branch
          %1135 = sbr.rel (%p1133) target = $region140
        $region139: #{actor_forward.1} parent=135 // pred_region
          %s1136 = sand.u32 %s83, 1
          %s1137 = scalar_lea.sflag [#allocation7], %s1136
          %s1138 = sand.u32 %s408, 1
          %s1139 = smul.addr %s1138, 512
          %s1140 = scalar_lea.vmem [#allocation29], %s1139
          %s1141 = smul.u32 4, %s83
          %s1143 = ssub.s32 8192, 8192
          %1144 = vsyncadd %s1137, %s1143
          %s1145 = smul.addr %s1141, 64
          %s1146 = scalar_lea.hbm %s31, %s1145
          %s1147 = sshll.u32 %s1140, 4
          %s1148 = int_to_ptr.vmem [resolvable:$true] %s1147
          %1153 = dma.hbm_to_vmem [thread:$0]  %s1146, 8192, %s1148, %s1137, 2048, 256, 16
        $region140: #{actor_forward.1} parent=135 // pred_fallthru
          _
        // Predicated region
        $region141: #{actor_forward.1} parent=135 // pred_check
          %p1154 = pneg %p444
        $region142: #{actor_forward.1} parent=135 // pred_check_branch
          %1156 = sbr.rel (%p1154) target = $region144
        $region143: #{actor_forward.1} parent=135 // pred_region
          %s1157 = sand.u32 %s83, 1
          %s1158 = scalar_lea.sflag [#allocation7], %s1157
          %s1159 = sand.u32 %s434, 1
          %s1160 = smul.addr %s1159, 4
          %s1161 = scalar_lea.vmem [#allocation30], %s1160
          %s1162 = smul.u32 4, %s83
          %s1164 = ssub.s32 64, 64
          %1165 = vsyncadd %s1158, %s1164
          %s1166 = smul.addr %s1162, 16
          %s1167 = scalar_lea.hbm %s33, %s1166
          %s1169 = sshll.u32 %s1161, 4
          %s1170 = int_to_ptr.vmem [resolvable:$true] %s1169
          %1172 = dma.hbm_to_vmem [thread:$0]  %s1167, 64, %s1170, %s1158
        $region144: #{actor_forward.1} parent=135 // pred_fallthru
          _
      $region136: #{actor_forward.1} parent=5 // pred_fallthru
        _
      %p1173 = scmp.le.s32.totalorder 1, %s83
      %p1174 = scmp.lt.s32.totalorder %s83, 9
      %p1175 = pnand %p1173, %p1174
      %p1176 = pneg %p1175
      // Predicated region
      $region145: #{actor_forward.1} parent=5 // pred_check
        _
      $region146: #{actor_forward.1} parent=5 // pred_check_branch
        %1178 = sbr.rel (%p1175) target = $region148
      $region147: #{actor_forward.1} parent=5 // pred_region
        %s1179 = ssub.s32 %s83, 1
        // Predicated region
        $region149: #{actor_forward.1} parent=147 // pred_check
          %p1180 = pneg %p104
        $region150: #{actor_forward.1} parent=147 // pred_check_branch
          %1182 = sbr.rel (%p1180) target = $region152
        $region151: #{actor_forward.1} parent=147 // pred_region
          %1183 = dma.done [#allocation7], 16
        $region152: #{actor_forward.1} parent=147 // pred_fallthru
          _
        // Predicated region
        $region153: #{actor_forward.1} parent=147 // pred_check
          %p1184 = pneg %p146
        $region154: #{actor_forward.1} parent=147 // pred_check_branch
          %1186 = sbr.rel (%p1184) target = $region156
        $region155: #{actor_forward.1} parent=147 // pred_region
          %1187 = dma.done [#allocation10], 16
        $region156: #{actor_forward.1} parent=147 // pred_fallthru
          _
        // Predicated region
        $region157: #{actor_forward.1} parent=147 // pred_check
          %p1188 = pneg %p167
        $region158: #{actor_forward.1} parent=147 // pred_check_branch
          %1190 = sbr.rel (%p1188) target = $region160
        $region159: #{actor_forward.1} parent=147 // pred_region
          %1191 = dma.done [#allocation10], 128
        $region160: #{actor_forward.1} parent=147 // pred_fallthru
          _
        // Predicated region
        $region161: #{actor_forward.1} parent=147 // pred_check
          %p1192 = pneg %p188
        $region162: #{actor_forward.1} parent=147 // pred_check_branch
          %1194 = sbr.rel (%p1192) target = $region164
        $region163: #{actor_forward.1} parent=147 // pred_region
          %1195 = dma.done [#allocation13], 16
        $region164: #{actor_forward.1} parent=147 // pred_fallthru
          _
        // Predicated region
        $region165: #{actor_forward.1} parent=147 // pred_check
          %p1196 = pneg %p209
        $region166: #{actor_forward.1} parent=147 // pred_check_branch
          %1198 = sbr.rel (%p1196) target = $region168
        $region167: #{actor_forward.1} parent=147 // pred_region
          %1199 = dma.done [#allocation13], 2048
        $region168: #{actor_forward.1} parent=147 // pred_fallthru
          _
        // Predicated region
        $region169: #{actor_forward.1} parent=147 // pred_check
          %p1200 = pneg %p230
        $region170: #{actor_forward.1} parent=147 // pred_check_branch
          %1202 = sbr.rel (%p1200) target = $region172
        $region171: #{actor_forward.1} parent=147 // pred_region
          %1203 = dma.done [#allocation16], 32
        $region172: #{actor_forward.1} parent=147 // pred_fallthru
          _
        // Predicated region
        $region173: #{actor_forward.1} parent=147 // pred_check
          %p1204 = pneg %p251
        $region174: #{actor_forward.1} parent=147 // pred_check_branch
          %1206 = sbr.rel (%p1204) target = $region176
        $region175: #{actor_forward.1} parent=147 // pred_region
          %1207 = dma.done [#allocation16], 4096
        $region176: #{actor_forward.1} parent=147 // pred_fallthru
          _
        // Predicated region
        $region177: #{actor_forward.1} parent=147 // pred_check
          %p1208 = pneg %p272
        $region178: #{actor_forward.1} parent=147 // pred_check_branch
          %1210 = sbr.rel (%p1208) target = $region180
        $region179: #{actor_forward.1} parent=147 // pred_region
          %1211 = dma.done [#allocation19], 32
        $region180: #{actor_forward.1} parent=147 // pred_fallthru
          _
        // Predicated region
        $region181: #{actor_forward.1} parent=147 // pred_check
          %p1212 = pneg %p293
        $region182: #{actor_forward.1} parent=147 // pred_check_branch
          %1214 = sbr.rel (%p1212) target = $region184
        $region183: #{actor_forward.1} parent=147 // pred_region
          %1215 = dma.done [#allocation19], 64
        $region184: #{actor_forward.1} parent=147 // pred_fallthru
          _
        // Predicated region
        $region185: #{actor_forward.1} parent=147 // pred_check
          %p1216 = pneg %p314
        $region186: #{actor_forward.1} parent=147 // pred_check_branch
          %1218 = sbr.rel (%p1216) target = $region188
        $region187: #{actor_forward.1} parent=147 // pred_region
          %1219 = dma.done [#allocation22], 16
        $region188: #{actor_forward.1} parent=147 // pred_fallthru
          _
        // Predicated region
        $region189: #{actor_forward.1} parent=147 // pred_check
          %p1220 = pneg %p335
        $region190: #{actor_forward.1} parent=147 // pred_check_branch
          %1222 = sbr.rel (%p1220) target = $region192
        $region191: #{actor_forward.1} parent=147 // pred_region
          %1223 = dma.done [#allocation22], 512
        $region192: #{actor_forward.1} parent=147 // pred_fallthru
          _
        // Predicated region
        $region193: #{actor_forward.1} parent=147 // pred_check
          %p1224 = pneg %p356
        $region194: #{actor_forward.1} parent=147 // pred_check_branch
          %1226 = sbr.rel (%p1224) target = $region196
        $region195: #{actor_forward.1} parent=147 // pred_region
          %1227 = dma.done [#allocation25], 16
        $region196: #{actor_forward.1} parent=147 // pred_fallthru
          _
        // Predicated region
        $region197: #{actor_forward.1} parent=147 // pred_check
          %p1228 = pneg %p377
        $region198: #{actor_forward.1} parent=147 // pred_check_branch
          %1230 = sbr.rel (%p1228) target = $region200
        $region199: #{actor_forward.1} parent=147 // pred_region
          %1231 = dma.done [#allocation25], 1024
        $region200: #{actor_forward.1} parent=147 // pred_fallthru
          _
        // Predicated region
        $region201: #{actor_forward.1} parent=147 // pred_check
          %p1232 = pneg %p398
        $region202: #{actor_forward.1} parent=147 // pred_check_branch
          %1234 = sbr.rel (%p1232) target = $region204
        $region203: #{actor_forward.1} parent=147 // pred_region
          %1235 = dma.done [#allocation28], 32
        $region204: #{actor_forward.1} parent=147 // pred_fallthru
          _
        %s1236 = sand.u32 %s88, 1
        %s1237 = scalar_lea.sflag [#allocation7], %s1236
        %s1238 = sand.u32 %s411, 1
        %s1239 = smul.addr %s1238, 512
        %s1240 = scalar_lea.vmem [#allocation29], %s1239
        // Predicated region
        $region205: #{actor_forward.1} parent=147 // pred_check
          %p1241 = pneg %p424
        $region206: #{actor_forward.1} parent=147 // pred_check_branch
          %1243 = sbr.rel (%p1241) target = $region208
        $region207: #{actor_forward.1} parent=147 // pred_region
          %1244 = dma.done %s1237, 8192
        $region208: #{actor_forward.1} parent=147 // pred_fallthru
          _
        %s1245 = sand.u32 %s88, 1
        %s1246 = scalar_lea.sflag [#allocation7], %s1245
        %s1247 = sand.u32 %s437, 1
        %s1248 = smul.addr %s1247, 4
        %s1249 = scalar_lea.vmem [#allocation30], %s1248
        // Predicated region
        $region209: #{actor_forward.1} parent=147 // pred_check
          %p1250 = pneg %p450
        $region210: #{actor_forward.1} parent=147 // pred_check_branch
          %1252 = sbr.rel (%p1250) target = $region212
        $region211: #{actor_forward.1} parent=147 // pred_region
          %1253 = dma.done %s1246, 64
        $region212: #{actor_forward.1} parent=147 // pred_fallthru
          _
        // Predicated region
        $region213: #{actor_forward.1} parent=147 // pred_check
          %p1254 = pneg %p471
        $region214: #{actor_forward.1} parent=147 // pred_check_branch
          %1256 = sbr.rel (%p1254) target = $region216
        $region215: #{actor_forward.1} parent=147 // pred_region
          %1257 = dma.done [#allocation10], 512
        $region216: #{actor_forward.1} parent=147 // pred_fallthru
          _
        // Predicated region
        $region217: #{actor_forward.1} parent=147 // pred_check
          %p1258 = pneg %p492
        $region218: #{actor_forward.1} parent=147 // pred_check_branch
          %1260 = sbr.rel (%p1258) target = $region220
        $region219: #{actor_forward.1} parent=147 // pred_region
          %1261 = dma.done [#allocation13], 16
        $region220: #{actor_forward.1} parent=147 // pred_fallthru
          _
        // Predicated region
        $region221: #{actor_forward.1} parent=147 // pred_check
          %p1262 = pneg %p513
        $region222: #{actor_forward.1} parent=147 // pred_check_branch
          %1264 = sbr.rel (%p1262) target = $region224
        $region223: #{actor_forward.1} parent=147 // pred_region
          %1265 = dma.done [#allocation16], 4096
        $region224: #{actor_forward.1} parent=147 // pred_fallthru
          _
        // Predicated region
        $region225: #{actor_forward.1} parent=147 // pred_check
          %p1266 = pneg %p534
        $region226: #{actor_forward.1} parent=147 // pred_check_branch
          %1268 = sbr.rel (%p1266) target = $region228
        $region227: #{actor_forward.1} parent=147 // pred_region
          %1269 = dma.done [#allocation19], 64
        $region228: #{actor_forward.1} parent=147 // pred_fallthru
          _
        // Predicated region
        $region229: #{actor_forward.1} parent=147 // pred_check
          %p1270 = pneg %p555
        $region230: #{actor_forward.1} parent=147 // pred_check_branch
          %1272 = sbr.rel (%p1270) target = $region232
        $region231: #{actor_forward.1} parent=147 // pred_region
          %1273 = dma.done [#allocation22], 8192
        $region232: #{actor_forward.1} parent=147 // pred_fallthru
          _
        // Predicated region
        $region233: #{actor_forward.1} parent=147 // pred_check
          %p1274 = pneg %p576
        $region234: #{actor_forward.1} parent=147 // pred_check_branch
          %1276 = sbr.rel (%p1274) target = $region236
        $region235: #{actor_forward.1} parent=147 // pred_region
          %1277 = dma.done [#allocation25], 32
        $region236: #{actor_forward.1} parent=147 // pred_fallthru
          _
        // Predicated region
        $region237: #{actor_forward.1} parent=147 // pred_check
          %p1278 = pneg %p597
        $region238: #{actor_forward.1} parent=147 // pred_check_branch
          %1280 = sbr.rel (%p1278) target = $region240
        $region239: #{actor_forward.1} parent=147 // pred_region
          %1281 = dma.done [#allocation28], 4096
        $region240: #{actor_forward.1} parent=147 // pred_fallthru
          _
        // Predicated region
        $region241: #{actor_forward.1} parent=147 // pred_check
          %p1282 = pneg %p618
        $region242: #{actor_forward.1} parent=147 // pred_check_branch
          %1284 = sbr.rel (%p1282) target = $region244
        $region243: #{actor_forward.1} parent=147 // pred_region
          %1285 = dma.done [#allocation39], 32
        $region244: #{actor_forward.1} parent=147 // pred_fallthru
          _
        // Predicated region
        $region245: #{actor_forward.1} parent=147 // pred_check
          %p1286 = pneg %p639
        $region246: #{actor_forward.1} parent=147 // pred_check_branch
          %1288 = sbr.rel (%p1286) target = $region248
        $region247: #{actor_forward.1} parent=147 // pred_region
          %1289 = dma.done [#allocation39], 4096
        $region248: #{actor_forward.1} parent=147 // pred_fallthru
          _
        // Predicated region
        $region249: #{actor_forward.1} parent=147 // pred_check
          %p1290 = pneg %p660
        $region250: #{actor_forward.1} parent=147 // pred_check_branch
          %1292 = sbr.rel (%p1290) target = $region252
        $region251: #{actor_forward.1} parent=147 // pred_region
          %1293 = dma.done [#allocation42], 4096
        $region252: #{actor_forward.1} parent=147 // pred_fallthru
          _
        // Predicated region
        $region253: #{actor_forward.1} parent=147 // pred_check
          %p1294 = pneg %p681
        $region254: #{actor_forward.1} parent=147 // pred_check_branch
          %1296 = sbr.rel (%p1294) target = $region256
        $region255: #{actor_forward.1} parent=147 // pred_region
          %1297 = dma.done [#allocation42], 32
        $region256: #{actor_forward.1} parent=147 // pred_fallthru
          _
        // Predicated region
        $region257: #{actor_forward.1} parent=147 // pred_check
          %p1298 = pneg %p723
        $region258: #{actor_forward.1} parent=147 // pred_check_branch
          %1300 = sbr.rel (%p1298) target = $region260
        $region259: #{actor_forward.1} parent=147 // pred_region
          %1301 = dma.done [#allocation45], 16
        $region260: #{actor_forward.1} parent=147 // pred_fallthru
          _
        // Predicated region
        $region261: #{actor_forward.1} parent=147 // pred_check
          %p1302 = pneg %p765
        $region262: #{actor_forward.1} parent=147 // pred_check_branch
          %1304 = sbr.rel (%p1302) target = $region264
        $region263: #{actor_forward.1} parent=147 // pred_region
          %1305 = dma.done [#allocation45], 16
        $region264: #{actor_forward.1} parent=147 // pred_fallthru
          _
        %p1306 = pneg %p104
        %p1307 = pneg %p101
        %p1308 = pneg %p125
        %p1309 = pneg %p122
        %p1310 = pneg %p146
        %p1311 = pneg %p143
        %p1312 = pneg %p167
        %p1313 = pneg %p164
        %p1314 = pneg %p188
        %p1315 = pneg %p185
        %p1316 = pneg %p209
        %p1317 = pneg %p206
        %p1318 = pneg %p230
        %p1319 = pneg %p227
        %p1320 = pneg %p251
        %p1321 = pneg %p248
        %p1322 = pneg %p272
        %p1323 = pneg %p269
        %p1324 = pneg %p293
        %p1325 = pneg %p290
        %p1326 = pneg %p314
        %p1327 = pneg %p311
        %p1328 = pneg %p335
        %p1329 = pneg %p332
        %p1330 = pneg %p356
        %p1331 = pneg %p353
        %p1332 = pneg %p377
        %p1333 = pneg %p374
        %p1334 = pneg %p398
        %p1335 = pneg %p395
        %s1336 = sand.u32 %s88, 1
        %s1337 = scalar_lea.sflag [#allocation7], %s1336
        %s1338 = sand.u32 %s411, 1
        %s1339 = smul.addr %s1338, 512
        %s1340 = scalar_lea.vmem [#allocation29], %s1339
        %p1341 = pneg %p424
        %p1342 = pneg %p421
        %s1343 = sand.u32 %s88, 1
        %s1344 = scalar_lea.sflag [#allocation7], %s1343
        %s1345 = sand.u32 %s437, 1
        %s1346 = smul.addr %s1345, 4
        %s1347 = scalar_lea.vmem [#allocation30], %s1346
        %p1348 = pneg %p450
        %p1349 = pneg %p447
        %p1350 = pneg %p471
        %p1351 = pneg %p468
        %p1352 = pneg %p492
        %p1353 = pneg %p489
        %p1354 = pneg %p513
        %p1355 = pneg %p510
        %p1356 = pneg %p534
        %p1357 = pneg %p531
        %p1358 = pneg %p555
        %p1359 = pneg %p552
        %p1360 = pneg %p576
        %p1361 = pneg %p573
        %p1362 = pneg %p597
        %p1363 = pneg %p594
        %p1364 = pneg %p618
        %p1365 = pneg %p615
        %p1366 = pneg %p639
        %p1367 = pneg %p636
        %p1368 = pneg %p660
        %p1369 = pneg %p657
        %p1370 = pneg %p681
        %p1371 = pneg %p678
        %p1372 = pneg %p702
        %p1373 = pneg %p699
        %p1374 = pneg %p723
        %p1375 = pneg %p720
        %p1376 = pneg %p744
        %p1377 = pneg %p741
        %p1378 = pneg %p765
        %p1379 = pneg %p762
        %p1380 = pneg %p786
        %p1381 = pneg %p783
        %s1382 = smul.u32 4, %s88
        %s1383 = smul.u32 4, %s88
        %p1385 = scmp.eq.s32.totalorder %s88, 0
        // Predicated region
        $region265: #{actor_forward.1} parent=147 // pred_check
          %p1386 = pneg %p1385
        $region266: #{actor_forward.1} parent=147 // pred_check_branch
          %1388 = sbr.rel (%p1386) target = $region268
        $region267: #{actor_forward.1} parent=147 // pred_region
          %v1389 = vld [vmem:[#allocation6] sm:$0x1]
          %v1390 = vpack.c.bf16 %v1389, %v1389
          %v1391 = vld [vmem:[#allocation11] sm:$0xf]
          %v1392 = vld [vmem:[#allocation11 + $0x4] sm:$0x3]
          %v1393 = vld [vmem:[#allocation12] sm:$0x1]
          %v1396 = vunpack.c.l.b16 %v1391
          %v1397 = vunpack.c.l.b16 %v1392
          %v1398 = vpack.c.b16 %v1397, %v1396
          %vm1399 = vcmask 89088
          %v1401 = vsel %vm1399, %v1390, 0
          %vm1403 = vcmask 1044480
          %vm1404 = vcmask 1045504
          %v1405 = vsel %vm1403, 4294967295, 65535
          %v1406 = vsel %vm1404, %v1405, 0
          %v1408 = vand.u32 %v1398, %v1406
          %1410 = vmatprep.subr.bf16.mxu0 0
          %1411 = vmatpush1.bf16.msra.mxu0 0
          %1412 = vmatprep.subr.bf16.mxu0 0
          %1413 = vmatpush1.bf16.msra.mxu0 0
          %1414 = vmatprep.subr.bf16.mxu0 0
          %1415 = vmatpush1.bf16.msra.mxu0 0
          %1416 = vmatprep.subr.bf16.mxu0 0
          %1417 = vmatpush1.bf16.msra.mxu0 0
          %1418 = vmatprep.subr.bf16.mxu0 0
          %1419 = vmatpush1.bf16.msra.mxu0 0
          %1420 = vmatprep.subr.bf16.mxu0 0
          %1421 = vmatpush1.bf16.msra.mxu0 0
          %1422 = vmatprep.subr.bf16.mxu0 0
          %1423 = vmatpush1.bf16.msra.mxu0 0
          %1424 = vmatprep.subr.bf16.mxu0 0
          %1425 = vmatpush1.bf16.msra.mxu0 %v1408
          %1426 = vmatprep.subr.bf16.mxu0 0
          %1427 = vmatpush2.bf16.msra.mxu0 0
          %1428 = vmatprep.subr.bf16.mxu0 0
          %1429 = vmatpush2.bf16.msra.mxu0 0
          %1430 = vmatprep.subr.bf16.mxu0 0
          %1431 = vmatpush2.bf16.msra.mxu0 0
          %1432 = vmatprep.subr.bf16.mxu0 0
          %1433 = vmatpush2.bf16.msra.mxu0 0
          %1434 = vmatprep.subr.bf16.mxu0 0
          %1435 = vmatpush2.bf16.msra.mxu0 0
          %1436 = vmatprep.subr.bf16.mxu0 0
          %1437 = vmatpush2.bf16.msra.mxu0 0
          %1438 = vmatprep.subr.bf16.mxu0 0
          %1439 = vmatpush2.bf16.msra.mxu0 0
          %1440 = vmatprep.subr.bf16.mxu0 0
          %1441 = vmatpush2.bf16.msra.mxu0 0
          %1442 = vmatprep.mubr.bf16.mxu0 0
          %1443 = vmatmul.mubr.bf16.gmra.mxu0 %v1401
          %v1444 = vpop.f32.mrf.mxu0
          %v1445 = vadd.f32 %v1393, %v1444
          %v1446 = vpop.f32.mrf.mxu0
          %v1447 = vpop.f32.mrf.mxu0
          %v1448 = vpop.f32.mrf.mxu0
          %1449 = vdwg.mxu0
          %v1450 = vmax.f32 %v1445, 0.0
          %v1451 = vpack.c.bf16 %v1450, %v1450
          %v1452 = vld [vmem:[#allocation14] sm:$0xff]
          %v1453 = vld [vmem:[#allocation14 + $0x8] sm:$0xff]
          %v1454 = vld [vmem:[#allocation14 + $0x10] sm:$0xff]
          %v1455 = vld [vmem:[#allocation14 + $0x18] sm:$0xff]
          %v1456 = vld [vmem:[#allocation14 + $0x20] sm:$0xff]
          %v1457 = vld [vmem:[#allocation14 + $0x28] sm:$0xff]
          %v1458 = vld [vmem:[#allocation14 + $0x30] sm:$0xff]
          %v1459 = vld [vmem:[#allocation14 + $0x38] sm:$0xff]
          %v1460 = vld [vmem:[#allocation14 + $0x40] sm:$0xff]
          %v1461 = vld [vmem:[#allocation14 + $0x48] sm:$0xff]
          %v1462 = vld [vmem:[#allocation14 + $0x50] sm:$0xff]
          %v1463 = vld [vmem:[#allocation14 + $0x58] sm:$0xff]
          %v1464 = vld [vmem:[#allocation14 + $0x60] sm:$0xff]
          %v1465 = vld [vmem:[#allocation14 + $0x68] sm:$0xff]
          %v1466 = vld [vmem:[#allocation14 + $0x70] sm:$0xff]
          %v1467 = vld [vmem:[#allocation14 + $0x78] sm:$0xff]
          %v1468 = vld [vmem:[#allocation15] sm:$0x3]
          %v1485 = vunpack.c.l.b16 %v1452
          %v1486 = vunpack.c.h.b16 %v1452
          %v1487 = vunpack.c.l.b16 %v1453
          %v1488 = vunpack.c.h.b16 %v1453
          %v1489 = vunpack.c.l.b16 %v1454
          %v1490 = vunpack.c.h.b16 %v1454
          %v1491 = vunpack.c.l.b16 %v1455
          %v1492 = vunpack.c.h.b16 %v1455
          %v1493 = vunpack.c.l.b16 %v1456
          %v1494 = vunpack.c.h.b16 %v1456
          %v1495 = vunpack.c.l.b16 %v1457
          %v1496 = vunpack.c.h.b16 %v1457
          %v1497 = vunpack.c.l.b16 %v1458
          %v1498 = vunpack.c.h.b16 %v1458
          %v1499 = vunpack.c.l.b16 %v1459
          %v1500 = vunpack.c.h.b16 %v1459
          %v1501 = vunpack.c.l.b16 %v1460
          %v1502 = vunpack.c.h.b16 %v1460
          %v1503 = vunpack.c.l.b16 %v1461
          %v1504 = vunpack.c.h.b16 %v1461
          %v1505 = vunpack.c.l.b16 %v1462
          %v1506 = vunpack.c.h.b16 %v1462
          %v1507 = vunpack.c.l.b16 %v1463
          %v1508 = vunpack.c.h.b16 %v1463
          %v1509 = vunpack.c.l.b16 %v1464
          %v1510 = vunpack.c.h.b16 %v1464
          %v1511 = vunpack.c.l.b16 %v1465
          %v1512 = vunpack.c.h.b16 %v1465
          %v1513 = vunpack.c.l.b16 %v1466
          %v1514 = vunpack.c.h.b16 %v1466
          %v1515 = vunpack.c.l.b16 %v1467
          %v1516 = vunpack.c.h.b16 %v1467
          %v1517 = vpack.c.b16 %v1487, %v1485
          %v1518 = vpack.c.b16 %v1488, %v1486
          %v1519 = vpack.c.b16 %v1491, %v1489
          %v1520 = vpack.c.b16 %v1492, %v1490
          %v1521 = vpack.c.b16 %v1495, %v1493
          %v1522 = vpack.c.b16 %v1496, %v1494
          %v1523 = vpack.c.b16 %v1499, %v1497
          %v1524 = vpack.c.b16 %v1500, %v1498
          %v1525 = vpack.c.b16 %v1503, %v1501
          %v1526 = vpack.c.b16 %v1504, %v1502
          %v1527 = vpack.c.b16 %v1507, %v1505
          %v1528 = vpack.c.b16 %v1508, %v1506
          %v1529 = vpack.c.b16 %v1511, %v1509
          %v1530 = vpack.c.b16 %v1512, %v1510
          %v1531 = vpack.c.b16 %v1515, %v1513
          %v1532 = vpack.c.b16 %v1516, %v1514
          %v1550 = vlaneseq
          %v1551 = vshrl.u32 %v1550, 7
          %v1552 = vsub.s32 0, %v1551
          %v1553 = vrot.slane %v1468, %v1552
          %v1554 = vlaneseq
          %v1555 = vshrl.u32 %v1554, 7
          %v1556 = vsub.s32 1, %v1555
          %v1557 = vrot.slane %v1468, %v1556
          %1560 = vmatprep.subr.bf16.mxu0 %v1532
          %1561 = vmatpush1.bf16.msra.mxu0 %v1531
          %1562 = vmatprep.subr.bf16.mxu0 %v1530
          %1563 = vmatpush1.bf16.msra.mxu0 %v1529
          %1564 = vmatprep.subr.bf16.mxu0 %v1528
          %1565 = vmatpush1.bf16.msra.mxu0 %v1527
          %1566 = vmatprep.subr.bf16.mxu0 %v1526
          %1567 = vmatpush1.bf16.msra.mxu0 %v1525
          %1568 = vmatprep.subr.bf16.mxu0 %v1524
          %1569 = vmatpush1.bf16.msra.mxu0 %v1523
          %1570 = vmatprep.subr.bf16.mxu0 %v1522
          %1571 = vmatpush1.bf16.msra.mxu0 %v1521
          %1572 = vmatprep.subr.bf16.mxu0 %v1520
          %1573 = vmatpush1.bf16.msra.mxu0 %v1519
          %1574 = vmatprep.subr.bf16.mxu0 %v1518
          %1575 = vmatpush1.bf16.msra.mxu0 %v1517
          %1576 = vmatprep.subr.bf16.mxu0 0
          %1577 = vmatpush2.bf16.msra.mxu0 0
          %1578 = vmatprep.subr.bf16.mxu0 0
          %1579 = vmatpush2.bf16.msra.mxu0 0
          %1580 = vmatprep.subr.bf16.mxu0 0
          %1581 = vmatpush2.bf16.msra.mxu0 0
          %1582 = vmatprep.subr.bf16.mxu0 0
          %1583 = vmatpush2.bf16.msra.mxu0 0
          %1584 = vmatprep.subr.bf16.mxu0 0
          %1585 = vmatpush2.bf16.msra.mxu0 0
          %1586 = vmatprep.subr.bf16.mxu0 0
          %1587 = vmatpush2.bf16.msra.mxu0 0
          %1588 = vmatprep.subr.bf16.mxu0 0
          %1589 = vmatpush2.bf16.msra.mxu0 0
          %1590 = vmatprep.subr.bf16.mxu0 0
          %1591 = vmatpush2.bf16.msra.mxu0 0
          %1592 = vmatprep.mubr.bf16.mxu0 0
          %1593 = vmatmul.mubr.bf16.gmra.mxu0 %v1451
          %v1594 = vpop.f32.mrf.mxu0
          %v1595 = vadd.f32 %v1553, %v1594
          %v1596 = vpop.f32.mrf.mxu0
          %v1597 = vadd.f32 %v1557, %v1596
          %v1598 = vpop.f32.mrf.mxu0
          %v1599 = vpop.f32.mrf.mxu0
          %1600 = vdwg.mxu0
          %v1601 = vmax.f32 %v1595, 0.0
          %v1602 = vmax.f32 %v1597, 0.0
          %v1603 = vpack.c.bf16 %v1601, %v1601
          %v1604 = vpack.c.bf16 %v1602, %v1602
          %v1605 = vld [vmem:[#allocation17] sm:$0xff]
          %v1606 = vld [vmem:[#allocation17 + $0x8] sm:$0xff]
          %v1607 = vld [vmem:[#allocation17 + $0x10] sm:$0xff]
          %v1608 = vld [vmem:[#allocation17 + $0x18] sm:$0xff]
          %v1609 = vld [vmem:[#allocation17 + $0x20] sm:$0xff]
          %v1610 = vld [vmem:[#allocation17 + $0x28] sm:$0xff]
          %v1611 = vld [vmem:[#allocation17 + $0x30] sm:$0xff]
          %v1612 = vld [vmem:[#allocation17 + $0x38] sm:$0xff]
          %v1613 = vld [vmem:[#allocation17 + $0x40] sm:$0xff]
          %v1614 = vld [vmem:[#allocation17 + $0x48] sm:$0xff]
          %v1615 = vld [vmem:[#allocation17 + $0x50] sm:$0xff]
          %v1616 = vld [vmem:[#allocation17 + $0x58] sm:$0xff]
          %v1617 = vld [vmem:[#allocation17 + $0x60] sm:$0xff]
          %v1618 = vld [vmem:[#allocation17 + $0x68] sm:$0xff]
          %v1619 = vld [vmem:[#allocation17 + $0x70] sm:$0xff]
          %v1620 = vld [vmem:[#allocation17 + $0x78] sm:$0xff]
          %v1621 = vld [vmem:[#allocation17 + $0x80] sm:$0xff]
          %v1622 = vld [vmem:[#allocation17 + $0x88] sm:$0xff]
          %v1623 = vld [vmem:[#allocation17 + $0x90] sm:$0xff]
          %v1624 = vld [vmem:[#allocation17 + $0x98] sm:$0xff]
          %v1625 = vld [vmem:[#allocation17 + $0xa0] sm:$0xff]
          %v1626 = vld [vmem:[#allocation17 + $0xa8] sm:$0xff]
          %v1627 = vld [vmem:[#allocation17 + $0xb0] sm:$0xff]
          %v1628 = vld [vmem:[#allocation17 + $0xb8] sm:$0xff]
          %v1629 = vld [vmem:[#allocation17 + $0xc0] sm:$0xff]
          %v1630 = vld [vmem:[#allocation17 + $0xc8] sm:$0xff]
          %v1631 = vld [vmem:[#allocation17 + $0xd0] sm:$0xff]
          %v1632 = vld [vmem:[#allocation17 + $0xd8] sm:$0xff]
          %v1633 = vld [vmem:[#allocation17 + $0xe0] sm:$0xff]
          %v1634 = vld [vmem:[#allocation17 + $0xe8] sm:$0xff]
          %v1635 = vld [vmem:[#allocation17 + $0xf0] sm:$0xff]
          %v1636 = vld [vmem:[#allocation17 + $0xf8] sm:$0xff]
          %v1637 = vld [vmem:[#allocation18] sm:$0x3]
          %v1670 = vunpack.c.l.b16 %v1605
          %v1671 = vunpack.c.h.b16 %v1605
          %v1672 = vunpack.c.l.b16 %v1606
          %v1673 = vunpack.c.h.b16 %v1606
          %v1674 = vunpack.c.l.b16 %v1607
          %v1675 = vunpack.c.h.b16 %v1607
          %v1676 = vunpack.c.l.b16 %v1608
          %v1677 = vunpack.c.h.b16 %v1608
          %v1678 = vunpack.c.l.b16 %v1609
          %v1679 = vunpack.c.h.b16 %v1609
          %v1680 = vunpack.c.l.b16 %v1610
          %v1681 = vunpack.c.h.b16 %v1610
          %v1682 = vunpack.c.l.b16 %v1611
          %v1683 = vunpack.c.h.b16 %v1611
          %v1684 = vunpack.c.l.b16 %v1612
          %v1685 = vunpack.c.h.b16 %v1612
          %v1686 = vunpack.c.l.b16 %v1613
          %v1687 = vunpack.c.h.b16 %v1613
          %v1688 = vunpack.c.l.b16 %v1614
          %v1689 = vunpack.c.h.b16 %v1614
          %v1690 = vunpack.c.l.b16 %v1615
          %v1691 = vunpack.c.h.b16 %v1615
          %v1692 = vunpack.c.l.b16 %v1616
          %v1693 = vunpack.c.h.b16 %v1616
          %v1694 = vunpack.c.l.b16 %v1617
          %v1695 = vunpack.c.h.b16 %v1617
          %v1696 = vunpack.c.l.b16 %v1618
          %v1697 = vunpack.c.h.b16 %v1618
          %v1698 = vunpack.c.l.b16 %v1619
          %v1699 = vunpack.c.h.b16 %v1619
          %v1700 = vunpack.c.l.b16 %v1620
          %v1701 = vunpack.c.h.b16 %v1620
          %v1702 = vunpack.c.l.b16 %v1621
          %v1703 = vunpack.c.h.b16 %v1621
          %v1704 = vunpack.c.l.b16 %v1622
          %v1705 = vunpack.c.h.b16 %v1622
          %v1706 = vunpack.c.l.b16 %v1623
          %v1707 = vunpack.c.h.b16 %v1623
          %v1708 = vunpack.c.l.b16 %v1624
          %v1709 = vunpack.c.h.b16 %v1624
          %v1710 = vunpack.c.l.b16 %v1625
          %v1711 = vunpack.c.h.b16 %v1625
          %v1712 = vunpack.c.l.b16 %v1626
          %v1713 = vunpack.c.h.b16 %v1626
          %v1714 = vunpack.c.l.b16 %v1627
          %v1715 = vunpack.c.h.b16 %v1627
          %v1716 = vunpack.c.l.b16 %v1628
          %v1717 = vunpack.c.h.b16 %v1628
          %v1718 = vunpack.c.l.b16 %v1629
          %v1719 = vunpack.c.h.b16 %v1629
          %v1720 = vunpack.c.l.b16 %v1630
          %v1721 = vunpack.c.h.b16 %v1630
          %v1722 = vunpack.c.l.b16 %v1631
          %v1723 = vunpack.c.h.b16 %v1631
          %v1724 = vunpack.c.l.b16 %v1632
          %v1725 = vunpack.c.h.b16 %v1632
          %v1726 = vunpack.c.l.b16 %v1633
          %v1727 = vunpack.c.h.b16 %v1633
          %v1728 = vunpack.c.l.b16 %v1634
          %v1729 = vunpack.c.h.b16 %v1634
          %v1730 = vunpack.c.l.b16 %v1635
          %v1731 = vunpack.c.h.b16 %v1635
          %v1732 = vunpack.c.l.b16 %v1636
          %v1733 = vunpack.c.h.b16 %v1636
          %v1734 = vpack.c.b16 %v1672, %v1670
          %v1735 = vpack.c.b16 %v1673, %v1671
          %v1736 = vpack.c.b16 %v1676, %v1674
          %v1737 = vpack.c.b16 %v1677, %v1675
          %v1738 = vpack.c.b16 %v1680, %v1678
          %v1739 = vpack.c.b16 %v1681, %v1679
          %v1740 = vpack.c.b16 %v1684, %v1682
          %v1741 = vpack.c.b16 %v1685, %v1683
          %v1742 = vpack.c.b16 %v1688, %v1686
          %v1743 = vpack.c.b16 %v1689, %v1687
          %v1744 = vpack.c.b16 %v1692, %v1690
          %v1745 = vpack.c.b16 %v1693, %v1691
          %v1746 = vpack.c.b16 %v1696, %v1694
          %v1747 = vpack.c.b16 %v1697, %v1695
          %v1748 = vpack.c.b16 %v1700, %v1698
          %v1749 = vpack.c.b16 %v1701, %v1699
          %v1750 = vpack.c.b16 %v1704, %v1702
          %v1751 = vpack.c.b16 %v1705, %v1703
          %v1752 = vpack.c.b16 %v1708, %v1706
          %v1753 = vpack.c.b16 %v1709, %v1707
          %v1754 = vpack.c.b16 %v1712, %v1710
          %v1755 = vpack.c.b16 %v1713, %v1711
          %v1756 = vpack.c.b16 %v1716, %v1714
          %v1757 = vpack.c.b16 %v1717, %v1715
          %v1758 = vpack.c.b16 %v1720, %v1718
          %v1759 = vpack.c.b16 %v1721, %v1719
          %v1760 = vpack.c.b16 %v1724, %v1722
          %v1761 = vpack.c.b16 %v1725, %v1723
          %v1762 = vpack.c.b16 %v1728, %v1726
          %v1763 = vpack.c.b16 %v1729, %v1727
          %v1764 = vpack.c.b16 %v1732, %v1730
          %v1765 = vpack.c.b16 %v1733, %v1731
          %v1799 = vlaneseq
          %v1800 = vshrl.u32 %v1799, 7
          %v1801 = vsub.s32 0, %v1800
          %v1802 = vrot.slane %v1637, %v1801
          %v1803 = vlaneseq
          %v1804 = vshrl.u32 %v1803, 7
          %v1805 = vsub.s32 1, %v1804
          %v1806 = vrot.slane %v1637, %v1805
          %1809 = vmatprep.subr.bf16.mxu0 %v1749
          %1810 = vmatpush1.bf16.msra.mxu0 %v1748
          %1811 = vmatprep.subr.bf16.mxu0 %v1747
          %1812 = vmatpush1.bf16.msra.mxu0 %v1746
          %1813 = vmatprep.subr.bf16.mxu0 %v1745
          %1814 = vmatpush1.bf16.msra.mxu0 %v1744
          %1815 = vmatprep.subr.bf16.mxu0 %v1743
          %1816 = vmatpush1.bf16.msra.mxu0 %v1742
          %1817 = vmatprep.subr.bf16.mxu0 %v1741
          %1818 = vmatpush1.bf16.msra.mxu0 %v1740
          %1819 = vmatprep.subr.bf16.mxu0 %v1739
          %1820 = vmatpush1.bf16.msra.mxu0 %v1738
          %1821 = vmatprep.subr.bf16.mxu0 %v1737
          %1822 = vmatpush1.bf16.msra.mxu0 %v1736
          %1823 = vmatprep.subr.bf16.mxu0 %v1735
          %1824 = vmatpush1.bf16.msra.mxu0 %v1734
          %1825 = vmatprep.subr.bf16.mxu0 %v1765
          %1826 = vmatpush2.bf16.msra.mxu0 %v1764
          %1827 = vmatprep.subr.bf16.mxu0 %v1763
          %1828 = vmatpush2.bf16.msra.mxu0 %v1762
          %1829 = vmatprep.subr.bf16.mxu0 %v1761
          %1830 = vmatpush2.bf16.msra.mxu0 %v1760
          %1831 = vmatprep.subr.bf16.mxu0 %v1759
          %1832 = vmatpush2.bf16.msra.mxu0 %v1758
          %1833 = vmatprep.subr.bf16.mxu0 %v1757
          %1834 = vmatpush2.bf16.msra.mxu0 %v1756
          %1835 = vmatprep.subr.bf16.mxu0 %v1755
          %1836 = vmatpush2.bf16.msra.mxu0 %v1754
          %1837 = vmatprep.subr.bf16.mxu0 %v1753
          %1838 = vmatpush2.bf16.msra.mxu0 %v1752
          %1839 = vmatprep.subr.bf16.mxu0 %v1751
          %1840 = vmatpush2.bf16.msra.mxu0 %v1750
          %1841 = vmatprep.mubr.bf16.mxu0 %v1604
          %1842 = vmatmul.mubr.bf16.gmra.mxu0 %v1603
          %v1843 = vpop.f32.mrf.mxu0
          %v1844 = vadd.f32 %v1802, %v1843
          %v1845 = vpop.f32.mrf.mxu0
          %v1846 = vadd.f32 %v1806, %v1845
          %v1847 = vpop.f32.mrf.mxu0
          %v1848 = vpop.f32.mrf.mxu0
          %1849 = vdwg.mxu0
          %v1850 = vmax.f32 %v1844, 0.0
          %v1851 = vmax.f32 %v1846, 0.0
          %v1854 = vcombine.low %v1850, %v1851
          %v1856 = vunpack.c.l.s4 1966171168
          %v1857 = vunpack.c.0.s8 %v1856
          %v1858 = vlaneseq
          %v1859 = vshrl.u32 %v1858, 7
          %v1860 = vsub.s32 %v1857, %v1859
          %v1861 = vrot.slane %v1854, %v1860
          %v1863 = vunpack.c.l.s4 1966171168
          %v1864 = vunpack.c.0.s8 %v1863
          %v1865 = vlaneseq
          %v1866 = vshrl.u32 %v1865, 7
          %v1867 = vsub.s32 %v1864, %v1866
          %v1868 = vrot.slane %v1861, %v1867
          %v1870 = vlaneseq
          %vm1871 = vcmp.ge.s32.totalorder %v1870, 0
          %vm1872 = vcmp.lt.s32.totalorder %v1870, 256
          %vm1873 = vmand %vm1871, %vm1872
          %1874 = vst.msk [vmem:[#allocation2] sm:$0x3] %vm1873, %v1868
          %v1875 = vld [vmem:[%s3] sm:$0xff]
          %v1876 = vld [vmem:[%s3 + $0x8] sm:$0xff]
          %v1877 = vpack.c.bf16 %v1876, %v1875
          %v1878 = vld [vmem:[#allocation20] sm:$0x7]
          %v1879 = vld [vmem:[#allocation21] sm:$0x1]
          %v1881 = vlaneseq
          %v1882 = vshrl.u32 %v1881, 7
          %v1883 = vsub.s32 0, %v1882
          %v1884 = vrot.slane %v1879, %v1883
          %vm1886 = vcmask 39936
          %v1888 = vsel %vm1886, %v1877, 0
          %vm1890 = vcmask 1041408
          %vm1891 = vcmask 1042432
          %v1892 = vsel %vm1890, 4294967295, 65535
          %v1893 = vsel %vm1891, %v1892, 0
          %v1895 = vand.u32 %v1878, %v1893
          %1897 = vmatprep.subr.bf16.mxu0 0
          %1898 = vmatpush1.bf16.msra.mxu0 0
          %1899 = vmatprep.subr.bf16.mxu0 0
          %1900 = vmatpush1.bf16.msra.mxu0 0
          %1901 = vmatprep.subr.bf16.mxu0 0
          %1902 = vmatpush1.bf16.msra.mxu0 0
          %1903 = vmatprep.subr.bf16.mxu0 0
          %1904 = vmatpush1.bf16.msra.mxu0 0
          %1905 = vmatprep.subr.bf16.mxu0 0
          %1906 = vmatpush1.bf16.msra.mxu0 0
          %1907 = vmatprep.subr.bf16.mxu0 0
          %1908 = vmatpush1.bf16.msra.mxu0 0
          %1909 = vmatprep.subr.bf16.mxu0 0
          %1910 = vmatpush1.bf16.msra.mxu0 0
          %1911 = vmatprep.subr.bf16.mxu0 0
          %1912 = vmatpush1.bf16.msra.mxu0 %v1895
          %1913 = vmatprep.subr.bf16.mxu0 0
          %1914 = vmatpush2.bf16.msra.mxu0 0
          %1915 = vmatprep.subr.bf16.mxu0 0
          %1916 = vmatpush2.bf16.msra.mxu0 0
          %1917 = vmatprep.subr.bf16.mxu0 0
          %1918 = vmatpush2.bf16.msra.mxu0 0
          %1919 = vmatprep.subr.bf16.mxu0 0
          %1920 = vmatpush2.bf16.msra.mxu0 0
          %1921 = vmatprep.subr.bf16.mxu0 0
          %1922 = vmatpush2.bf16.msra.mxu0 0
          %1923 = vmatprep.subr.bf16.mxu0 0
          %1924 = vmatpush2.bf16.msra.mxu0 0
          %1925 = vmatprep.subr.bf16.mxu0 0
          %1926 = vmatpush2.bf16.msra.mxu0 0
          %1927 = vmatprep.subr.bf16.mxu0 0
          %1928 = vmatpush2.bf16.msra.mxu0 0
          %1929 = vmatprep.mubr.bf16.mxu0 0
          %1930 = vmatmul.mubr.bf16.gmra.mxu0 %v1888
          %v1931 = vpop.f32.mrf.mxu0
          %v1932 = vadd.f32 %v1884, %v1931
          %v1933 = vpop.f32.mrf.mxu0
          %v1934 = vpop.f32.mrf.mxu0
          %v1935 = vadd.f32 %v1884, %v1934
          %v1936 = vpop.f32.mrf.mxu0
          %1937 = vdwg.mxu0
          %v1938 = vmax.f32 %v1932, 0.0
          %v1939 = vmax.f32 %v1935, 0.0
          %vm1940 = vcmask 523264
          %1941 = vst.msk [vmem:[#allocation3] sm:$0xff] %vm1940, %v1938
          %1942 = vst.msk [vmem:[#allocation3 + $0x8] sm:$0xff] %vm1940, %v1939
          %v1943 = vpack.c.bf16 %v1939, %v1938
          %v1944 = vld [vmem:[#allocation23] sm:$0xf]
          %v1945 = vld [vmem:[#allocation23 + $0x4] sm:$0xf]
          %v1946 = vld [vmem:[#allocation23 + $0x8] sm:$0xf]
          %v1947 = vld [vmem:[#allocation23 + $0xc] sm:$0xf]
          %v1948 = vld [vmem:[#allocation23 + $0x10] sm:$0xf]
          %v1949 = vld [vmem:[#allocation23 + $0x14] sm:$0xf]
          %v1950 = vld [vmem:[#allocation23 + $0x18] sm:$0xf]
          %v1951 = vld [vmem:[#allocation23 + $0x1c] sm:$0xf]
          %v1952 = vld [vmem:[#allocation24] sm:$0x1]
          %v1954 = vlaneseq
          %v1955 = vshrl.u32 %v1954, 7
          %v1956 = vsub.s32 0, %v1955
          %v1957 = vrot.slane %v1952, %v1956
          %v1967 = vunpack.c.l.b16 %v1944
          %v1968 = vunpack.c.l.b16 %v1945
          %v1969 = vunpack.c.l.b16 %v1946
          %v1970 = vunpack.c.l.b16 %v1947
          %v1971 = vunpack.c.l.b16 %v1948
          %v1972 = vunpack.c.l.b16 %v1949
          %v1973 = vunpack.c.l.b16 %v1950
          %v1974 = vunpack.c.l.b16 %v1951
          %v1975 = vpack.c.b16 %v1968, %v1967
          %v1976 = vpack.c.b16 %v1970, %v1969
          %v1977 = vpack.c.b16 %v1972, %v1971
          %v1978 = vpack.c.b16 %v1974, %v1973
          %v1984 = vsel %vm1940, %v1943, 0
          %1986 = vmatprep.subr.bf16.mxu0 0
          %1987 = vmatpush1.bf16.msra.mxu0 0
          %1988 = vmatprep.subr.bf16.mxu0 0
          %1989 = vmatpush1.bf16.msra.mxu0 0
          %1990 = vmatprep.subr.bf16.mxu0 0
          %1991 = vmatpush1.bf16.msra.mxu0 0
          %1992 = vmatprep.subr.bf16.mxu0 0
          %1993 = vmatpush1.bf16.msra.mxu0 0
          %1994 = vmatprep.subr.bf16.mxu0 0
          %1995 = vmatpush1.bf16.msra.mxu0 %v1978
          %1996 = vmatprep.subr.bf16.mxu0 0
          %1997 = vmatpush1.bf16.msra.mxu0 %v1977
          %1998 = vmatprep.subr.bf16.mxu0 0
          %1999 = vmatpush1.bf16.msra.mxu0 %v1976
          %2000 = vmatprep.subr.bf16.mxu0 0
          %2001 = vmatpush1.bf16.msra.mxu0 %v1975
          %2002 = vmatprep.subr.bf16.mxu0 0
          %2003 = vmatpush2.bf16.msra.mxu0 0
          %2004 = vmatprep.subr.bf16.mxu0 0
          %2005 = vmatpush2.bf16.msra.mxu0 0
          %2006 = vmatprep.subr.bf16.mxu0 0
          %2007 = vmatpush2.bf16.msra.mxu0 0
          %2008 = vmatprep.subr.bf16.mxu0 0
          %2009 = vmatpush2.bf16.msra.mxu0 0
          %2010 = vmatprep.subr.bf16.mxu0 0
          %2011 = vmatpush2.bf16.msra.mxu0 0
          %2012 = vmatprep.subr.bf16.mxu0 0
          %2013 = vmatpush2.bf16.msra.mxu0 0
          %2014 = vmatprep.subr.bf16.mxu0 0
          %2015 = vmatpush2.bf16.msra.mxu0 0
          %2016 = vmatprep.subr.bf16.mxu0 0
          %2017 = vmatpush2.bf16.msra.mxu0 0
          %2018 = vmatprep.mubr.bf16.mxu0 0
          %2019 = vmatmul.mubr.bf16.gmra.mxu0 %v1984
          %v2020 = vpop.f32.mrf.mxu0
          %v2021 = vadd.f32 %v1957, %v2020
          %v2022 = vpop.f32.mrf.mxu0
          %v2023 = vpop.f32.mrf.mxu0
          %v2024 = vadd.f32 %v1957, %v2023
          %v2025 = vpop.f32.mrf.mxu0
          %2026 = vdwg.mxu0
          %v2027 = vmax.f32 %v2021, 0.0
          %v2028 = vmax.f32 %v2024, 0.0
          %v2029 = vpack.c.bf16 %v2028, %v2027
          %v2030 = vld [vmem:[#allocation26] sm:$0xff]
          %v2031 = vld [vmem:[#allocation26 + $0x8] sm:$0xff]
          %v2032 = vld [vmem:[#allocation26 + $0x10] sm:$0xff]
          %v2033 = vld [vmem:[#allocation26 + $0x18] sm:$0xff]
          %v2034 = vld [vmem:[#allocation26 + $0x20] sm:$0xff]
          %v2035 = vld [vmem:[#allocation26 + $0x28] sm:$0xff]
          %v2036 = vld [vmem:[#allocation26 + $0x30] sm:$0xff]
          %v2037 = vld [vmem:[#allocation26 + $0x38] sm:$0xff]
          %v2038 = vld [vmem:[#allocation27] sm:$0x3]
          %v2040 = vlaneseq
          %v2041 = vshrl.u32 %v2040, 7
          %v2042 = vsub.s32 0, %v2041
          %v2043 = vrot.slane %v2038, %v2042
          %v2044 = vlaneseq
          %v2045 = vshrl.u32 %v2044, 7
          %v2046 = vsub.s32 1, %v2045
          %v2047 = vrot.slane %v2038, %v2046
          %v2058 = vunpack.c.l.b16 %v2030
          %v2059 = vunpack.c.h.b16 %v2030
          %v2060 = vunpack.c.l.b16 %v2031
          %v2061 = vunpack.c.h.b16 %v2031
          %v2062 = vunpack.c.l.b16 %v2032
          %v2063 = vunpack.c.h.b16 %v2032
          %v2064 = vunpack.c.l.b16 %v2033
          %v2065 = vunpack.c.h.b16 %v2033
          %v2066 = vunpack.c.l.b16 %v2034
          %v2067 = vunpack.c.h.b16 %v2034
          %v2068 = vunpack.c.l.b16 %v2035
          %v2069 = vunpack.c.h.b16 %v2035
          %v2070 = vunpack.c.l.b16 %v2036
          %v2071 = vunpack.c.h.b16 %v2036
          %v2072 = vunpack.c.l.b16 %v2037
          %v2073 = vunpack.c.h.b16 %v2037
          %v2074 = vpack.c.b16 %v2060, %v2058
          %v2075 = vpack.c.b16 %v2061, %v2059
          %v2076 = vpack.c.b16 %v2064, %v2062
          %v2077 = vpack.c.b16 %v2065, %v2063
          %v2078 = vpack.c.b16 %v2068, %v2066
          %v2079 = vpack.c.b16 %v2069, %v2067
          %v2080 = vpack.c.b16 %v2072, %v2070
          %v2081 = vpack.c.b16 %v2073, %v2071
          %v2091 = vsel %vm1940, %v2029, 0
          %2093 = vmatprep.subr.bf16.mxu0 0
          %2094 = vmatpush1.bf16.msra.mxu0 0
          %2095 = vmatprep.subr.bf16.mxu0 0
          %2096 = vmatpush1.bf16.msra.mxu0 0
          %2097 = vmatprep.subr.bf16.mxu0 0
          %2098 = vmatpush1.bf16.msra.mxu0 0
          %2099 = vmatprep.subr.bf16.mxu0 0
          %2100 = vmatpush1.bf16.msra.mxu0 0
          %2101 = vmatprep.subr.bf16.mxu0 %v2081
          %2102 = vmatpush1.bf16.msra.mxu0 %v2080
          %2103 = vmatprep.subr.bf16.mxu0 %v2079
          %2104 = vmatpush1.bf16.msra.mxu0 %v2078
          %2105 = vmatprep.subr.bf16.mxu0 %v2077
          %2106 = vmatpush1.bf16.msra.mxu0 %v2076
          %2107 = vmatprep.subr.bf16.mxu0 %v2075
          %2108 = vmatpush1.bf16.msra.mxu0 %v2074
          %2109 = vmatprep.subr.bf16.mxu0 0
          %2110 = vmatpush2.bf16.msra.mxu0 0
          %2111 = vmatprep.subr.bf16.mxu0 0
          %2112 = vmatpush2.bf16.msra.mxu0 0
          %2113 = vmatprep.subr.bf16.mxu0 0
          %2114 = vmatpush2.bf16.msra.mxu0 0
          %2115 = vmatprep.subr.bf16.mxu0 0
          %2116 = vmatpush2.bf16.msra.mxu0 0
          %2117 = vmatprep.subr.bf16.mxu0 0
          %2118 = vmatpush2.bf16.msra.mxu0 0
          %2119 = vmatprep.subr.bf16.mxu0 0
          %2120 = vmatpush2.bf16.msra.mxu0 0
          %2121 = vmatprep.subr.bf16.mxu0 0
          %2122 = vmatpush2.bf16.msra.mxu0 0
          %2123 = vmatprep.subr.bf16.mxu0 0
          %2124 = vmatpush2.bf16.msra.mxu0 0
          %2125 = vmatprep.mubr.bf16.mxu0 0
          %2126 = vmatmul.mubr.bf16.gmra.mxu0 %v2091
          %v2127 = vpop.f32.mrf.mxu0
          %v2128 = vadd.f32 %v2043, %v2127
          %v2129 = vpop.f32.mrf.mxu0
          %v2130 = vadd.f32 %v2047, %v2129
          %v2131 = vpop.f32.mrf.mxu0
          %v2132 = vadd.f32 %v2043, %v2131
          %v2133 = vpop.f32.mrf.mxu0
          %v2134 = vadd.f32 %v2047, %v2133
          %2135 = vdwg.mxu0
          %v2136 = vmax.f32 %v2128, 0.0
          %v2137 = vmax.f32 %v2130, 0.0
          %v2138 = vmax.f32 %v2132, 0.0
          %v2139 = vmax.f32 %v2134, 0.0
          %v2140 = vmax.f32 %v2136, %v2138
          %v2141 = vrot.slane %v2140, 4
          %v2142 = vmax.f32 %v2140, %v2141
          %v2143 = vrot.slane %v2142, 2
          %v2144 = vmax.f32 %v2142, %v2143
          %v2145 = vrot.slane %v2144, 1
          %v2146 = vmax.f32 %v2144, %v2145
          %v2147 = vmax.f32 %v2137, %v2139
          %v2148 = vrot.slane %v2147, 4
          %v2149 = vmax.f32 %v2147, %v2148
          %v2150 = vrot.slane %v2149, 2
          %v2151 = vmax.f32 %v2149, %v2150
          %v2152 = vrot.slane %v2151, 1
          %v2153 = vmax.f32 %v2151, %v2152
          %v2156 = vcombine.low %v2146, %v2153
          %v2158 = vunpack.c.l.s4 1966171168
          %v2159 = vunpack.c.0.s8 %v2158
          %v2160 = vlaneseq
          %v2161 = vshrl.u32 %v2160, 7
          %v2162 = vsub.s32 %v2159, %v2161
          %v2163 = vrot.slane %v2156, %v2162
          %v2165 = vunpack.c.l.s4 1966171168
          %v2166 = vunpack.c.0.s8 %v2165
          %v2167 = vlaneseq
          %v2168 = vshrl.u32 %v2167, 7
          %v2169 = vsub.s32 %v2166, %v2168
          %v2170 = vrot.slane %v2163, %v2169
          %2172 = vst.msk [vmem:[#allocation4] sm:$0x3] %vm1873, %v2170
        $region268: #{actor_forward.1} parent=147 // pred_fallthru
          _
        %v2173 = vld [vmem:[#allocation4] sm:$0x3]
        %v2175 = vlaneseq
        %v2176 = vshrl.u32 %v2175, 7
        %v2177 = vsub.s32 0, %v2176
        %v2178 = vrot.slane %v2173, %v2177
        %v2179 = vlaneseq
        %v2180 = vshrl.u32 %v2179, 7
        %v2181 = vsub.s32 1, %v2180
        %v2182 = vrot.slane %v2173, %v2181
        %v2185 = vpack.c.bf16 %v2178, %v2178
        %v2186 = vpack.c.bf16 %v2182, %v2182
        %v2187 = vld [vmem:[%s1240] sm:$0xff]
        %v2188 = vld [vmem:[%s1240 + $0x8] sm:$0xff]
        %v2189 = vld [vmem:[%s1240 + $0x10] sm:$0xff]
        %v2190 = vld [vmem:[%s1240 + $0x18] sm:$0xff]
        %v2191 = vld [vmem:[%s1240 + $0x20] sm:$0xff]
        %v2192 = vld [vmem:[%s1240 + $0x28] sm:$0xff]
        %v2193 = vld [vmem:[%s1240 + $0x30] sm:$0xff]
        %v2194 = vld [vmem:[%s1240 + $0x38] sm:$0xff]
        %v2195 = vld [vmem:[%s1240 + $0x40] sm:$0xff]
        %v2196 = vld [vmem:[%s1240 + $0x48] sm:$0xff]
        %v2197 = vld [vmem:[%s1240 + $0x50] sm:$0xff]
        %v2198 = vld [vmem:[%s1240 + $0x58] sm:$0xff]
        %v2199 = vld [vmem:[%s1240 + $0x60] sm:$0xff]
        %v2200 = vld [vmem:[%s1240 + $0x68] sm:$0xff]
        %v2201 = vld [vmem:[%s1240 + $0x70] sm:$0xff]
        %v2202 = vld [vmem:[%s1240 + $0x78] sm:$0xff]
        %v2203 = vld [vmem:[%s1240 + $0x80] sm:$0xff]
        %v2204 = vld [vmem:[%s1240 + $0x88] sm:$0xff]
        %v2205 = vld [vmem:[%s1240 + $0x90] sm:$0xff]
        %v2206 = vld [vmem:[%s1240 + $0x98] sm:$0xff]
        %v2207 = vld [vmem:[%s1240 + $0xa0] sm:$0xff]
        %v2208 = vld [vmem:[%s1240 + $0xa8] sm:$0xff]
        %v2209 = vld [vmem:[%s1240 + $0xb0] sm:$0xff]
        %v2210 = vld [vmem:[%s1240 + $0xb8] sm:$0xff]
        %v2211 = vld [vmem:[%s1240 + $0xc0] sm:$0xff]
        %v2212 = vld [vmem:[%s1240 + $0xc8] sm:$0xff]
        %v2213 = vld [vmem:[%s1240 + $0xd0] sm:$0xff]
        %v2214 = vld [vmem:[%s1240 + $0xd8] sm:$0xff]
        %v2215 = vld [vmem:[%s1240 + $0xe0] sm:$0xff]
        %v2216 = vld [vmem:[%s1240 + $0xe8] sm:$0xff]
        %v2217 = vld [vmem:[%s1240 + $0xf0] sm:$0xff]
        %v2218 = vld [vmem:[%s1240 + $0xf8] sm:$0xff]
        %v2219 = vld [vmem:[%s1240 + $0x100] sm:$0xff]
        %v2220 = vld [vmem:[%s1240 + $0x108] sm:$0xff]
        %v2221 = vld [vmem:[%s1240 + $0x110] sm:$0xff]
        %v2222 = vld [vmem:[%s1240 + $0x118] sm:$0xff]
        %v2223 = vld [vmem:[%s1240 + $0x120] sm:$0xff]
        %v2224 = vld [vmem:[%s1240 + $0x128] sm:$0xff]
        %v2225 = vld [vmem:[%s1240 + $0x130] sm:$0xff]
        %v2226 = vld [vmem:[%s1240 + $0x138] sm:$0xff]
        %v2227 = vld [vmem:[%s1240 + $0x140] sm:$0xff]
        %v2228 = vld [vmem:[%s1240 + $0x148] sm:$0xff]
        %v2229 = vld [vmem:[%s1240 + $0x150] sm:$0xff]
        %v2230 = vld [vmem:[%s1240 + $0x158] sm:$0xff]
        %v2231 = vld [vmem:[%s1240 + $0x160] sm:$0xff]
        %v2232 = vld [vmem:[%s1240 + $0x168] sm:$0xff]
        %v2233 = vld [vmem:[%s1240 + $0x170] sm:$0xff]
        %v2234 = vld [vmem:[%s1240 + $0x178] sm:$0xff]
        %v2235 = vld [vmem:[%s1240 + $0x180] sm:$0xff]
        %v2236 = vld [vmem:[%s1240 + $0x188] sm:$0xff]
        %v2237 = vld [vmem:[%s1240 + $0x190] sm:$0xff]
        %v2238 = vld [vmem:[%s1240 + $0x198] sm:$0xff]
        %v2239 = vld [vmem:[%s1240 + $0x1a0] sm:$0xff]
        %v2240 = vld [vmem:[%s1240 + $0x1a8] sm:$0xff]
        %v2241 = vld [vmem:[%s1240 + $0x1b0] sm:$0xff]
        %v2242 = vld [vmem:[%s1240 + $0x1b8] sm:$0xff]
        %v2243 = vld [vmem:[%s1240 + $0x1c0] sm:$0xff]
        %v2244 = vld [vmem:[%s1240 + $0x1c8] sm:$0xff]
        %v2245 = vld [vmem:[%s1240 + $0x1d0] sm:$0xff]
        %v2246 = vld [vmem:[%s1240 + $0x1d8] sm:$0xff]
        %v2247 = vld [vmem:[%s1240 + $0x1e0] sm:$0xff]
        %v2248 = vld [vmem:[%s1240 + $0x1e8] sm:$0xff]
        %v2249 = vld [vmem:[%s1240 + $0x1f0] sm:$0xff]
        %v2250 = vld [vmem:[%s1240 + $0x1f8] sm:$0xff]
        %v2251 = vld [vmem:[%s1249] sm:$0xf]
        %v2316 = vunpack.c.l.b16 %v2187
        %v2317 = vunpack.c.h.b16 %v2187
        %v2318 = vunpack.c.l.b16 %v2188
        %v2319 = vunpack.c.h.b16 %v2188
        %v2320 = vunpack.c.l.b16 %v2189
        %v2321 = vunpack.c.h.b16 %v2189
        %v2322 = vunpack.c.l.b16 %v2190
        %v2323 = vunpack.c.h.b16 %v2190
        %v2324 = vunpack.c.l.b16 %v2191
        %v2325 = vunpack.c.h.b16 %v2191
        %v2326 = vunpack.c.l.b16 %v2192
        %v2327 = vunpack.c.h.b16 %v2192
        %v2328 = vunpack.c.l.b16 %v2193
        %v2329 = vunpack.c.h.b16 %v2193
        %v2330 = vunpack.c.l.b16 %v2194
        %v2331 = vunpack.c.h.b16 %v2194
        %v2332 = vunpack.c.l.b16 %v2195
        %v2333 = vunpack.c.h.b16 %v2195
        %v2334 = vunpack.c.l.b16 %v2196
        %v2335 = vunpack.c.h.b16 %v2196
        %v2336 = vunpack.c.l.b16 %v2197
        %v2337 = vunpack.c.h.b16 %v2197
        %v2338 = vunpack.c.l.b16 %v2198
        %v2339 = vunpack.c.h.b16 %v2198
        %v2340 = vunpack.c.l.b16 %v2199
        %v2341 = vunpack.c.h.b16 %v2199
        %v2342 = vunpack.c.l.b16 %v2200
        %v2343 = vunpack.c.h.b16 %v2200
        %v2344 = vunpack.c.l.b16 %v2201
        %v2345 = vunpack.c.h.b16 %v2201
        %v2346 = vunpack.c.l.b16 %v2202
        %v2347 = vunpack.c.h.b16 %v2202
        %v2348 = vunpack.c.l.b16 %v2203
        %v2349 = vunpack.c.h.b16 %v2203
        %v2350 = vunpack.c.l.b16 %v2204
        %v2351 = vunpack.c.h.b16 %v2204
        %v2352 = vunpack.c.l.b16 %v2205
        %v2353 = vunpack.c.h.b16 %v2205
        %v2354 = vunpack.c.l.b16 %v2206
        %v2355 = vunpack.c.h.b16 %v2206
        %v2356 = vunpack.c.l.b16 %v2207
        %v2357 = vunpack.c.h.b16 %v2207
        %v2358 = vunpack.c.l.b16 %v2208
        %v2359 = vunpack.c.h.b16 %v2208
        %v2360 = vunpack.c.l.b16 %v2209
        %v2361 = vunpack.c.h.b16 %v2209
        %v2362 = vunpack.c.l.b16 %v2210
        %v2363 = vunpack.c.h.b16 %v2210
        %v2364 = vunpack.c.l.b16 %v2211
        %v2365 = vunpack.c.h.b16 %v2211
        %v2366 = vunpack.c.l.b16 %v2212
        %v2367 = vunpack.c.h.b16 %v2212
        %v2368 = vunpack.c.l.b16 %v2213
        %v2369 = vunpack.c.h.b16 %v2213
        %v2370 = vunpack.c.l.b16 %v2214
        %v2371 = vunpack.c.h.b16 %v2214
        %v2372 = vunpack.c.l.b16 %v2215
        %v2373 = vunpack.c.h.b16 %v2215
        %v2374 = vunpack.c.l.b16 %v2216
        %v2375 = vunpack.c.h.b16 %v2216
        %v2376 = vunpack.c.l.b16 %v2217
        %v2377 = vunpack.c.h.b16 %v2217
        %v2378 = vunpack.c.l.b16 %v2218
        %v2379 = vunpack.c.h.b16 %v2218
        %v2380 = vunpack.c.l.b16 %v2219
        %v2381 = vunpack.c.h.b16 %v2219
        %v2382 = vunpack.c.l.b16 %v2220
        %v2383 = vunpack.c.h.b16 %v2220
        %v2384 = vunpack.c.l.b16 %v2221
        %v2385 = vunpack.c.h.b16 %v2221
        %v2386 = vunpack.c.l.b16 %v2222
        %v2387 = vunpack.c.h.b16 %v2222
        %v2388 = vunpack.c.l.b16 %v2223
        %v2389 = vunpack.c.h.b16 %v2223
        %v2390 = vunpack.c.l.b16 %v2224
        %v2391 = vunpack.c.h.b16 %v2224
        %v2392 = vunpack.c.l.b16 %v2225
        %v2393 = vunpack.c.h.b16 %v2225
        %v2394 = vunpack.c.l.b16 %v2226
        %v2395 = vunpack.c.h.b16 %v2226
        %v2396 = vunpack.c.l.b16 %v2227
        %v2397 = vunpack.c.h.b16 %v2227
        %v2398 = vunpack.c.l.b16 %v2228
        %v2399 = vunpack.c.h.b16 %v2228
        %v2400 = vunpack.c.l.b16 %v2229
        %v2401 = vunpack.c.h.b16 %v2229
        %v2402 = vunpack.c.l.b16 %v2230
        %v2403 = vunpack.c.h.b16 %v2230
        %v2404 = vunpack.c.l.b16 %v2231
        %v2405 = vunpack.c.h.b16 %v2231
        %v2406 = vunpack.c.l.b16 %v2232
        %v2407 = vunpack.c.h.b16 %v2232
        %v2408 = vunpack.c.l.b16 %v2233
        %v2409 = vunpack.c.h.b16 %v2233
        %v2410 = vunpack.c.l.b16 %v2234
        %v2411 = vunpack.c.h.b16 %v2234
        %v2412 = vunpack.c.l.b16 %v2235
        %v2413 = vunpack.c.h.b16 %v2235
        %v2414 = vunpack.c.l.b16 %v2236
        %v2415 = vunpack.c.h.b16 %v2236
        %v2416 = vunpack.c.l.b16 %v2237
        %v2417 = vunpack.c.h.b16 %v2237
        %v2418 = vunpack.c.l.b16 %v2238
        %v2419 = vunpack.c.h.b16 %v2238
        %v2420 = vunpack.c.l.b16 %v2239
        %v2421 = vunpack.c.h.b16 %v2239
        %v2422 = vunpack.c.l.b16 %v2240
        %v2423 = vunpack.c.h.b16 %v2240
        %v2424 = vunpack.c.l.b16 %v2241
        %v2425 = vunpack.c.h.b16 %v2241
        %v2426 = vunpack.c.l.b16 %v2242
        %v2427 = vunpack.c.h.b16 %v2242
        %v2428 = vunpack.c.l.b16 %v2243
        %v2429 = vunpack.c.h.b16 %v2243
        %v2430 = vunpack.c.l.b16 %v2244
        %v2431 = vunpack.c.h.b16 %v2244
        %v2432 = vunpack.c.l.b16 %v2245
        %v2433 = vunpack.c.h.b16 %v2245
        %v2434 = vunpack.c.l.b16 %v2246
        %v2435 = vunpack.c.h.b16 %v2246
        %v2436 = vunpack.c.l.b16 %v2247
        %v2437 = vunpack.c.h.b16 %v2247
        %v2438 = vunpack.c.l.b16 %v2248
        %v2439 = vunpack.c.h.b16 %v2248
        %v2440 = vunpack.c.l.b16 %v2249
        %v2441 = vunpack.c.h.b16 %v2249
        %v2442 = vunpack.c.l.b16 %v2250
        %v2443 = vunpack.c.h.b16 %v2250
        %v2444 = vpack.c.b16 %v2320, %v2316
        %v2445 = vpack.c.b16 %v2321, %v2317
        %v2446 = vpack.c.b16 %v2322, %v2318
        %v2447 = vpack.c.b16 %v2323, %v2319
        %v2448 = vpack.c.b16 %v2328, %v2324
        %v2449 = vpack.c.b16 %v2329, %v2325
        %v2450 = vpack.c.b16 %v2330, %v2326
        %v2451 = vpack.c.b16 %v2331, %v2327
        %v2452 = vpack.c.b16 %v2336, %v2332
        %v2453 = vpack.c.b16 %v2337, %v2333
        %v2454 = vpack.c.b16 %v2338, %v2334
        %v2455 = vpack.c.b16 %v2339, %v2335
        %v2456 = vpack.c.b16 %v2344, %v2340
        %v2457 = vpack.c.b16 %v2345, %v2341
        %v2458 = vpack.c.b16 %v2346, %v2342
        %v2459 = vpack.c.b16 %v2347, %v2343
        %v2460 = vpack.c.b16 %v2352, %v2348
        %v2461 = vpack.c.b16 %v2353, %v2349
        %v2462 = vpack.c.b16 %v2354, %v2350
        %v2463 = vpack.c.b16 %v2355, %v2351
        %v2464 = vpack.c.b16 %v2360, %v2356
        %v2465 = vpack.c.b16 %v2361, %v2357
        %v2466 = vpack.c.b16 %v2362, %v2358
        %v2467 = vpack.c.b16 %v2363, %v2359
        %v2468 = vpack.c.b16 %v2368, %v2364
        %v2469 = vpack.c.b16 %v2369, %v2365
        %v2470 = vpack.c.b16 %v2370, %v2366
        %v2471 = vpack.c.b16 %v2371, %v2367
        %v2472 = vpack.c.b16 %v2376, %v2372
        %v2473 = vpack.c.b16 %v2377, %v2373
        %v2474 = vpack.c.b16 %v2378, %v2374
        %v2475 = vpack.c.b16 %v2379, %v2375
        %v2476 = vpack.c.b16 %v2384, %v2380
        %v2477 = vpack.c.b16 %v2385, %v2381
        %v2478 = vpack.c.b16 %v2386, %v2382
        %v2479 = vpack.c.b16 %v2387, %v2383
        %v2480 = vpack.c.b16 %v2392, %v2388
        %v2481 = vpack.c.b16 %v2393, %v2389
        %v2482 = vpack.c.b16 %v2394, %v2390
        %v2483 = vpack.c.b16 %v2395, %v2391
        %v2484 = vpack.c.b16 %v2400, %v2396
        %v2485 = vpack.c.b16 %v2401, %v2397
        %v2486 = vpack.c.b16 %v2402, %v2398
        %v2487 = vpack.c.b16 %v2403, %v2399
        %v2488 = vpack.c.b16 %v2408, %v2404
        %v2489 = vpack.c.b16 %v2409, %v2405
        %v2490 = vpack.c.b16 %v2410, %v2406
        %v2491 = vpack.c.b16 %v2411, %v2407
        %v2492 = vpack.c.b16 %v2416, %v2412
        %v2493 = vpack.c.b16 %v2417, %v2413
        %v2494 = vpack.c.b16 %v2418, %v2414
        %v2495 = vpack.c.b16 %v2419, %v2415
        %v2496 = vpack.c.b16 %v2424, %v2420
        %v2497 = vpack.c.b16 %v2425, %v2421
        %v2498 = vpack.c.b16 %v2426, %v2422
        %v2499 = vpack.c.b16 %v2427, %v2423
        %v2500 = vpack.c.b16 %v2432, %v2428
        %v2501 = vpack.c.b16 %v2433, %v2429
        %v2502 = vpack.c.b16 %v2434, %v2430
        %v2503 = vpack.c.b16 %v2435, %v2431
        %v2504 = vpack.c.b16 %v2440, %v2436
        %v2505 = vpack.c.b16 %v2441, %v2437
        %v2506 = vpack.c.b16 %v2442, %v2438
        %v2507 = vpack.c.b16 %v2443, %v2439
        %v2573 = vlaneseq
        %v2574 = vshrl.u32 %v2573, 7
        %v2575 = vsub.s32 0, %v2574
        %v2576 = vrot.slane %v2251, %v2575
        %v2577 = vlaneseq
        %v2578 = vshrl.u32 %v2577, 7
        %v2579 = vsub.s32 1, %v2578
        %v2580 = vrot.slane %v2251, %v2579
        %v2581 = vlaneseq
        %v2582 = vshrl.u32 %v2581, 7
        %v2583 = vsub.s32 2, %v2582
        %v2584 = vrot.slane %v2251, %v2583
        %v2585 = vlaneseq
        %v2586 = vshrl.u32 %v2585, 7
        %v2587 = vsub.s32 3, %v2586
        %v2588 = vrot.slane %v2251, %v2587
        %2593 = vmatprep.subr.bf16.mxu0 %v2473
        %2594 = vmatpush1.bf16.msra.mxu0 %v2472
        %2595 = vmatprep.subr.bf16.mxu0 %v2469
        %2596 = vmatpush1.bf16.msra.mxu0 %v2468
        %2597 = vmatprep.subr.bf16.mxu0 %v2465
        %2598 = vmatpush1.bf16.msra.mxu0 %v2464
        %2599 = vmatprep.subr.bf16.mxu0 %v2461
        %2600 = vmatpush1.bf16.msra.mxu0 %v2460
        %2601 = vmatprep.subr.bf16.mxu0 %v2457
        %2602 = vmatpush1.bf16.msra.mxu0 %v2456
        %2603 = vmatprep.subr.bf16.mxu0 %v2453
        %2604 = vmatpush1.bf16.msra.mxu0 %v2452
        %2605 = vmatprep.subr.bf16.mxu0 %v2449
        %2606 = vmatpush1.bf16.msra.mxu0 %v2448
        %2607 = vmatprep.subr.bf16.mxu0 %v2445
        %2608 = vmatpush1.bf16.msra.mxu0 %v2444
        %2609 = vmatprep.subr.bf16.mxu0 %v2505
        %2610 = vmatpush2.bf16.msra.mxu0 %v2504
        %2611 = vmatprep.subr.bf16.mxu0 %v2501
        %2612 = vmatpush2.bf16.msra.mxu0 %v2500
        %2613 = vmatprep.subr.bf16.mxu0 %v2497
        %2614 = vmatpush2.bf16.msra.mxu0 %v2496
        %2615 = vmatprep.subr.bf16.mxu0 %v2493
        %2616 = vmatpush2.bf16.msra.mxu0 %v2492
        %2617 = vmatprep.subr.bf16.mxu0 %v2489
        %2618 = vmatpush2.bf16.msra.mxu0 %v2488
        %2619 = vmatprep.subr.bf16.mxu0 %v2485
        %2620 = vmatpush2.bf16.msra.mxu0 %v2484
        %2621 = vmatprep.subr.bf16.mxu0 %v2481
        %2622 = vmatpush2.bf16.msra.mxu0 %v2480
        %2623 = vmatprep.subr.bf16.mxu0 %v2477
        %2624 = vmatpush2.bf16.msra.mxu0 %v2476
        %2625 = vmatprep.mubr.bf16.mxu0 %v2186
        %2626 = vmatmul.mubr.bf16.gmra.mxu0 %v2185
        %v2627 = vpop.f32.mrf.mxu0
        %v2628 = vadd.f32 %v2576, %v2627
        %v2629 = vpop.f32.mrf.mxu0
        %v2630 = vadd.f32 %v2580, %v2629
        %v2631 = vpop.f32.mrf.mxu0
        %v2632 = vpop.f32.mrf.mxu0
        %2633 = vdwg.mxu0
        %2634 = vmatprep.subr.bf16.mxu0 %v2475
        %2635 = vmatpush1.bf16.msra.mxu0 %v2474
        %2636 = vmatprep.subr.bf16.mxu0 %v2471
        %2637 = vmatpush1.bf16.msra.mxu0 %v2470
        %2638 = vmatprep.subr.bf16.mxu0 %v2467
        %2639 = vmatpush1.bf16.msra.mxu0 %v2466
        %2640 = vmatprep.subr.bf16.mxu0 %v2463
        %2641 = vmatpush1.bf16.msra.mxu0 %v2462
        %2642 = vmatprep.subr.bf16.mxu0 %v2459
        %2643 = vmatpush1.bf16.msra.mxu0 %v2458
        %2644 = vmatprep.subr.bf16.mxu0 %v2455
        %2645 = vmatpush1.bf16.msra.mxu0 %v2454
        %2646 = vmatprep.subr.bf16.mxu0 %v2451
        %2647 = vmatpush1.bf16.msra.mxu0 %v2450
        %2648 = vmatprep.subr.bf16.mxu0 %v2447
        %2649 = vmatpush1.bf16.msra.mxu0 %v2446
        %2650 = vmatprep.subr.bf16.mxu0 %v2507
        %2651 = vmatpush2.bf16.msra.mxu0 %v2506
        %2652 = vmatprep.subr.bf16.mxu0 %v2503
        %2653 = vmatpush2.bf16.msra.mxu0 %v2502
        %2654 = vmatprep.subr.bf16.mxu0 %v2499
        %2655 = vmatpush2.bf16.msra.mxu0 %v2498
        %2656 = vmatprep.subr.bf16.mxu0 %v2495
        %2657 = vmatpush2.bf16.msra.mxu0 %v2494
        %2658 = vmatprep.subr.bf16.mxu0 %v2491
        %2659 = vmatpush2.bf16.msra.mxu0 %v2490
        %2660 = vmatprep.subr.bf16.mxu0 %v2487
        %2661 = vmatpush2.bf16.msra.mxu0 %v2486
        %2662 = vmatprep.subr.bf16.mxu0 %v2483
        %2663 = vmatpush2.bf16.msra.mxu0 %v2482
        %2664 = vmatprep.subr.bf16.mxu0 %v2479
        %2665 = vmatpush2.bf16.msra.mxu0 %v2478
        %2666 = vmatprep.mubr.bf16.mxu0 %v2186
        %2667 = vmatmul.mubr.bf16.gmra.mxu0 %v2185
        %v2668 = vpop.f32.mrf.mxu0
        %v2669 = vadd.f32 %v2584, %v2668
        %v2670 = vpop.f32.mrf.mxu0
        %v2671 = vadd.f32 %v2588, %v2670
        %v2672 = vpop.f32.mrf.mxu0
        %v2673 = vpop.f32.mrf.mxu0
        %2674 = vdwg.mxu0
        %v2675 = vmax.f32 %v2628, 0.0
        %v2676 = vmax.f32 %v2630, 0.0
        %v2677 = vmax.f32 %v2669, 0.0
        %v2678 = vmax.f32 %v2671, 0.0
        %s2679 = smul.u32 %s88, 8
        %s2680 = scalar_lea.vmem [#allocation5], %s2679
        %vm2681 = vcmask 516096
        %2682 = vst.msk [vmem:[%s2680] sm:$0x1] %vm2681, %v2675
        %s2683 = sadd.s32 %s2679, 1
        %2685 = vrot.lane.b32.xlu0 %v2675, 64
        %v2686 = vpop.permute.xlu0 %2685
        %s2688 = scalar_lea.vmem [#allocation5], %s2683
        %2689 = vst.msk [vmem:[%s2688] sm:$0x1] %vm2681, %v2686
        %s2690 = sadd.s32 %s2679, 2
        %s2691 = scalar_lea.vmem [#allocation5], %s2690
        %2692 = vst.msk [vmem:[%s2691] sm:$0x1] %vm2681, %v2676
        %s2693 = sadd.s32 %s2679, 3
        %2695 = vrot.lane.b32.xlu0 %v2676, 64
        %v2696 = vpop.permute.xlu0 %2695
        %s2698 = scalar_lea.vmem [#allocation5], %s2693
        %2699 = vst.msk [vmem:[%s2698] sm:$0x1] %vm2681, %v2696
        %s2700 = sadd.s32 %s2679, 4
        %s2701 = scalar_lea.vmem [#allocation5], %s2700
        %2702 = vst.msk [vmem:[%s2701] sm:$0x1] %vm2681, %v2677
        %s2703 = sadd.s32 %s2679, 5
        %2705 = vrot.lane.b32.xlu0 %v2677, 64
        %v2706 = vpop.permute.xlu0 %2705
        %s2708 = scalar_lea.vmem [#allocation5], %s2703
        %2709 = vst.msk [vmem:[%s2708] sm:$0x1] %vm2681, %v2706
        %s2710 = sadd.s32 %s2679, 6
        %s2711 = scalar_lea.vmem [#allocation5], %s2710
        %2712 = vst.msk [vmem:[%s2711] sm:$0x1] %vm2681, %v2678
        %s2713 = sadd.s32 %s2679, 7
        %2715 = vrot.lane.b32.xlu0 %v2678, 64
        %v2716 = vpop.permute.xlu0 %2715
        %s2718 = scalar_lea.vmem [#allocation5], %s2713
        %2719 = vst.msk [vmem:[%s2718] sm:$0x1] %vm2681, %v2716
        %p2720 = scmp.eq.s32.totalorder %s88, 7
        // Predicated region
        $region269: #{actor_forward.1} parent=147 // pred_check
          %p2721 = pneg %p2720
        $region270: #{actor_forward.1} parent=147 // pred_check_branch
          %2723 = sbr.rel (%p2721) target = $region272
        $region271: #{actor_forward.1} parent=147 // pred_region
          %v2724 = vld [vmem:[#allocation3] sm:$0xff]
          %v2725 = vld [vmem:[#allocation3 + $0x8] sm:$0xff]
          %v2726 = vpack.c.bf16 %v2725, %v2724
          %v2727 = vld [vmem:[#allocation5] sm:$0xff]
          %v2728 = vld [vmem:[#allocation5 + $0x8] sm:$0xff]
          %v2729 = vld [vmem:[#allocation5 + $0x10] sm:$0xff]
          %v2730 = vld [vmem:[#allocation5 + $0x18] sm:$0xff]
          %v2731 = vld [vmem:[#allocation5 + $0x20] sm:$0xff]
          %v2732 = vld [vmem:[#allocation5 + $0x28] sm:$0xff]
          %v2733 = vld [vmem:[#allocation5 + $0x30] sm:$0xff]
          %v2734 = vld [vmem:[#allocation5 + $0x38] sm:$0xff]
          %v2735 = vpack.c.bf16 %v2728, %v2727
          %v2736 = vpack.c.bf16 %v2730, %v2729
          %v2737 = vpack.c.bf16 %v2732, %v2731
          %v2738 = vpack.c.bf16 %v2734, %v2733
          %vm2739 = vcmask 523264
          %v2741 = vsel %vm2739, %v2726, 0
          %2743 = vmatprep.subr.bf16.mxu0 0
          %2744 = vmatpush1.bf16.msra.mxu0 0
          %2745 = vmatprep.subr.bf16.mxu0 0
          %2746 = vmatpush1.bf16.msra.mxu0 0
          %2747 = vmatprep.subr.bf16.mxu0 0
          %2748 = vmatpush1.bf16.msra.mxu0 0
          %2749 = vmatprep.subr.bf16.mxu0 0
          %2750 = vmatpush1.bf16.msra.mxu0 0
          %2751 = vmatprep.subr.bf16.mxu0 0
          %2752 = vmatpush1.bf16.msra.mxu0 %v2738
          %2753 = vmatprep.subr.bf16.mxu0 0
          %2754 = vmatpush1.bf16.msra.mxu0 %v2737
          %2755 = vmatprep.subr.bf16.mxu0 0
          %2756 = vmatpush1.bf16.msra.mxu0 %v2736
          %2757 = vmatprep.subr.bf16.mxu0 0
          %2758 = vmatpush1.bf16.msra.mxu0 %v2735
          %2759 = vmatprep.subr.bf16.mxu0 0
          %2760 = vmatpush2.bf16.msra.mxu0 0
          %2761 = vmatprep.subr.bf16.mxu0 0
          %2762 = vmatpush2.bf16.msra.mxu0 0
          %2763 = vmatprep.subr.bf16.mxu0 0
          %2764 = vmatpush2.bf16.msra.mxu0 0
          %2765 = vmatprep.subr.bf16.mxu0 0
          %2766 = vmatpush2.bf16.msra.mxu0 0
          %2767 = vmatprep.subr.bf16.mxu0 0
          %2768 = vmatpush2.bf16.msra.mxu0 0
          %2769 = vmatprep.subr.bf16.mxu0 0
          %2770 = vmatpush2.bf16.msra.mxu0 0
          %2771 = vmatprep.subr.bf16.mxu0 0
          %2772 = vmatpush2.bf16.msra.mxu0 0
          %2773 = vmatprep.subr.bf16.mxu0 0
          %2774 = vmatpush2.bf16.msra.mxu0 0
          %2775 = vmatprep.mubr.bf16.mxu0 0
          %2776 = vmatmul.mubr.bf16.gmra.mxu0 %v2741
          %v2777 = vpop.f32.mrf.mxu0
          %v2778 = vadd.f32 0.0, %v2777
          %v2779 = vpop.f32.mrf.mxu0
          %v2780 = vpop.f32.mrf.mxu0
          %v2781 = vadd.f32 0.0, %v2780
          %v2782 = vpop.f32.mrf.mxu0
          %2783 = vdwg.mxu0
          %v2784 = vpack.c.bf16 %v2781, %v2778
          %v2785 = vld [vmem:[#allocation31] sm:$0xf]
          %v2786 = vld [vmem:[#allocation31 + $0x4] sm:$0xf]
          %v2787 = vld [vmem:[#allocation31 + $0x8] sm:$0xf]
          %v2788 = vld [vmem:[#allocation31 + $0xc] sm:$0xf]
          %v2789 = vld [vmem:[#allocation31 + $0x10] sm:$0xf]
          %v2790 = vld [vmem:[#allocation31 + $0x14] sm:$0xf]
          %v2791 = vld [vmem:[#allocation31 + $0x18] sm:$0xf]
          %v2792 = vld [vmem:[#allocation31 + $0x1c] sm:$0xf]
          %v2793 = vld [vmem:[#allocation32] sm:$0x1]
          %v2795 = vlaneseq
          %v2796 = vshrl.u32 %v2795, 7
          %v2797 = vsub.s32 0, %v2796
          %v2798 = vrot.slane %v2793, %v2797
          %v2808 = vunpack.c.l.b16 %v2785
          %v2809 = vunpack.c.l.b16 %v2786
          %v2810 = vunpack.c.l.b16 %v2787
          %v2811 = vunpack.c.l.b16 %v2788
          %v2812 = vunpack.c.l.b16 %v2789
          %v2813 = vunpack.c.l.b16 %v2790
          %v2814 = vunpack.c.l.b16 %v2791
          %v2815 = vunpack.c.l.b16 %v2792
          %v2816 = vpack.c.b16 %v2809, %v2808
          %v2817 = vpack.c.b16 %v2811, %v2810
          %v2818 = vpack.c.b16 %v2813, %v2812
          %v2819 = vpack.c.b16 %v2815, %v2814
          %v2825 = vsel %vm2739, %v2784, 0
          %2827 = vmatprep.subr.bf16.mxu0 0
          %2828 = vmatpush1.bf16.msra.mxu0 0
          %2829 = vmatprep.subr.bf16.mxu0 0
          %2830 = vmatpush1.bf16.msra.mxu0 0
          %2831 = vmatprep.subr.bf16.mxu0 0
          %2832 = vmatpush1.bf16.msra.mxu0 0
          %2833 = vmatprep.subr.bf16.mxu0 0
          %2834 = vmatpush1.bf16.msra.mxu0 0
          %2835 = vmatprep.subr.bf16.mxu0 0
          %2836 = vmatpush1.bf16.msra.mxu0 %v2819
          %2837 = vmatprep.subr.bf16.mxu0 0
          %2838 = vmatpush1.bf16.msra.mxu0 %v2818
          %2839 = vmatprep.subr.bf16.mxu0 0
          %2840 = vmatpush1.bf16.msra.mxu0 %v2817
          %2841 = vmatprep.subr.bf16.mxu0 0
          %2842 = vmatpush1.bf16.msra.mxu0 %v2816
          %2843 = vmatprep.subr.bf16.mxu0 0
          %2844 = vmatpush2.bf16.msra.mxu0 0
          %2845 = vmatprep.subr.bf16.mxu0 0
          %2846 = vmatpush2.bf16.msra.mxu0 0
          %2847 = vmatprep.subr.bf16.mxu0 0
          %2848 = vmatpush2.bf16.msra.mxu0 0
          %2849 = vmatprep.subr.bf16.mxu0 0
          %2850 = vmatpush2.bf16.msra.mxu0 0
          %2851 = vmatprep.subr.bf16.mxu0 0
          %2852 = vmatpush2.bf16.msra.mxu0 0
          %2853 = vmatprep.subr.bf16.mxu0 0
          %2854 = vmatpush2.bf16.msra.mxu0 0
          %2855 = vmatprep.subr.bf16.mxu0 0
          %2856 = vmatpush2.bf16.msra.mxu0 0
          %2857 = vmatprep.subr.bf16.mxu0 0
          %2858 = vmatpush2.bf16.msra.mxu0 0
          %2859 = vmatprep.mubr.bf16.mxu0 0
          %2860 = vmatmul.mubr.bf16.gmra.mxu0 %v2825
          %v2861 = vpop.f32.mrf.mxu0
          %v2862 = vadd.f32 %v2798, %v2861
          %v2863 = vpop.f32.mrf.mxu0
          %v2864 = vpop.f32.mrf.mxu0
          %v2865 = vadd.f32 %v2798, %v2864
          %v2866 = vpop.f32.mrf.mxu0
          %2867 = vdwg.mxu0
          %v2868 = vmax.f32 %v2862, 0.0
          %v2869 = vmax.f32 %v2865, 0.0
          %v2870 = vpack.c.bf16 %v2869, %v2868
          %v2871 = vld [vmem:[#allocation33] sm:$0xff]
          %v2872 = vld [vmem:[#allocation33 + $0x8] sm:$0xff]
          %v2873 = vld [vmem:[#allocation33 + $0x10] sm:$0xff]
          %v2874 = vld [vmem:[#allocation33 + $0x18] sm:$0xff]
          %v2875 = vld [vmem:[#allocation33 + $0x20] sm:$0xff]
          %v2876 = vld [vmem:[#allocation33 + $0x28] sm:$0xff]
          %v2877 = vld [vmem:[#allocation33 + $0x30] sm:$0xff]
          %v2878 = vld [vmem:[#allocation33 + $0x38] sm:$0xff]
          %v2879 = vld [vmem:[#allocation33 + $0x40] sm:$0xff]
          %v2880 = vld [vmem:[#allocation33 + $0x48] sm:$0xff]
          %v2881 = vld [vmem:[#allocation33 + $0x50] sm:$0xff]
          %v2882 = vld [vmem:[#allocation33 + $0x58] sm:$0xff]
          %v2883 = vld [vmem:[#allocation33 + $0x60] sm:$0xff]
          %v2884 = vld [vmem:[#allocation33 + $0x68] sm:$0xff]
          %v2885 = vld [vmem:[#allocation33 + $0x70] sm:$0xff]
          %v2886 = vld [vmem:[#allocation33 + $0x78] sm:$0xff]
          %v2887 = vld [vmem:[#allocation33 + $0x80] sm:$0xff]
          %v2888 = vld [vmem:[#allocation33 + $0x88] sm:$0xff]
          %v2889 = vld [vmem:[#allocation33 + $0x90] sm:$0xff]
          %v2890 = vld [vmem:[#allocation33 + $0x98] sm:$0xff]
          %v2891 = vld [vmem:[#allocation33 + $0xa0] sm:$0xff]
          %v2892 = vld [vmem:[#allocation33 + $0xa8] sm:$0xff]
          %v2893 = vld [vmem:[#allocation33 + $0xb0] sm:$0xff]
          %v2894 = vld [vmem:[#allocation33 + $0xb8] sm:$0xff]
          %v2895 = vld [vmem:[#allocation33 + $0xc0] sm:$0xff]
          %v2896 = vld [vmem:[#allocation33 + $0xc8] sm:$0xff]
          %v2897 = vld [vmem:[#allocation33 + $0xd0] sm:$0xff]
          %v2898 = vld [vmem:[#allocation33 + $0xd8] sm:$0xff]
          %v2899 = vld [vmem:[#allocation33 + $0xe0] sm:$0xff]
          %v2900 = vld [vmem:[#allocation33 + $0xe8] sm:$0xff]
          %v2901 = vld [vmem:[#allocation33 + $0xf0] sm:$0xff]
          %v2902 = vld [vmem:[#allocation33 + $0xf8] sm:$0xff]
          %v2903 = vld [vmem:[#allocation34] sm:$0xf]
          %v2905 = vlaneseq
          %v2906 = vshrl.u32 %v2905, 7
          %v2907 = vsub.s32 0, %v2906
          %v2908 = vrot.slane %v2903, %v2907
          %v2909 = vlaneseq
          %v2910 = vshrl.u32 %v2909, 7
          %v2911 = vsub.s32 1, %v2910
          %v2912 = vrot.slane %v2903, %v2911
          %v2913 = vlaneseq
          %v2914 = vshrl.u32 %v2913, 7
          %v2915 = vsub.s32 2, %v2914
          %v2916 = vrot.slane %v2903, %v2915
          %v2917 = vlaneseq
          %v2918 = vshrl.u32 %v2917, 7
          %v2919 = vsub.s32 3, %v2918
          %v2920 = vrot.slane %v2903, %v2919
          %v2957 = vunpack.c.l.b16 %v2871
          %v2958 = vunpack.c.h.b16 %v2871
          %v2959 = vunpack.c.l.b16 %v2872
          %v2960 = vunpack.c.h.b16 %v2872
          %v2961 = vunpack.c.l.b16 %v2873
          %v2962 = vunpack.c.h.b16 %v2873
          %v2963 = vunpack.c.l.b16 %v2874
          %v2964 = vunpack.c.h.b16 %v2874
          %v2965 = vunpack.c.l.b16 %v2875
          %v2966 = vunpack.c.h.b16 %v2875
          %v2967 = vunpack.c.l.b16 %v2876
          %v2968 = vunpack.c.h.b16 %v2876
          %v2969 = vunpack.c.l.b16 %v2877
          %v2970 = vunpack.c.h.b16 %v2877
          %v2971 = vunpack.c.l.b16 %v2878
          %v2972 = vunpack.c.h.b16 %v2878
          %v2973 = vunpack.c.l.b16 %v2879
          %v2974 = vunpack.c.h.b16 %v2879
          %v2975 = vunpack.c.l.b16 %v2880
          %v2976 = vunpack.c.h.b16 %v2880
          %v2977 = vunpack.c.l.b16 %v2881
          %v2978 = vunpack.c.h.b16 %v2881
          %v2979 = vunpack.c.l.b16 %v2882
          %v2980 = vunpack.c.h.b16 %v2882
          %v2981 = vunpack.c.l.b16 %v2883
          %v2982 = vunpack.c.h.b16 %v2883
          %v2983 = vunpack.c.l.b16 %v2884
          %v2984 = vunpack.c.h.b16 %v2884
          %v2985 = vunpack.c.l.b16 %v2885
          %v2986 = vunpack.c.h.b16 %v2885
          %v2987 = vunpack.c.l.b16 %v2886
          %v2988 = vunpack.c.h.b16 %v2886
          %v2989 = vunpack.c.l.b16 %v2887
          %v2990 = vunpack.c.h.b16 %v2887
          %v2991 = vunpack.c.l.b16 %v2888
          %v2992 = vunpack.c.h.b16 %v2888
          %v2993 = vunpack.c.l.b16 %v2889
          %v2994 = vunpack.c.h.b16 %v2889
          %v2995 = vunpack.c.l.b16 %v2890
          %v2996 = vunpack.c.h.b16 %v2890
          %v2997 = vunpack.c.l.b16 %v2891
          %v2998 = vunpack.c.h.b16 %v2891
          %v2999 = vunpack.c.l.b16 %v2892
          %v3000 = vunpack.c.h.b16 %v2892
          %v3001 = vunpack.c.l.b16 %v2893
          %v3002 = vunpack.c.h.b16 %v2893
          %v3003 = vunpack.c.l.b16 %v2894
          %v3004 = vunpack.c.h.b16 %v2894
          %v3005 = vunpack.c.l.b16 %v2895
          %v3006 = vunpack.c.h.b16 %v2895
          %v3007 = vunpack.c.l.b16 %v2896
          %v3008 = vunpack.c.h.b16 %v2896
          %v3009 = vunpack.c.l.b16 %v2897
          %v3010 = vunpack.c.h.b16 %v2897
          %v3011 = vunpack.c.l.b16 %v2898
          %v3012 = vunpack.c.h.b16 %v2898
          %v3013 = vunpack.c.l.b16 %v2899
          %v3014 = vunpack.c.h.b16 %v2899
          %v3015 = vunpack.c.l.b16 %v2900
          %v3016 = vunpack.c.h.b16 %v2900
          %v3017 = vunpack.c.l.b16 %v2901
          %v3018 = vunpack.c.h.b16 %v2901
          %v3019 = vunpack.c.l.b16 %v2902
          %v3020 = vunpack.c.h.b16 %v2902
          %v3021 = vpack.c.b16 %v2961, %v2957
          %v3022 = vpack.c.b16 %v2962, %v2958
          %v3023 = vpack.c.b16 %v2963, %v2959
          %v3024 = vpack.c.b16 %v2964, %v2960
          %v3025 = vpack.c.b16 %v2969, %v2965
          %v3026 = vpack.c.b16 %v2970, %v2966
          %v3027 = vpack.c.b16 %v2971, %v2967
          %v3028 = vpack.c.b16 %v2972, %v2968
          %v3029 = vpack.c.b16 %v2977, %v2973
          %v3030 = vpack.c.b16 %v2978, %v2974
          %v3031 = vpack.c.b16 %v2979, %v2975
          %v3032 = vpack.c.b16 %v2980, %v2976
          %v3033 = vpack.c.b16 %v2985, %v2981
          %v3034 = vpack.c.b16 %v2986, %v2982
          %v3035 = vpack.c.b16 %v2987, %v2983
          %v3036 = vpack.c.b16 %v2988, %v2984
          %v3037 = vpack.c.b16 %v2993, %v2989
          %v3038 = vpack.c.b16 %v2994, %v2990
          %v3039 = vpack.c.b16 %v2995, %v2991
          %v3040 = vpack.c.b16 %v2996, %v2992
          %v3041 = vpack.c.b16 %v3001, %v2997
          %v3042 = vpack.c.b16 %v3002, %v2998
          %v3043 = vpack.c.b16 %v3003, %v2999
          %v3044 = vpack.c.b16 %v3004, %v3000
          %v3045 = vpack.c.b16 %v3009, %v3005
          %v3046 = vpack.c.b16 %v3010, %v3006
          %v3047 = vpack.c.b16 %v3011, %v3007
          %v3048 = vpack.c.b16 %v3012, %v3008
          %v3049 = vpack.c.b16 %v3017, %v3013
          %v3050 = vpack.c.b16 %v3018, %v3014
          %v3051 = vpack.c.b16 %v3019, %v3015
          %v3052 = vpack.c.b16 %v3020, %v3016
          %3085 = vmatprep.subr.bf16.mxu0 %v3050
          %3086 = vmatpush1.bf16.msra.mxu0 %v3049
          %3087 = vmatprep.subr.bf16.mxu0 %v3046
          %3088 = vmatpush1.bf16.msra.mxu0 %v3045
          %3089 = vmatprep.subr.bf16.mxu0 %v3042
          %3090 = vmatpush1.bf16.msra.mxu0 %v3041
          %3091 = vmatprep.subr.bf16.mxu0 %v3038
          %3092 = vmatpush1.bf16.msra.mxu0 %v3037
          %3093 = vmatprep.subr.bf16.mxu0 %v3034
          %3094 = vmatpush1.bf16.msra.mxu0 %v3033
          %3095 = vmatprep.subr.bf16.mxu0 %v3030
          %3096 = vmatpush1.bf16.msra.mxu0 %v3029
          %3097 = vmatprep.subr.bf16.mxu0 %v3026
          %3098 = vmatpush1.bf16.msra.mxu0 %v3025
          %3099 = vmatprep.subr.bf16.mxu0 %v3022
          %3100 = vmatpush1.bf16.msra.mxu0 %v3021
          %3101 = vmatprep.subr.bf16.mxu0 0
          %3102 = vmatpush2.bf16.msra.mxu0 0
          %3103 = vmatprep.subr.bf16.mxu0 0
          %3104 = vmatpush2.bf16.msra.mxu0 0
          %3105 = vmatprep.subr.bf16.mxu0 0
          %3106 = vmatpush2.bf16.msra.mxu0 0
          %3107 = vmatprep.subr.bf16.mxu0 0
          %3108 = vmatpush2.bf16.msra.mxu0 0
          %3109 = vmatprep.subr.bf16.mxu0 0
          %3110 = vmatpush2.bf16.msra.mxu0 0
          %3111 = vmatprep.subr.bf16.mxu0 0
          %3112 = vmatpush2.bf16.msra.mxu0 0
          %3113 = vmatprep.subr.bf16.mxu0 0
          %3114 = vmatpush2.bf16.msra.mxu0 0
          %3115 = vmatprep.subr.bf16.mxu0 0
          %3116 = vmatpush2.bf16.msra.mxu0 0
          %3117 = vmatprep.mubr.bf16.mxu0 0
          %3118 = vmatmul.mubr.bf16.gmra.mxu0 %v2870
          %v3119 = vpop.f32.mrf.mxu0
          %v3120 = vadd.f32 %v2908, %v3119
          %v3121 = vpop.f32.mrf.mxu0
          %v3122 = vadd.f32 %v2912, %v3121
          %v3123 = vpop.f32.mrf.mxu0
          %v3124 = vadd.f32 %v2908, %v3123
          %v3125 = vpop.f32.mrf.mxu0
          %v3126 = vadd.f32 %v2912, %v3125
          %3127 = vdwg.mxu0
          %3128 = vmatprep.subr.bf16.mxu0 %v3052
          %3129 = vmatpush1.bf16.msra.mxu0 %v3051
          %3130 = vmatprep.subr.bf16.mxu0 %v3048
          %3131 = vmatpush1.bf16.msra.mxu0 %v3047
          %3132 = vmatprep.subr.bf16.mxu0 %v3044
          %3133 = vmatpush1.bf16.msra.mxu0 %v3043
          %3134 = vmatprep.subr.bf16.mxu0 %v3040
          %3135 = vmatpush1.bf16.msra.mxu0 %v3039
          %3136 = vmatprep.subr.bf16.mxu0 %v3036
          %3137 = vmatpush1.bf16.msra.mxu0 %v3035
          %3138 = vmatprep.subr.bf16.mxu0 %v3032
          %3139 = vmatpush1.bf16.msra.mxu0 %v3031
          %3140 = vmatprep.subr.bf16.mxu0 %v3028
          %3141 = vmatpush1.bf16.msra.mxu0 %v3027
          %3142 = vmatprep.subr.bf16.mxu0 %v3024
          %3143 = vmatpush1.bf16.msra.mxu0 %v3023
          %3144 = vmatprep.subr.bf16.mxu0 0
          %3145 = vmatpush2.bf16.msra.mxu0 0
          %3146 = vmatprep.subr.bf16.mxu0 0
          %3147 = vmatpush2.bf16.msra.mxu0 0
          %3148 = vmatprep.subr.bf16.mxu0 0
          %3149 = vmatpush2.bf16.msra.mxu0 0
          %3150 = vmatprep.subr.bf16.mxu0 0
          %3151 = vmatpush2.bf16.msra.mxu0 0
          %3152 = vmatprep.subr.bf16.mxu0 0
          %3153 = vmatpush2.bf16.msra.mxu0 0
          %3154 = vmatprep.subr.bf16.mxu0 0
          %3155 = vmatpush2.bf16.msra.mxu0 0
          %3156 = vmatprep.subr.bf16.mxu0 0
          %3157 = vmatpush2.bf16.msra.mxu0 0
          %3158 = vmatprep.subr.bf16.mxu0 0
          %3159 = vmatpush2.bf16.msra.mxu0 0
          %3160 = vmatprep.mubr.bf16.mxu0 0
          %3161 = vmatmul.mubr.bf16.gmra.mxu0 %v2870
          %v3162 = vpop.f32.mrf.mxu0
          %v3163 = vadd.f32 %v2916, %v3162
          %v3164 = vpop.f32.mrf.mxu0
          %v3165 = vadd.f32 %v2920, %v3164
          %v3166 = vpop.f32.mrf.mxu0
          %v3167 = vadd.f32 %v2916, %v3166
          %v3168 = vpop.f32.mrf.mxu0
          %v3169 = vadd.f32 %v2920, %v3168
          %3170 = vdwg.mxu0
          %v3171 = vmax.f32 %v3120, 0.0
          %v3172 = vmax.f32 %v3122, 0.0
          %v3173 = vmax.f32 %v3163, 0.0
          %v3174 = vmax.f32 %v3165, 0.0
          %v3175 = vmax.f32 %v3124, 0.0
          %v3176 = vmax.f32 %v3126, 0.0
          %v3177 = vmax.f32 %v3167, 0.0
          %v3178 = vmax.f32 %v3169, 0.0
          %v3179 = vmax.f32 %v3171, %v3175
          %v3180 = vrot.slane %v3179, 4
          %v3181 = vmax.f32 %v3179, %v3180
          %v3182 = vrot.slane %v3181, 2
          %v3183 = vmax.f32 %v3181, %v3182
          %v3184 = vrot.slane %v3183, 1
          %v3185 = vmax.f32 %v3183, %v3184
          %v3186 = vmax.f32 %v3172, %v3176
          %v3187 = vrot.slane %v3186, 4
          %v3188 = vmax.f32 %v3186, %v3187
          %v3189 = vrot.slane %v3188, 2
          %v3190 = vmax.f32 %v3188, %v3189
          %v3191 = vrot.slane %v3190, 1
          %v3192 = vmax.f32 %v3190, %v3191
          %v3193 = vmax.f32 %v3173, %v3177
          %v3194 = vrot.slane %v3193, 4
          %v3195 = vmax.f32 %v3193, %v3194
          %v3196 = vrot.slane %v3195, 2
          %v3197 = vmax.f32 %v3195, %v3196
          %v3198 = vrot.slane %v3197, 1
          %v3199 = vmax.f32 %v3197, %v3198
          %v3200 = vmax.f32 %v3174, %v3178
          %v3201 = vrot.slane %v3200, 4
          %v3202 = vmax.f32 %v3200, %v3201
          %v3203 = vrot.slane %v3202, 2
          %v3204 = vmax.f32 %v3202, %v3203
          %v3205 = vrot.slane %v3204, 1
          %v3206 = vmax.f32 %v3204, %v3205
          %v3207 = vpack.c.bf16 %v3185, %v3185
          %v3208 = vpack.c.bf16 %v3192, %v3192
          %v3209 = vpack.c.bf16 %v3199, %v3199
          %v3210 = vpack.c.bf16 %v3206, %v3206
          %v3211 = vld [vmem:[#allocation35] sm:$0xff]
          %v3212 = vld [vmem:[#allocation35 + $0x8] sm:$0xff]
          %v3213 = vld [vmem:[#allocation35 + $0x10] sm:$0xff]
          %v3214 = vld [vmem:[#allocation35 + $0x18] sm:$0xff]
          %v3215 = vld [vmem:[#allocation35 + $0x20] sm:$0xff]
          %v3216 = vld [vmem:[#allocation35 + $0x28] sm:$0xff]
          %v3217 = vld [vmem:[#allocation35 + $0x30] sm:$0xff]
          %v3218 = vld [vmem:[#allocation35 + $0x38] sm:$0xff]
          %v3219 = vld [vmem:[#allocation35 + $0x40] sm:$0xff]
          %v3220 = vld [vmem:[#allocation35 + $0x48] sm:$0xff]
          %v3221 = vld [vmem:[#allocation35 + $0x50] sm:$0xff]
          %v3222 = vld [vmem:[#allocation35 + $0x58] sm:$0xff]
          %v3223 = vld [vmem:[#allocation35 + $0x60] sm:$0xff]
          %v3224 = vld [vmem:[#allocation35 + $0x68] sm:$0xff]
          %v3225 = vld [vmem:[#allocation35 + $0x70] sm:$0xff]
          %v3226 = vld [vmem:[#allocation35 + $0x78] sm:$0xff]
          %v3227 = vld [vmem:[#allocation35 + $0x80] sm:$0xff]
          %v3228 = vld [vmem:[#allocation35 + $0x88] sm:$0xff]
          %v3229 = vld [vmem:[#allocation35 + $0x90] sm:$0xff]
          %v3230 = vld [vmem:[#allocation35 + $0x98] sm:$0xff]
          %v3231 = vld [vmem:[#allocation35 + $0xa0] sm:$0xff]
          %v3232 = vld [vmem:[#allocation35 + $0xa8] sm:$0xff]
          %v3233 = vld [vmem:[#allocation35 + $0xb0] sm:$0xff]
          %v3234 = vld [vmem:[#allocation35 + $0xb8] sm:$0xff]
          %v3235 = vld [vmem:[#allocation35 + $0xc0] sm:$0xff]
          %v3236 = vld [vmem:[#allocation35 + $0xc8] sm:$0xff]
          %v3237 = vld [vmem:[#allocation35 + $0xd0] sm:$0xff]
          %v3238 = vld [vmem:[#allocation35 + $0xd8] sm:$0xff]
          %v3239 = vld [vmem:[#allocation35 + $0xe0] sm:$0xff]
          %v3240 = vld [vmem:[#allocation35 + $0xe8] sm:$0xff]
          %v3241 = vld [vmem:[#allocation35 + $0xf0] sm:$0xff]
          %v3242 = vld [vmem:[#allocation35 + $0xf8] sm:$0xff]
          %v3243 = vld [vmem:[#allocation35 + $0x100] sm:$0xff]
          %v3244 = vld [vmem:[#allocation35 + $0x108] sm:$0xff]
          %v3245 = vld [vmem:[#allocation35 + $0x110] sm:$0xff]
          %v3246 = vld [vmem:[#allocation35 + $0x118] sm:$0xff]
          %v3247 = vld [vmem:[#allocation35 + $0x120] sm:$0xff]
          %v3248 = vld [vmem:[#allocation35 + $0x128] sm:$0xff]
          %v3249 = vld [vmem:[#allocation35 + $0x130] sm:$0xff]
          %v3250 = vld [vmem:[#allocation35 + $0x138] sm:$0xff]
          %v3251 = vld [vmem:[#allocation35 + $0x140] sm:$0xff]
          %v3252 = vld [vmem:[#allocation35 + $0x148] sm:$0xff]
          %v3253 = vld [vmem:[#allocation35 + $0x150] sm:$0xff]
          %v3254 = vld [vmem:[#allocation35 + $0x158] sm:$0xff]
          %v3255 = vld [vmem:[#allocation35 + $0x160] sm:$0xff]
          %v3256 = vld [vmem:[#allocation35 + $0x168] sm:$0xff]
          %v3257 = vld [vmem:[#allocation35 + $0x170] sm:$0xff]
          %v3258 = vld [vmem:[#allocation35 + $0x178] sm:$0xff]
          %v3259 = vld [vmem:[#allocation35 + $0x180] sm:$0xff]
          %v3260 = vld [vmem:[#allocation35 + $0x188] sm:$0xff]
          %v3261 = vld [vmem:[#allocation35 + $0x190] sm:$0xff]
          %v3262 = vld [vmem:[#allocation35 + $0x198] sm:$0xff]
          %v3263 = vld [vmem:[#allocation35 + $0x1a0] sm:$0xff]
          %v3264 = vld [vmem:[#allocation35 + $0x1a8] sm:$0xff]
          %v3265 = vld [vmem:[#allocation35 + $0x1b0] sm:$0xff]
          %v3266 = vld [vmem:[#allocation35 + $0x1b8] sm:$0xff]
          %v3267 = vld [vmem:[#allocation35 + $0x1c0] sm:$0xff]
          %v3268 = vld [vmem:[#allocation35 + $0x1c8] sm:$0xff]
          %v3269 = vld [vmem:[#allocation35 + $0x1d0] sm:$0xff]
          %v3270 = vld [vmem:[#allocation35 + $0x1d8] sm:$0xff]
          %v3271 = vld [vmem:[#allocation35 + $0x1e0] sm:$0xff]
          %v3272 = vld [vmem:[#allocation35 + $0x1e8] sm:$0xff]
          %v3273 = vld [vmem:[#allocation35 + $0x1f0] sm:$0xff]
          %v3274 = vld [vmem:[#allocation35 + $0x1f8] sm:$0xff]
          %v3275 = vld [vmem:[#allocation36] sm:$0x3]
          %v3340 = vunpack.c.l.b16 %v3211
          %v3341 = vunpack.c.h.b16 %v3211
          %v3342 = vunpack.c.l.b16 %v3212
          %v3343 = vunpack.c.h.b16 %v3212
          %v3344 = vunpack.c.l.b16 %v3213
          %v3345 = vunpack.c.h.b16 %v3213
          %v3346 = vunpack.c.l.b16 %v3214
          %v3347 = vunpack.c.h.b16 %v3214
          %v3348 = vunpack.c.l.b16 %v3215
          %v3349 = vunpack.c.h.b16 %v3215
          %v3350 = vunpack.c.l.b16 %v3216
          %v3351 = vunpack.c.h.b16 %v3216
          %v3352 = vunpack.c.l.b16 %v3217
          %v3353 = vunpack.c.h.b16 %v3217
          %v3354 = vunpack.c.l.b16 %v3218
          %v3355 = vunpack.c.h.b16 %v3218
          %v3356 = vunpack.c.l.b16 %v3219
          %v3357 = vunpack.c.h.b16 %v3219
          %v3358 = vunpack.c.l.b16 %v3220
          %v3359 = vunpack.c.h.b16 %v3220
          %v3360 = vunpack.c.l.b16 %v3221
          %v3361 = vunpack.c.h.b16 %v3221
          %v3362 = vunpack.c.l.b16 %v3222
          %v3363 = vunpack.c.h.b16 %v3222
          %v3364 = vunpack.c.l.b16 %v3223
          %v3365 = vunpack.c.h.b16 %v3223
          %v3366 = vunpack.c.l.b16 %v3224
          %v3367 = vunpack.c.h.b16 %v3224
          %v3368 = vunpack.c.l.b16 %v3225
          %v3369 = vunpack.c.h.b16 %v3225
          %v3370 = vunpack.c.l.b16 %v3226
          %v3371 = vunpack.c.h.b16 %v3226
          %v3372 = vunpack.c.l.b16 %v3227
          %v3373 = vunpack.c.h.b16 %v3227
          %v3374 = vunpack.c.l.b16 %v3228
          %v3375 = vunpack.c.h.b16 %v3228
          %v3376 = vunpack.c.l.b16 %v3229
          %v3377 = vunpack.c.h.b16 %v3229
          %v3378 = vunpack.c.l.b16 %v3230
          %v3379 = vunpack.c.h.b16 %v3230
          %v3380 = vunpack.c.l.b16 %v3231
          %v3381 = vunpack.c.h.b16 %v3231
          %v3382 = vunpack.c.l.b16 %v3232
          %v3383 = vunpack.c.h.b16 %v3232
          %v3384 = vunpack.c.l.b16 %v3233
          %v3385 = vunpack.c.h.b16 %v3233
          %v3386 = vunpack.c.l.b16 %v3234
          %v3387 = vunpack.c.h.b16 %v3234
          %v3388 = vunpack.c.l.b16 %v3235
          %v3389 = vunpack.c.h.b16 %v3235
          %v3390 = vunpack.c.l.b16 %v3236
          %v3391 = vunpack.c.h.b16 %v3236
          %v3392 = vunpack.c.l.b16 %v3237
          %v3393 = vunpack.c.h.b16 %v3237
          %v3394 = vunpack.c.l.b16 %v3238
          %v3395 = vunpack.c.h.b16 %v3238
          %v3396 = vunpack.c.l.b16 %v3239
          %v3397 = vunpack.c.h.b16 %v3239
          %v3398 = vunpack.c.l.b16 %v3240
          %v3399 = vunpack.c.h.b16 %v3240
          %v3400 = vunpack.c.l.b16 %v3241
          %v3401 = vunpack.c.h.b16 %v3241
          %v3402 = vunpack.c.l.b16 %v3242
          %v3403 = vunpack.c.h.b16 %v3242
          %v3404 = vunpack.c.l.b16 %v3243
          %v3405 = vunpack.c.h.b16 %v3243
          %v3406 = vunpack.c.l.b16 %v3244
          %v3407 = vunpack.c.h.b16 %v3244
          %v3408 = vunpack.c.l.b16 %v3245
          %v3409 = vunpack.c.h.b16 %v3245
          %v3410 = vunpack.c.l.b16 %v3246
          %v3411 = vunpack.c.h.b16 %v3246
          %v3412 = vunpack.c.l.b16 %v3247
          %v3413 = vunpack.c.h.b16 %v3247
          %v3414 = vunpack.c.l.b16 %v3248
          %v3415 = vunpack.c.h.b16 %v3248
          %v3416 = vunpack.c.l.b16 %v3249
          %v3417 = vunpack.c.h.b16 %v3249
          %v3418 = vunpack.c.l.b16 %v3250
          %v3419 = vunpack.c.h.b16 %v3250
          %v3420 = vunpack.c.l.b16 %v3251
          %v3421 = vunpack.c.h.b16 %v3251
          %v3422 = vunpack.c.l.b16 %v3252
          %v3423 = vunpack.c.h.b16 %v3252
          %v3424 = vunpack.c.l.b16 %v3253
          %v3425 = vunpack.c.h.b16 %v3253
          %v3426 = vunpack.c.l.b16 %v3254
          %v3427 = vunpack.c.h.b16 %v3254
          %v3428 = vunpack.c.l.b16 %v3255
          %v3429 = vunpack.c.h.b16 %v3255
          %v3430 = vunpack.c.l.b16 %v3256
          %v3431 = vunpack.c.h.b16 %v3256
          %v3432 = vunpack.c.l.b16 %v3257
          %v3433 = vunpack.c.h.b16 %v3257
          %v3434 = vunpack.c.l.b16 %v3258
          %v3435 = vunpack.c.h.b16 %v3258
          %v3436 = vunpack.c.l.b16 %v3259
          %v3437 = vunpack.c.h.b16 %v3259
          %v3438 = vunpack.c.l.b16 %v3260
          %v3439 = vunpack.c.h.b16 %v3260
          %v3440 = vunpack.c.l.b16 %v3261
          %v3441 = vunpack.c.h.b16 %v3261
          %v3442 = vunpack.c.l.b16 %v3262
          %v3443 = vunpack.c.h.b16 %v3262
          %v3444 = vunpack.c.l.b16 %v3263
          %v3445 = vunpack.c.h.b16 %v3263
          %v3446 = vunpack.c.l.b16 %v3264
          %v3447 = vunpack.c.h.b16 %v3264
          %v3448 = vunpack.c.l.b16 %v3265
          %v3449 = vunpack.c.h.b16 %v3265
          %v3450 = vunpack.c.l.b16 %v3266
          %v3451 = vunpack.c.h.b16 %v3266
          %v3452 = vunpack.c.l.b16 %v3267
          %v3453 = vunpack.c.h.b16 %v3267
          %v3454 = vunpack.c.l.b16 %v3268
          %v3455 = vunpack.c.h.b16 %v3268
          %v3456 = vunpack.c.l.b16 %v3269
          %v3457 = vunpack.c.h.b16 %v3269
          %v3458 = vunpack.c.l.b16 %v3270
          %v3459 = vunpack.c.h.b16 %v3270
          %v3460 = vunpack.c.l.b16 %v3271
          %v3461 = vunpack.c.h.b16 %v3271
          %v3462 = vunpack.c.l.b16 %v3272
          %v3463 = vunpack.c.h.b16 %v3272
          %v3464 = vunpack.c.l.b16 %v3273
          %v3465 = vunpack.c.h.b16 %v3273
          %v3466 = vunpack.c.l.b16 %v3274
          %v3467 = vunpack.c.h.b16 %v3274
          %v3468 = vpack.c.b16 %v3342, %v3340
          %v3469 = vpack.c.b16 %v3343, %v3341
          %v3470 = vpack.c.b16 %v3346, %v3344
          %v3471 = vpack.c.b16 %v3347, %v3345
          %v3472 = vpack.c.b16 %v3350, %v3348
          %v3473 = vpack.c.b16 %v3351, %v3349
          %v3474 = vpack.c.b16 %v3354, %v3352
          %v3475 = vpack.c.b16 %v3355, %v3353
          %v3476 = vpack.c.b16 %v3358, %v3356
          %v3477 = vpack.c.b16 %v3359, %v3357
          %v3478 = vpack.c.b16 %v3362, %v3360
          %v3479 = vpack.c.b16 %v3363, %v3361
          %v3480 = vpack.c.b16 %v3366, %v3364
          %v3481 = vpack.c.b16 %v3367, %v3365
          %v3482 = vpack.c.b16 %v3370, %v3368
          %v3483 = vpack.c.b16 %v3371, %v3369
          %v3484 = vpack.c.b16 %v3374, %v3372
          %v3485 = vpack.c.b16 %v3375, %v3373
          %v3486 = vpack.c.b16 %v3378, %v3376
          %v3487 = vpack.c.b16 %v3379, %v3377
          %v3488 = vpack.c.b16 %v3382, %v3380
          %v3489 = vpack.c.b16 %v3383, %v3381
          %v3490 = vpack.c.b16 %v3386, %v3384
          %v3491 = vpack.c.b16 %v3387, %v3385
          %v3492 = vpack.c.b16 %v3390, %v3388
          %v3493 = vpack.c.b16 %v3391, %v3389
          %v3494 = vpack.c.b16 %v3394, %v3392
          %v3495 = vpack.c.b16 %v3395, %v3393
          %v3496 = vpack.c.b16 %v3398, %v3396
          %v3497 = vpack.c.b16 %v3399, %v3397
          %v3498 = vpack.c.b16 %v3402, %v3400
          %v3499 = vpack.c.b16 %v3403, %v3401
          %v3500 = vpack.c.b16 %v3406, %v3404
          %v3501 = vpack.c.b16 %v3407, %v3405
          %v3502 = vpack.c.b16 %v3410, %v3408
          %v3503 = vpack.c.b16 %v3411, %v3409
          %v3504 = vpack.c.b16 %v3414, %v3412
          %v3505 = vpack.c.b16 %v3415, %v3413
          %v3506 = vpack.c.b16 %v3418, %v3416
          %v3507 = vpack.c.b16 %v3419, %v3417
          %v3508 = vpack.c.b16 %v3422, %v3420
          %v3509 = vpack.c.b16 %v3423, %v3421
          %v3510 = vpack.c.b16 %v3426, %v3424
          %v3511 = vpack.c.b16 %v3427, %v3425
          %v3512 = vpack.c.b16 %v3430, %v3428
          %v3513 = vpack.c.b16 %v3431, %v3429
          %v3514 = vpack.c.b16 %v3434, %v3432
          %v3515 = vpack.c.b16 %v3435, %v3433
          %v3516 = vpack.c.b16 %v3438, %v3436
          %v3517 = vpack.c.b16 %v3439, %v3437
          %v3518 = vpack.c.b16 %v3442, %v3440
          %v3519 = vpack.c.b16 %v3443, %v3441
          %v3520 = vpack.c.b16 %v3446, %v3444
          %v3521 = vpack.c.b16 %v3447, %v3445
          %v3522 = vpack.c.b16 %v3450, %v3448
          %v3523 = vpack.c.b16 %v3451, %v3449
          %v3524 = vpack.c.b16 %v3454, %v3452
          %v3525 = vpack.c.b16 %v3455, %v3453
          %v3526 = vpack.c.b16 %v3458, %v3456
          %v3527 = vpack.c.b16 %v3459, %v3457
          %v3528 = vpack.c.b16 %v3462, %v3460
          %v3529 = vpack.c.b16 %v3463, %v3461
          %v3530 = vpack.c.b16 %v3466, %v3464
          %v3531 = vpack.c.b16 %v3467, %v3465
          %v3597 = vlaneseq
          %v3598 = vshrl.u32 %v3597, 7
          %v3599 = vsub.s32 0, %v3598
          %v3600 = vrot.slane %v3275, %v3599
          %v3601 = vlaneseq
          %v3602 = vshrl.u32 %v3601, 7
          %v3603 = vsub.s32 1, %v3602
          %v3604 = vrot.slane %v3275, %v3603
          %3607 = vmatprep.subr.bf16.mxu0 %v3483
          %3608 = vmatpush1.bf16.msra.mxu0 %v3482
          %3609 = vmatprep.subr.bf16.mxu0 %v3481
          %3610 = vmatpush1.bf16.msra.mxu0 %v3480
          %3611 = vmatprep.subr.bf16.mxu0 %v3479
          %3612 = vmatpush1.bf16.msra.mxu0 %v3478
          %3613 = vmatprep.subr.bf16.mxu0 %v3477
          %3614 = vmatpush1.bf16.msra.mxu0 %v3476
          %3615 = vmatprep.subr.bf16.mxu0 %v3475
          %3616 = vmatpush1.bf16.msra.mxu0 %v3474
          %3617 = vmatprep.subr.bf16.mxu0 %v3473
          %3618 = vmatpush1.bf16.msra.mxu0 %v3472
          %3619 = vmatprep.subr.bf16.mxu0 %v3471
          %3620 = vmatpush1.bf16.msra.mxu0 %v3470
          %3621 = vmatprep.subr.bf16.mxu0 %v3469
          %3622 = vmatpush1.bf16.msra.mxu0 %v3468
          %3623 = vmatprep.subr.bf16.mxu0 %v3499
          %3624 = vmatpush2.bf16.msra.mxu0 %v3498
          %3625 = vmatprep.subr.bf16.mxu0 %v3497
          %3626 = vmatpush2.bf16.msra.mxu0 %v3496
          %3627 = vmatprep.subr.bf16.mxu0 %v3495
          %3628 = vmatpush2.bf16.msra.mxu0 %v3494
          %3629 = vmatprep.subr.bf16.mxu0 %v3493
          %3630 = vmatpush2.bf16.msra.mxu0 %v3492
          %3631 = vmatprep.subr.bf16.mxu0 %v3491
          %3632 = vmatpush2.bf16.msra.mxu0 %v3490
          %3633 = vmatprep.subr.bf16.mxu0 %v3489
          %3634 = vmatpush2.bf16.msra.mxu0 %v3488
          %3635 = vmatprep.subr.bf16.mxu0 %v3487
          %3636 = vmatpush2.bf16.msra.mxu0 %v3486
          %3637 = vmatprep.subr.bf16.mxu0 %v3485
          %3638 = vmatpush2.bf16.msra.mxu0 %v3484
          %3639 = vmatprep.mubr.bf16.mxu0 %v3208
          %3640 = vmatmul.mubr.bf16.gmra.mxu0 %v3207
          %v3641 = vpop.f32.mrf.mxu0
          %v3642 = vadd.f32 %v3600, %v3641
          %v3643 = vpop.f32.mrf.mxu0
          %v3644 = vadd.f32 %v3604, %v3643
          %v3645 = vpop.f32.mrf.mxu0
          %v3646 = vpop.f32.mrf.mxu0
          %3647 = vdwg.mxu0
          %3648 = vmatprep.subr.bf16.mxu0 %v3515
          %3649 = vmatpush1.bf16.msra.mxu0 %v3514
          %3650 = vmatprep.subr.bf16.mxu0 %v3513
          %3651 = vmatpush1.bf16.msra.mxu0 %v3512
          %3652 = vmatprep.subr.bf16.mxu0 %v3511
          %3653 = vmatpush1.bf16.msra.mxu0 %v3510
          %3654 = vmatprep.subr.bf16.mxu0 %v3509
          %3655 = vmatpush1.bf16.msra.mxu0 %v3508
          %3656 = vmatprep.subr.bf16.mxu0 %v3507
          %3657 = vmatpush1.bf16.msra.mxu0 %v3506
          %3658 = vmatprep.subr.bf16.mxu0 %v3505
          %3659 = vmatpush1.bf16.msra.mxu0 %v3504
          %3660 = vmatprep.subr.bf16.mxu0 %v3503
          %3661 = vmatpush1.bf16.msra.mxu0 %v3502
          %3662 = vmatprep.subr.bf16.mxu0 %v3501
          %3663 = vmatpush1.bf16.msra.mxu0 %v3500
          %3664 = vmatprep.subr.bf16.mxu0 %v3531
          %3665 = vmatpush2.bf16.msra.mxu0 %v3530
          %3666 = vmatprep.subr.bf16.mxu0 %v3529
          %3667 = vmatpush2.bf16.msra.mxu0 %v3528
          %3668 = vmatprep.subr.bf16.mxu0 %v3527
          %3669 = vmatpush2.bf16.msra.mxu0 %v3526
          %3670 = vmatprep.subr.bf16.mxu0 %v3525
          %3671 = vmatpush2.bf16.msra.mxu0 %v3524
          %3672 = vmatprep.subr.bf16.mxu0 %v3523
          %3673 = vmatpush2.bf16.msra.mxu0 %v3522
          %3674 = vmatprep.subr.bf16.mxu0 %v3521
          %3675 = vmatpush2.bf16.msra.mxu0 %v3520
          %3676 = vmatprep.subr.bf16.mxu0 %v3519
          %3677 = vmatpush2.bf16.msra.mxu0 %v3518
          %3678 = vmatprep.subr.bf16.mxu0 %v3517
          %3679 = vmatpush2.bf16.msra.mxu0 %v3516
          %3680 = vmatprep.mubr.bf16.mxu0 %v3210
          %3681 = vmatmul.mubr.bf16.gmra.mxu0 %v3209
          %v3682 = vpop.f32.mrf.mxu0
          %v3683 = vadd.f32 %v3642, %v3682
          %v3684 = vpop.f32.mrf.mxu0
          %v3685 = vadd.f32 %v3644, %v3684
          %v3686 = vpop.f32.mrf.mxu0
          %v3687 = vpop.f32.mrf.mxu0
          %3688 = vdwg.mxu0
          %v3689 = vmax.f32 %v3683, 0.0
          %v3690 = vmax.f32 %v3685, 0.0
          %v3691 = vpack.c.bf16 %v3689, %v3689
          %v3692 = vpack.c.bf16 %v3690, %v3690
          %v3693 = vld [vmem:[#allocation37] sm:$0xff]
          %v3694 = vld [vmem:[#allocation37 + $0x8] sm:$0xff]
          %v3695 = vld [vmem:[#allocation37 + $0x10] sm:$0xff]
          %v3696 = vld [vmem:[#allocation37 + $0x18] sm:$0xff]
          %v3697 = vld [vmem:[#allocation37 + $0x20] sm:$0xff]
          %v3698 = vld [vmem:[#allocation37 + $0x28] sm:$0xff]
          %v3699 = vld [vmem:[#allocation37 + $0x30] sm:$0xff]
          %v3700 = vld [vmem:[#allocation37 + $0x38] sm:$0xff]
          %v3701 = vld [vmem:[#allocation37 + $0x40] sm:$0xff]
          %v3702 = vld [vmem:[#allocation37 + $0x48] sm:$0xff]
          %v3703 = vld [vmem:[#allocation37 + $0x50] sm:$0xff]
          %v3704 = vld [vmem:[#allocation37 + $0x58] sm:$0xff]
          %v3705 = vld [vmem:[#allocation37 + $0x60] sm:$0xff]
          %v3706 = vld [vmem:[#allocation37 + $0x68] sm:$0xff]
          %v3707 = vld [vmem:[#allocation37 + $0x70] sm:$0xff]
          %v3708 = vld [vmem:[#allocation37 + $0x78] sm:$0xff]
          %v3709 = vld [vmem:[#allocation37 + $0x80] sm:$0xff]
          %v3710 = vld [vmem:[#allocation37 + $0x88] sm:$0xff]
          %v3711 = vld [vmem:[#allocation37 + $0x90] sm:$0xff]
          %v3712 = vld [vmem:[#allocation37 + $0x98] sm:$0xff]
          %v3713 = vld [vmem:[#allocation37 + $0xa0] sm:$0xff]
          %v3714 = vld [vmem:[#allocation37 + $0xa8] sm:$0xff]
          %v3715 = vld [vmem:[#allocation37 + $0xb0] sm:$0xff]
          %v3716 = vld [vmem:[#allocation37 + $0xb8] sm:$0xff]
          %v3717 = vld [vmem:[#allocation37 + $0xc0] sm:$0xff]
          %v3718 = vld [vmem:[#allocation37 + $0xc8] sm:$0xff]
          %v3719 = vld [vmem:[#allocation37 + $0xd0] sm:$0xff]
          %v3720 = vld [vmem:[#allocation37 + $0xd8] sm:$0xff]
          %v3721 = vld [vmem:[#allocation37 + $0xe0] sm:$0xff]
          %v3722 = vld [vmem:[#allocation37 + $0xe8] sm:$0xff]
          %v3723 = vld [vmem:[#allocation37 + $0xf0] sm:$0xff]
          %v3724 = vld [vmem:[#allocation37 + $0xf8] sm:$0xff]
          %v3725 = vld [vmem:[#allocation38] sm:$0x3]
          %v3758 = vunpack.c.l.b16 %v3693
          %v3759 = vunpack.c.h.b16 %v3693
          %v3760 = vunpack.c.l.b16 %v3694
          %v3761 = vunpack.c.h.b16 %v3694
          %v3762 = vunpack.c.l.b16 %v3695
          %v3763 = vunpack.c.h.b16 %v3695
          %v3764 = vunpack.c.l.b16 %v3696
          %v3765 = vunpack.c.h.b16 %v3696
          %v3766 = vunpack.c.l.b16 %v3697
          %v3767 = vunpack.c.h.b16 %v3697
          %v3768 = vunpack.c.l.b16 %v3698
          %v3769 = vunpack.c.h.b16 %v3698
          %v3770 = vunpack.c.l.b16 %v3699
          %v3771 = vunpack.c.h.b16 %v3699
          %v3772 = vunpack.c.l.b16 %v3700
          %v3773 = vunpack.c.h.b16 %v3700
          %v3774 = vunpack.c.l.b16 %v3701
          %v3775 = vunpack.c.h.b16 %v3701
          %v3776 = vunpack.c.l.b16 %v3702
          %v3777 = vunpack.c.h.b16 %v3702
          %v3778 = vunpack.c.l.b16 %v3703
          %v3779 = vunpack.c.h.b16 %v3703
          %v3780 = vunpack.c.l.b16 %v3704
          %v3781 = vunpack.c.h.b16 %v3704
          %v3782 = vunpack.c.l.b16 %v3705
          %v3783 = vunpack.c.h.b16 %v3705
          %v3784 = vunpack.c.l.b16 %v3706
          %v3785 = vunpack.c.h.b16 %v3706
          %v3786 = vunpack.c.l.b16 %v3707
          %v3787 = vunpack.c.h.b16 %v3707
          %v3788 = vunpack.c.l.b16 %v3708
          %v3789 = vunpack.c.h.b16 %v3708
          %v3790 = vunpack.c.l.b16 %v3709
          %v3791 = vunpack.c.h.b16 %v3709
          %v3792 = vunpack.c.l.b16 %v3710
          %v3793 = vunpack.c.h.b16 %v3710
          %v3794 = vunpack.c.l.b16 %v3711
          %v3795 = vunpack.c.h.b16 %v3711
          %v3796 = vunpack.c.l.b16 %v3712
          %v3797 = vunpack.c.h.b16 %v3712
          %v3798 = vunpack.c.l.b16 %v3713
          %v3799 = vunpack.c.h.b16 %v3713
          %v3800 = vunpack.c.l.b16 %v3714
          %v3801 = vunpack.c.h.b16 %v3714
          %v3802 = vunpack.c.l.b16 %v3715
          %v3803 = vunpack.c.h.b16 %v3715
          %v3804 = vunpack.c.l.b16 %v3716
          %v3805 = vunpack.c.h.b16 %v3716
          %v3806 = vunpack.c.l.b16 %v3717
          %v3807 = vunpack.c.h.b16 %v3717
          %v3808 = vunpack.c.l.b16 %v3718
          %v3809 = vunpack.c.h.b16 %v3718
          %v3810 = vunpack.c.l.b16 %v3719
          %v3811 = vunpack.c.h.b16 %v3719
          %v3812 = vunpack.c.l.b16 %v3720
          %v3813 = vunpack.c.h.b16 %v3720
          %v3814 = vunpack.c.l.b16 %v3721
          %v3815 = vunpack.c.h.b16 %v3721
          %v3816 = vunpack.c.l.b16 %v3722
          %v3817 = vunpack.c.h.b16 %v3722
          %v3818 = vunpack.c.l.b16 %v3723
          %v3819 = vunpack.c.h.b16 %v3723
          %v3820 = vunpack.c.l.b16 %v3724
          %v3821 = vunpack.c.h.b16 %v3724
          %v3822 = vpack.c.b16 %v3760, %v3758
          %v3823 = vpack.c.b16 %v3761, %v3759
          %v3824 = vpack.c.b16 %v3764, %v3762
          %v3825 = vpack.c.b16 %v3765, %v3763
          %v3826 = vpack.c.b16 %v3768, %v3766
          %v3827 = vpack.c.b16 %v3769, %v3767
          %v3828 = vpack.c.b16 %v3772, %v3770
          %v3829 = vpack.c.b16 %v3773, %v3771
          %v3830 = vpack.c.b16 %v3776, %v3774
          %v3831 = vpack.c.b16 %v3777, %v3775
          %v3832 = vpack.c.b16 %v3780, %v3778
          %v3833 = vpack.c.b16 %v3781, %v3779
          %v3834 = vpack.c.b16 %v3784, %v3782
          %v3835 = vpack.c.b16 %v3785, %v3783
          %v3836 = vpack.c.b16 %v3788, %v3786
          %v3837 = vpack.c.b16 %v3789, %v3787
          %v3838 = vpack.c.b16 %v3792, %v3790
          %v3839 = vpack.c.b16 %v3793, %v3791
          %v3840 = vpack.c.b16 %v3796, %v3794
          %v3841 = vpack.c.b16 %v3797, %v3795
          %v3842 = vpack.c.b16 %v3800, %v3798
          %v3843 = vpack.c.b16 %v3801, %v3799
          %v3844 = vpack.c.b16 %v3804, %v3802
          %v3845 = vpack.c.b16 %v3805, %v3803
          %v3846 = vpack.c.b16 %v3808, %v3806
          %v3847 = vpack.c.b16 %v3809, %v3807
          %v3848 = vpack.c.b16 %v3812, %v3810
          %v3849 = vpack.c.b16 %v3813, %v3811
          %v3850 = vpack.c.b16 %v3816, %v3814
          %v3851 = vpack.c.b16 %v3817, %v3815
          %v3852 = vpack.c.b16 %v3820, %v3818
          %v3853 = vpack.c.b16 %v3821, %v3819
          %v3887 = vlaneseq
          %v3888 = vshrl.u32 %v3887, 7
          %v3889 = vsub.s32 0, %v3888
          %v3890 = vrot.slane %v3725, %v3889
          %v3891 = vlaneseq
          %v3892 = vshrl.u32 %v3891, 7
          %v3893 = vsub.s32 1, %v3892
          %v3894 = vrot.slane %v3725, %v3893
          %3897 = vmatprep.subr.bf16.mxu0 %v3837
          %3898 = vmatpush1.bf16.msra.mxu0 %v3836
          %3899 = vmatprep.subr.bf16.mxu0 %v3835
          %3900 = vmatpush1.bf16.msra.mxu0 %v3834
          %3901 = vmatprep.subr.bf16.mxu0 %v3833
          %3902 = vmatpush1.bf16.msra.mxu0 %v3832
          %3903 = vmatprep.subr.bf16.mxu0 %v3831
          %3904 = vmatpush1.bf16.msra.mxu0 %v3830
          %3905 = vmatprep.subr.bf16.mxu0 %v3829
          %3906 = vmatpush1.bf16.msra.mxu0 %v3828
          %3907 = vmatprep.subr.bf16.mxu0 %v3827
          %3908 = vmatpush1.bf16.msra.mxu0 %v3826
          %3909 = vmatprep.subr.bf16.mxu0 %v3825
          %3910 = vmatpush1.bf16.msra.mxu0 %v3824
          %3911 = vmatprep.subr.bf16.mxu0 %v3823
          %3912 = vmatpush1.bf16.msra.mxu0 %v3822
          %3913 = vmatprep.subr.bf16.mxu0 %v3853
          %3914 = vmatpush2.bf16.msra.mxu0 %v3852
          %3915 = vmatprep.subr.bf16.mxu0 %v3851
          %3916 = vmatpush2.bf16.msra.mxu0 %v3850
          %3917 = vmatprep.subr.bf16.mxu0 %v3849
          %3918 = vmatpush2.bf16.msra.mxu0 %v3848
          %3919 = vmatprep.subr.bf16.mxu0 %v3847
          %3920 = vmatpush2.bf16.msra.mxu0 %v3846
          %3921 = vmatprep.subr.bf16.mxu0 %v3845
          %3922 = vmatpush2.bf16.msra.mxu0 %v3844
          %3923 = vmatprep.subr.bf16.mxu0 %v3843
          %3924 = vmatpush2.bf16.msra.mxu0 %v3842
          %3925 = vmatprep.subr.bf16.mxu0 %v3841
          %3926 = vmatpush2.bf16.msra.mxu0 %v3840
          %3927 = vmatprep.subr.bf16.mxu0 %v3839
          %3928 = vmatpush2.bf16.msra.mxu0 %v3838
          %3929 = vmatprep.mubr.bf16.mxu0 %v3692
          %3930 = vmatmul.mubr.bf16.gmra.mxu0 %v3691
          %v3931 = vpop.f32.mrf.mxu0
          %v3932 = vadd.f32 %v3890, %v3931
          %v3933 = vpop.f32.mrf.mxu0
          %v3934 = vadd.f32 %v3894, %v3933
          %v3935 = vpop.f32.mrf.mxu0
          %v3936 = vpop.f32.mrf.mxu0
          %3937 = vdwg.mxu0
          %v3938 = vmax.f32 %v3932, 0.0
          %v3939 = vmax.f32 %v3934, 0.0
          %v3940 = vld [vmem:[#allocation2] sm:$0x3]
          %v3942 = vlaneseq
          %v3943 = vshrl.u32 %v3942, 7
          %v3944 = vsub.s32 0, %v3943
          %v3945 = vrot.slane %v3940, %v3944
          %v3946 = vlaneseq
          %v3947 = vshrl.u32 %v3946, 7
          %v3948 = vsub.s32 1, %v3947
          %v3949 = vrot.slane %v3940, %v3948
          %v3952 = vpack.c.bf16 %v3945, %v3945
          %v3953 = vpack.c.bf16 %v3949, %v3949
          %v3954 = vld [vmem:[#allocation40] sm:$0xff]
          %v3955 = vld [vmem:[#allocation40 + $0x8] sm:$0xff]
          %v3956 = vld [vmem:[#allocation40 + $0x10] sm:$0xff]
          %v3957 = vld [vmem:[#allocation40 + $0x18] sm:$0xff]
          %v3958 = vld [vmem:[#allocation40 + $0x20] sm:$0xff]
          %v3959 = vld [vmem:[#allocation40 + $0x28] sm:$0xff]
          %v3960 = vld [vmem:[#allocation40 + $0x30] sm:$0xff]
          %v3961 = vld [vmem:[#allocation40 + $0x38] sm:$0xff]
          %v3962 = vld [vmem:[#allocation40 + $0x40] sm:$0xff]
          %v3963 = vld [vmem:[#allocation40 + $0x48] sm:$0xff]
          %v3964 = vld [vmem:[#allocation40 + $0x50] sm:$0xff]
          %v3965 = vld [vmem:[#allocation40 + $0x58] sm:$0xff]
          %v3966 = vld [vmem:[#allocation40 + $0x60] sm:$0xff]
          %v3967 = vld [vmem:[#allocation40 + $0x68] sm:$0xff]
          %v3968 = vld [vmem:[#allocation40 + $0x70] sm:$0xff]
          %v3969 = vld [vmem:[#allocation40 + $0x78] sm:$0xff]
          %v3970 = vld [vmem:[#allocation40 + $0x80] sm:$0xff]
          %v3971 = vld [vmem:[#allocation40 + $0x88] sm:$0xff]
          %v3972 = vld [vmem:[#allocation40 + $0x90] sm:$0xff]
          %v3973 = vld [vmem:[#allocation40 + $0x98] sm:$0xff]
          %v3974 = vld [vmem:[#allocation40 + $0xa0] sm:$0xff]
          %v3975 = vld [vmem:[#allocation40 + $0xa8] sm:$0xff]
          %v3976 = vld [vmem:[#allocation40 + $0xb0] sm:$0xff]
          %v3977 = vld [vmem:[#allocation40 + $0xb8] sm:$0xff]
          %v3978 = vld [vmem:[#allocation40 + $0xc0] sm:$0xff]
          %v3979 = vld [vmem:[#allocation40 + $0xc8] sm:$0xff]
          %v3980 = vld [vmem:[#allocation40 + $0xd0] sm:$0xff]
          %v3981 = vld [vmem:[#allocation40 + $0xd8] sm:$0xff]
          %v3982 = vld [vmem:[#allocation40 + $0xe0] sm:$0xff]
          %v3983 = vld [vmem:[#allocation40 + $0xe8] sm:$0xff]
          %v3984 = vld [vmem:[#allocation40 + $0xf0] sm:$0xff]
          %v3985 = vld [vmem:[#allocation40 + $0xf8] sm:$0xff]
          %v3986 = vpack.c.bf16 %v3938, %v3938
          %v3987 = vpack.c.bf16 %v3939, %v3939
          %v3988 = vld [vmem:[#allocation41] sm:$0xff]
          %v3989 = vld [vmem:[#allocation41 + $0x8] sm:$0xff]
          %v3990 = vld [vmem:[#allocation41 + $0x10] sm:$0xff]
          %v3991 = vld [vmem:[#allocation41 + $0x18] sm:$0xff]
          %v3992 = vld [vmem:[#allocation41 + $0x20] sm:$0xff]
          %v3993 = vld [vmem:[#allocation41 + $0x28] sm:$0xff]
          %v3994 = vld [vmem:[#allocation41 + $0x30] sm:$0xff]
          %v3995 = vld [vmem:[#allocation41 + $0x38] sm:$0xff]
          %v3996 = vld [vmem:[#allocation41 + $0x40] sm:$0xff]
          %v3997 = vld [vmem:[#allocation41 + $0x48] sm:$0xff]
          %v3998 = vld [vmem:[#allocation41 + $0x50] sm:$0xff]
          %v3999 = vld [vmem:[#allocation41 + $0x58] sm:$0xff]
          %v4000 = vld [vmem:[#allocation41 + $0x60] sm:$0xff]
          %v4001 = vld [vmem:[#allocation41 + $0x68] sm:$0xff]
          %v4002 = vld [vmem:[#allocation41 + $0x70] sm:$0xff]
          %v4003 = vld [vmem:[#allocation41 + $0x78] sm:$0xff]
          %v4004 = vld [vmem:[#allocation41 + $0x80] sm:$0xff]
          %v4005 = vld [vmem:[#allocation41 + $0x88] sm:$0xff]
          %v4006 = vld [vmem:[#allocation41 + $0x90] sm:$0xff]
          %v4007 = vld [vmem:[#allocation41 + $0x98] sm:$0xff]
          %v4008 = vld [vmem:[#allocation41 + $0xa0] sm:$0xff]
          %v4009 = vld [vmem:[#allocation41 + $0xa8] sm:$0xff]
          %v4010 = vld [vmem:[#allocation41 + $0xb0] sm:$0xff]
          %v4011 = vld [vmem:[#allocation41 + $0xb8] sm:$0xff]
          %v4012 = vld [vmem:[#allocation41 + $0xc0] sm:$0xff]
          %v4013 = vld [vmem:[#allocation41 + $0xc8] sm:$0xff]
          %v4014 = vld [vmem:[#allocation41 + $0xd0] sm:$0xff]
          %v4015 = vld [vmem:[#allocation41 + $0xd8] sm:$0xff]
          %v4016 = vld [vmem:[#allocation41 + $0xe0] sm:$0xff]
          %v4017 = vld [vmem:[#allocation41 + $0xe8] sm:$0xff]
          %v4018 = vld [vmem:[#allocation41 + $0xf0] sm:$0xff]
          %v4019 = vld [vmem:[#allocation41 + $0xf8] sm:$0xff]
          %v4052 = vunpack.c.l.b16 %v3988
          %v4053 = vunpack.c.h.b16 %v3988
          %v4054 = vunpack.c.l.b16 %v3989
          %v4055 = vunpack.c.h.b16 %v3989
          %v4056 = vunpack.c.l.b16 %v3990
          %v4057 = vunpack.c.h.b16 %v3990
          %v4058 = vunpack.c.l.b16 %v3991
          %v4059 = vunpack.c.h.b16 %v3991
          %v4060 = vunpack.c.l.b16 %v3992
          %v4061 = vunpack.c.h.b16 %v3992
          %v4062 = vunpack.c.l.b16 %v3993
          %v4063 = vunpack.c.h.b16 %v3993
          %v4064 = vunpack.c.l.b16 %v3994
          %v4065 = vunpack.c.h.b16 %v3994
          %v4066 = vunpack.c.l.b16 %v3995
          %v4067 = vunpack.c.h.b16 %v3995
          %v4068 = vunpack.c.l.b16 %v3996
          %v4069 = vunpack.c.h.b16 %v3996
          %v4070 = vunpack.c.l.b16 %v3997
          %v4071 = vunpack.c.h.b16 %v3997
          %v4072 = vunpack.c.l.b16 %v3998
          %v4073 = vunpack.c.h.b16 %v3998
          %v4074 = vunpack.c.l.b16 %v3999
          %v4075 = vunpack.c.h.b16 %v3999
          %v4076 = vunpack.c.l.b16 %v4000
          %v4077 = vunpack.c.h.b16 %v4000
          %v4078 = vunpack.c.l.b16 %v4001
          %v4079 = vunpack.c.h.b16 %v4001
          %v4080 = vunpack.c.l.b16 %v4002
          %v4081 = vunpack.c.h.b16 %v4002
          %v4082 = vunpack.c.l.b16 %v4003
          %v4083 = vunpack.c.h.b16 %v4003
          %v4084 = vunpack.c.l.b16 %v4004
          %v4085 = vunpack.c.h.b16 %v4004
          %v4086 = vunpack.c.l.b16 %v4005
          %v4087 = vunpack.c.h.b16 %v4005
          %v4088 = vunpack.c.l.b16 %v4006
          %v4089 = vunpack.c.h.b16 %v4006
          %v4090 = vunpack.c.l.b16 %v4007
          %v4091 = vunpack.c.h.b16 %v4007
          %v4092 = vunpack.c.l.b16 %v4008
          %v4093 = vunpack.c.h.b16 %v4008
          %v4094 = vunpack.c.l.b16 %v4009
          %v4095 = vunpack.c.h.b16 %v4009
          %v4096 = vunpack.c.l.b16 %v4010
          %v4097 = vunpack.c.h.b16 %v4010
          %v4098 = vunpack.c.l.b16 %v4011
          %v4099 = vunpack.c.h.b16 %v4011
          %v4100 = vunpack.c.l.b16 %v4012
          %v4101 = vunpack.c.h.b16 %v4012
          %v4102 = vunpack.c.l.b16 %v4013
          %v4103 = vunpack.c.h.b16 %v4013
          %v4104 = vunpack.c.l.b16 %v4014
          %v4105 = vunpack.c.h.b16 %v4014
          %v4106 = vunpack.c.l.b16 %v4015
          %v4107 = vunpack.c.h.b16 %v4015
          %v4108 = vunpack.c.l.b16 %v4016
          %v4109 = vunpack.c.h.b16 %v4016
          %v4110 = vunpack.c.l.b16 %v4017
          %v4111 = vunpack.c.h.b16 %v4017
          %v4112 = vunpack.c.l.b16 %v4018
          %v4113 = vunpack.c.h.b16 %v4018
          %v4114 = vunpack.c.l.b16 %v4019
          %v4115 = vunpack.c.h.b16 %v4019
          %v4116 = vpack.c.b16 %v4054, %v4052
          %v4117 = vpack.c.b16 %v4055, %v4053
          %v4118 = vpack.c.b16 %v4058, %v4056
          %v4119 = vpack.c.b16 %v4059, %v4057
          %v4120 = vpack.c.b16 %v4062, %v4060
          %v4121 = vpack.c.b16 %v4063, %v4061
          %v4122 = vpack.c.b16 %v4066, %v4064
          %v4123 = vpack.c.b16 %v4067, %v4065
          %v4124 = vpack.c.b16 %v4070, %v4068
          %v4125 = vpack.c.b16 %v4071, %v4069
          %v4126 = vpack.c.b16 %v4074, %v4072
          %v4127 = vpack.c.b16 %v4075, %v4073
          %v4128 = vpack.c.b16 %v4078, %v4076
          %v4129 = vpack.c.b16 %v4079, %v4077
          %v4130 = vpack.c.b16 %v4082, %v4080
          %v4131 = vpack.c.b16 %v4083, %v4081
          %v4132 = vpack.c.b16 %v4086, %v4084
          %v4133 = vpack.c.b16 %v4087, %v4085
          %v4134 = vpack.c.b16 %v4090, %v4088
          %v4135 = vpack.c.b16 %v4091, %v4089
          %v4136 = vpack.c.b16 %v4094, %v4092
          %v4137 = vpack.c.b16 %v4095, %v4093
          %v4138 = vpack.c.b16 %v4098, %v4096
          %v4139 = vpack.c.b16 %v4099, %v4097
          %v4140 = vpack.c.b16 %v4102, %v4100
          %v4141 = vpack.c.b16 %v4103, %v4101
          %v4142 = vpack.c.b16 %v4106, %v4104
          %v4143 = vpack.c.b16 %v4107, %v4105
          %v4144 = vpack.c.b16 %v4110, %v4108
          %v4145 = vpack.c.b16 %v4111, %v4109
          %v4146 = vpack.c.b16 %v4114, %v4112
          %v4147 = vpack.c.b16 %v4115, %v4113
          %4180 = vmatprep.subr.bf16.mxu0 %v4131
          %4181 = vmatpush1.bf16.msra.mxu0 %v4130
          %4182 = vmatprep.subr.bf16.mxu0 %v4129
          %4183 = vmatpush1.bf16.msra.mxu0 %v4128
          %4184 = vmatprep.subr.bf16.mxu0 %v4127
          %4185 = vmatpush1.bf16.msra.mxu0 %v4126
          %4186 = vmatprep.subr.bf16.mxu0 %v4125
          %4187 = vmatpush1.bf16.msra.mxu0 %v4124
          %4188 = vmatprep.subr.bf16.mxu0 %v4123
          %4189 = vmatpush1.bf16.msra.mxu0 %v4122
          %4190 = vmatprep.subr.bf16.mxu0 %v4121
          %4191 = vmatpush1.bf16.msra.mxu0 %v4120
          %4192 = vmatprep.subr.bf16.mxu0 %v4119
          %4193 = vmatpush1.bf16.msra.mxu0 %v4118
          %4194 = vmatprep.subr.bf16.mxu0 %v4117
          %4195 = vmatpush1.bf16.msra.mxu0 %v4116
          %4196 = vmatprep.subr.bf16.mxu0 %v4147
          %4197 = vmatpush2.bf16.msra.mxu0 %v4146
          %4198 = vmatprep.subr.bf16.mxu0 %v4145
          %4199 = vmatpush2.bf16.msra.mxu0 %v4144
          %4200 = vmatprep.subr.bf16.mxu0 %v4143
          %4201 = vmatpush2.bf16.msra.mxu0 %v4142
          %4202 = vmatprep.subr.bf16.mxu0 %v4141
          %4203 = vmatpush2.bf16.msra.mxu0 %v4140
          %4204 = vmatprep.subr.bf16.mxu0 %v4139
          %4205 = vmatpush2.bf16.msra.mxu0 %v4138
          %4206 = vmatprep.subr.bf16.mxu0 %v4137
          %4207 = vmatpush2.bf16.msra.mxu0 %v4136
          %4208 = vmatprep.subr.bf16.mxu0 %v4135
          %4209 = vmatpush2.bf16.msra.mxu0 %v4134
          %4210 = vmatprep.subr.bf16.mxu0 %v4133
          %4211 = vmatpush2.bf16.msra.mxu0 %v4132
          %4212 = vmatprep.mubr.bf16.mxu0 %v3987
          %4213 = vmatmul.mubr.bf16.gmra.mxu0 %v3986
          %v4214 = vpop.f32.mrf.mxu0
          %v4215 = vadd.f32 0.0, %v4214
          %v4216 = vpop.f32.mrf.mxu0
          %v4217 = vadd.f32 0.0, %v4216
          %v4218 = vpop.f32.mrf.mxu0
          %v4219 = vpop.f32.mrf.mxu0
          %4220 = vdwg.mxu0
          %v4253 = vunpack.c.l.b16 %v3954
          %v4254 = vunpack.c.h.b16 %v3954
          %v4255 = vunpack.c.l.b16 %v3955
          %v4256 = vunpack.c.h.b16 %v3955
          %v4257 = vunpack.c.l.b16 %v3956
          %v4258 = vunpack.c.h.b16 %v3956
          %v4259 = vunpack.c.l.b16 %v3957
          %v4260 = vunpack.c.h.b16 %v3957
          %v4261 = vunpack.c.l.b16 %v3958
          %v4262 = vunpack.c.h.b16 %v3958
          %v4263 = vunpack.c.l.b16 %v3959
          %v4264 = vunpack.c.h.b16 %v3959
          %v4265 = vunpack.c.l.b16 %v3960
          %v4266 = vunpack.c.h.b16 %v3960
          %v4267 = vunpack.c.l.b16 %v3961
          %v4268 = vunpack.c.h.b16 %v3961
          %v4269 = vunpack.c.l.b16 %v3962
          %v4270 = vunpack.c.h.b16 %v3962
          %v4271 = vunpack.c.l.b16 %v3963
          %v4272 = vunpack.c.h.b16 %v3963
          %v4273 = vunpack.c.l.b16 %v3964
          %v4274 = vunpack.c.h.b16 %v3964
          %v4275 = vunpack.c.l.b16 %v3965
          %v4276 = vunpack.c.h.b16 %v3965
          %v4277 = vunpack.c.l.b16 %v3966
          %v4278 = vunpack.c.h.b16 %v3966
          %v4279 = vunpack.c.l.b16 %v3967
          %v4280 = vunpack.c.h.b16 %v3967
          %v4281 = vunpack.c.l.b16 %v3968
          %v4282 = vunpack.c.h.b16 %v3968
          %v4283 = vunpack.c.l.b16 %v3969
          %v4284 = vunpack.c.h.b16 %v3969
          %v4285 = vunpack.c.l.b16 %v3970
          %v4286 = vunpack.c.h.b16 %v3970
          %v4287 = vunpack.c.l.b16 %v3971
          %v4288 = vunpack.c.h.b16 %v3971
          %v4289 = vunpack.c.l.b16 %v3972
          %v4290 = vunpack.c.h.b16 %v3972
          %v4291 = vunpack.c.l.b16 %v3973
          %v4292 = vunpack.c.h.b16 %v3973
          %v4293 = vunpack.c.l.b16 %v3974
          %v4294 = vunpack.c.h.b16 %v3974
          %v4295 = vunpack.c.l.b16 %v3975
          %v4296 = vunpack.c.h.b16 %v3975
          %v4297 = vunpack.c.l.b16 %v3976
          %v4298 = vunpack.c.h.b16 %v3976
          %v4299 = vunpack.c.l.b16 %v3977
          %v4300 = vunpack.c.h.b16 %v3977
          %v4301 = vunpack.c.l.b16 %v3978
          %v4302 = vunpack.c.h.b16 %v3978
          %v4303 = vunpack.c.l.b16 %v3979
          %v4304 = vunpack.c.h.b16 %v3979
          %v4305 = vunpack.c.l.b16 %v3980
          %v4306 = vunpack.c.h.b16 %v3980
          %v4307 = vunpack.c.l.b16 %v3981
          %v4308 = vunpack.c.h.b16 %v3981
          %v4309 = vunpack.c.l.b16 %v3982
          %v4310 = vunpack.c.h.b16 %v3982
          %v4311 = vunpack.c.l.b16 %v3983
          %v4312 = vunpack.c.h.b16 %v3983
          %v4313 = vunpack.c.l.b16 %v3984
          %v4314 = vunpack.c.h.b16 %v3984
          %v4315 = vunpack.c.l.b16 %v3985
          %v4316 = vunpack.c.h.b16 %v3985
          %v4317 = vpack.c.b16 %v4255, %v4253
          %v4318 = vpack.c.b16 %v4256, %v4254
          %v4319 = vpack.c.b16 %v4259, %v4257
          %v4320 = vpack.c.b16 %v4260, %v4258
          %v4321 = vpack.c.b16 %v4263, %v4261
          %v4322 = vpack.c.b16 %v4264, %v4262
          %v4323 = vpack.c.b16 %v4267, %v4265
          %v4324 = vpack.c.b16 %v4268, %v4266
          %v4325 = vpack.c.b16 %v4271, %v4269
          %v4326 = vpack.c.b16 %v4272, %v4270
          %v4327 = vpack.c.b16 %v4275, %v4273
          %v4328 = vpack.c.b16 %v4276, %v4274
          %v4329 = vpack.c.b16 %v4279, %v4277
          %v4330 = vpack.c.b16 %v4280, %v4278
          %v4331 = vpack.c.b16 %v4283, %v4281
          %v4332 = vpack.c.b16 %v4284, %v4282
          %v4333 = vpack.c.b16 %v4287, %v4285
          %v4334 = vpack.c.b16 %v4288, %v4286
          %v4335 = vpack.c.b16 %v4291, %v4289
          %v4336 = vpack.c.b16 %v4292, %v4290
          %v4337 = vpack.c.b16 %v4295, %v4293
          %v4338 = vpack.c.b16 %v4296, %v4294
          %v4339 = vpack.c.b16 %v4299, %v4297
          %v4340 = vpack.c.b16 %v4300, %v4298
          %v4341 = vpack.c.b16 %v4303, %v4301
          %v4342 = vpack.c.b16 %v4304, %v4302
          %v4343 = vpack.c.b16 %v4307, %v4305
          %v4344 = vpack.c.b16 %v4308, %v4306
          %v4345 = vpack.c.b16 %v4311, %v4309
          %v4346 = vpack.c.b16 %v4312, %v4310
          %v4347 = vpack.c.b16 %v4315, %v4313
          %v4348 = vpack.c.b16 %v4316, %v4314
          %4381 = vmatprep.subr.bf16.mxu0 %v4332
          %4382 = vmatpush1.bf16.msra.mxu0 %v4331
          %4383 = vmatprep.subr.bf16.mxu0 %v4330
          %4384 = vmatpush1.bf16.msra.mxu0 %v4329
          %4385 = vmatprep.subr.bf16.mxu0 %v4328
          %4386 = vmatpush1.bf16.msra.mxu0 %v4327
          %4387 = vmatprep.subr.bf16.mxu0 %v4326
          %4388 = vmatpush1.bf16.msra.mxu0 %v4325
          %4389 = vmatprep.subr.bf16.mxu0 %v4324
          %4390 = vmatpush1.bf16.msra.mxu0 %v4323
          %4391 = vmatprep.subr.bf16.mxu0 %v4322
          %4392 = vmatpush1.bf16.msra.mxu0 %v4321
          %4393 = vmatprep.subr.bf16.mxu0 %v4320
          %4394 = vmatpush1.bf16.msra.mxu0 %v4319
          %4395 = vmatprep.subr.bf16.mxu0 %v4318
          %4396 = vmatpush1.bf16.msra.mxu0 %v4317
          %4397 = vmatprep.subr.bf16.mxu0 %v4348
          %4398 = vmatpush2.bf16.msra.mxu0 %v4347
          %4399 = vmatprep.subr.bf16.mxu0 %v4346
          %4400 = vmatpush2.bf16.msra.mxu0 %v4345
          %4401 = vmatprep.subr.bf16.mxu0 %v4344
          %4402 = vmatpush2.bf16.msra.mxu0 %v4343
          %4403 = vmatprep.subr.bf16.mxu0 %v4342
          %4404 = vmatpush2.bf16.msra.mxu0 %v4341
          %4405 = vmatprep.subr.bf16.mxu0 %v4340
          %4406 = vmatpush2.bf16.msra.mxu0 %v4339
          %4407 = vmatprep.subr.bf16.mxu0 %v4338
          %4408 = vmatpush2.bf16.msra.mxu0 %v4337
          %4409 = vmatprep.subr.bf16.mxu0 %v4336
          %4410 = vmatpush2.bf16.msra.mxu0 %v4335
          %4411 = vmatprep.subr.bf16.mxu0 %v4334
          %4412 = vmatpush2.bf16.msra.mxu0 %v4333
          %4413 = vmatprep.mubr.bf16.mxu0 %v3953
          %4414 = vmatmul.mubr.bf16.gmra.mxu0 %v3952
          %v4415 = vpop.f32.mrf.mxu0
          %v4416 = vadd.f32 %v4215, %v4415
          %v4417 = vpop.f32.mrf.mxu0
          %v4418 = vadd.f32 %v4217, %v4417
          %v4419 = vpop.f32.mrf.mxu0
          %v4420 = vpop.f32.mrf.mxu0
          %4421 = vdwg.mxu0
          %v4422 = vld [vmem:[#allocation43] sm:$0x3]
          %v4424 = vlaneseq
          %v4425 = vshrl.u32 %v4424, 7
          %v4426 = vsub.s32 0, %v4425
          %v4427 = vrot.slane %v4422, %v4426
          %v4428 = vlaneseq
          %v4429 = vshrl.u32 %v4428, 7
          %v4430 = vsub.s32 1, %v4429
          %v4431 = vrot.slane %v4422, %v4430
          %v4434 = vadd.f32 %v4416, %v4427
          %v4435 = vadd.f32 %v4418, %v4431
          %v4436 = vmax.f32 %v4434, 0.0
          %v4437 = vmax.f32 %v4435, 0.0
          %v4438 = vpack.c.bf16 %v4436, %v4436
          %v4439 = vpack.c.bf16 %v4437, %v4437
          %v4440 = vld [vmem:[%s57] sm:$0xf]
          %v4441 = vld [vmem:[%s57 + $0x4] sm:$0xf]
          %v4442 = vld [vmem:[%s57 + $0x8] sm:$0xf]
          %v4443 = vld [vmem:[%s57 + $0xc] sm:$0xf]
          %v4444 = vld [vmem:[%s57 + $0x10] sm:$0xf]
          %v4445 = vld [vmem:[%s57 + $0x14] sm:$0xf]
          %v4446 = vld [vmem:[%s57 + $0x18] sm:$0xf]
          %v4447 = vld [vmem:[%s57 + $0x1c] sm:$0xf]
          %v4448 = vld [vmem:[%s57 + $0x20] sm:$0xf]
          %v4449 = vld [vmem:[%s57 + $0x24] sm:$0xf]
          %v4450 = vld [vmem:[%s57 + $0x28] sm:$0xf]
          %v4451 = vld [vmem:[%s57 + $0x2c] sm:$0xf]
          %v4452 = vld [vmem:[%s57 + $0x30] sm:$0xf]
          %v4453 = vld [vmem:[%s57 + $0x34] sm:$0xf]
          %v4454 = vld [vmem:[%s57 + $0x38] sm:$0xf]
          %v4455 = vld [vmem:[%s57 + $0x3c] sm:$0xf]
          %v4456 = vld [vmem:[%s57 + $0x40] sm:$0xf]
          %v4457 = vld [vmem:[%s57 + $0x44] sm:$0xf]
          %v4458 = vld [vmem:[%s57 + $0x48] sm:$0xf]
          %v4459 = vld [vmem:[%s57 + $0x4c] sm:$0xf]
          %v4460 = vld [vmem:[%s57 + $0x50] sm:$0xf]
          %v4461 = vld [vmem:[%s57 + $0x54] sm:$0xf]
          %v4462 = vld [vmem:[%s57 + $0x58] sm:$0xf]
          %v4463 = vld [vmem:[%s57 + $0x5c] sm:$0xf]
          %v4464 = vld [vmem:[%s57 + $0x60] sm:$0xf]
          %v4465 = vld [vmem:[%s57 + $0x64] sm:$0xf]
          %v4466 = vld [vmem:[%s57 + $0x68] sm:$0xf]
          %v4467 = vld [vmem:[%s57 + $0x6c] sm:$0xf]
          %v4468 = vld [vmem:[%s57 + $0x70] sm:$0xf]
          %v4469 = vld [vmem:[%s57 + $0x74] sm:$0xf]
          %v4470 = vld [vmem:[%s57 + $0x78] sm:$0xf]
          %v4471 = vld [vmem:[%s57 + $0x7c] sm:$0xf]
          %v4472 = vld [vmem:[#allocation44] sm:$0x1]
          %v4505 = vunpack.c.l.b16 %v4440
          %v4506 = vunpack.c.l.b16 %v4441
          %v4507 = vunpack.c.l.b16 %v4442
          %v4508 = vunpack.c.l.b16 %v4443
          %v4509 = vunpack.c.l.b16 %v4444
          %v4510 = vunpack.c.l.b16 %v4445
          %v4511 = vunpack.c.l.b16 %v4446
          %v4512 = vunpack.c.l.b16 %v4447
          %v4513 = vunpack.c.l.b16 %v4448
          %v4514 = vunpack.c.l.b16 %v4449
          %v4515 = vunpack.c.l.b16 %v4450
          %v4516 = vunpack.c.l.b16 %v4451
          %v4517 = vunpack.c.l.b16 %v4452
          %v4518 = vunpack.c.l.b16 %v4453
          %v4519 = vunpack.c.l.b16 %v4454
          %v4520 = vunpack.c.l.b16 %v4455
          %v4521 = vunpack.c.l.b16 %v4456
          %v4522 = vunpack.c.l.b16 %v4457
          %v4523 = vunpack.c.l.b16 %v4458
          %v4524 = vunpack.c.l.b16 %v4459
          %v4525 = vunpack.c.l.b16 %v4460
          %v4526 = vunpack.c.l.b16 %v4461
          %v4527 = vunpack.c.l.b16 %v4462
          %v4528 = vunpack.c.l.b16 %v4463
          %v4529 = vunpack.c.l.b16 %v4464
          %v4530 = vunpack.c.l.b16 %v4465
          %v4531 = vunpack.c.l.b16 %v4466
          %v4532 = vunpack.c.l.b16 %v4467
          %v4533 = vunpack.c.l.b16 %v4468
          %v4534 = vunpack.c.l.b16 %v4469
          %v4535 = vunpack.c.l.b16 %v4470
          %v4536 = vunpack.c.l.b16 %v4471
          %v4537 = vpack.c.b16 %v4506, %v4505
          %v4538 = vpack.c.b16 %v4508, %v4507
          %v4539 = vpack.c.b16 %v4510, %v4509
          %v4540 = vpack.c.b16 %v4512, %v4511
          %v4541 = vpack.c.b16 %v4514, %v4513
          %v4542 = vpack.c.b16 %v4516, %v4515
          %v4543 = vpack.c.b16 %v4518, %v4517
          %v4544 = vpack.c.b16 %v4520, %v4519
          %v4545 = vpack.c.b16 %v4522, %v4521
          %v4546 = vpack.c.b16 %v4524, %v4523
          %v4547 = vpack.c.b16 %v4526, %v4525
          %v4548 = vpack.c.b16 %v4528, %v4527
          %v4549 = vpack.c.b16 %v4530, %v4529
          %v4550 = vpack.c.b16 %v4532, %v4531
          %v4551 = vpack.c.b16 %v4534, %v4533
          %v4552 = vpack.c.b16 %v4536, %v4535
          %4569 = vmatprep.subr.bf16.mxu0 0
          %4570 = vmatpush1.bf16.msra.mxu0 %v4544
          %4571 = vmatprep.subr.bf16.mxu0 0
          %4572 = vmatpush1.bf16.msra.mxu0 %v4543
          %4573 = vmatprep.subr.bf16.mxu0 0
          %4574 = vmatpush1.bf16.msra.mxu0 %v4542
          %4575 = vmatprep.subr.bf16.mxu0 0
          %4576 = vmatpush1.bf16.msra.mxu0 %v4541
          %4577 = vmatprep.subr.bf16.mxu0 0
          %4578 = vmatpush1.bf16.msra.mxu0 %v4540
          %4579 = vmatprep.subr.bf16.mxu0 0
          %4580 = vmatpush1.bf16.msra.mxu0 %v4539
          %4581 = vmatprep.subr.bf16.mxu0 0
          %4582 = vmatpush1.bf16.msra.mxu0 %v4538
          %4583 = vmatprep.subr.bf16.mxu0 0
          %4584 = vmatpush1.bf16.msra.mxu0 %v4537
          %4585 = vmatprep.subr.bf16.mxu0 0
          %4586 = vmatpush2.bf16.msra.mxu0 %v4552
          %4587 = vmatprep.subr.bf16.mxu0 0
          %4588 = vmatpush2.bf16.msra.mxu0 %v4551
          %4589 = vmatprep.subr.bf16.mxu0 0
          %4590 = vmatpush2.bf16.msra.mxu0 %v4550
          %4591 = vmatprep.subr.bf16.mxu0 0
          %4592 = vmatpush2.bf16.msra.mxu0 %v4549
          %4593 = vmatprep.subr.bf16.mxu0 0
          %4594 = vmatpush2.bf16.msra.mxu0 %v4548
          %4595 = vmatprep.subr.bf16.mxu0 0
          %4596 = vmatpush2.bf16.msra.mxu0 %v4547
          %4597 = vmatprep.subr.bf16.mxu0 0
          %4598 = vmatpush2.bf16.msra.mxu0 %v4546
          %4599 = vmatprep.subr.bf16.mxu0 0
          %4600 = vmatpush2.bf16.msra.mxu0 %v4545
          %4601 = vmatprep.mubr.bf16.mxu0 %v4439
          %4602 = vmatmul.mubr.bf16.gmra.mxu0 %v4438
          %v4603 = vpop.f32.mrf.mxu0
          %v4604 = vadd.f32 %v4472, %v4603
          %v4605 = vpop.f32.mrf.mxu0
          %v4606 = vpop.f32.mrf.mxu0
          %v4607 = vpop.f32.mrf.mxu0
          %4608 = vdwg.mxu0
          %v4609 = vld [vmem:[%s61] sm:$0xf]
          %v4610 = vld [vmem:[%s61 + $0x4] sm:$0xf]
          %v4611 = vld [vmem:[%s61 + $0x8] sm:$0xf]
          %v4612 = vld [vmem:[%s61 + $0xc] sm:$0xf]
          %v4613 = vld [vmem:[%s61 + $0x10] sm:$0xf]
          %v4614 = vld [vmem:[%s61 + $0x14] sm:$0xf]
          %v4615 = vld [vmem:[%s61 + $0x18] sm:$0xf]
          %v4616 = vld [vmem:[%s61 + $0x1c] sm:$0xf]
          %v4617 = vld [vmem:[%s61 + $0x20] sm:$0xf]
          %v4618 = vld [vmem:[%s61 + $0x24] sm:$0xf]
          %v4619 = vld [vmem:[%s61 + $0x28] sm:$0xf]
          %v4620 = vld [vmem:[%s61 + $0x2c] sm:$0xf]
          %v4621 = vld [vmem:[%s61 + $0x30] sm:$0xf]
          %v4622 = vld [vmem:[%s61 + $0x34] sm:$0xf]
          %v4623 = vld [vmem:[%s61 + $0x38] sm:$0xf]
          %v4624 = vld [vmem:[%s61 + $0x3c] sm:$0xf]
          %v4625 = vld [vmem:[%s61 + $0x40] sm:$0xf]
          %v4626 = vld [vmem:[%s61 + $0x44] sm:$0xf]
          %v4627 = vld [vmem:[%s61 + $0x48] sm:$0xf]
          %v4628 = vld [vmem:[%s61 + $0x4c] sm:$0xf]
          %v4629 = vld [vmem:[%s61 + $0x50] sm:$0xf]
          %v4630 = vld [vmem:[%s61 + $0x54] sm:$0xf]
          %v4631 = vld [vmem:[%s61 + $0x58] sm:$0xf]
          %v4632 = vld [vmem:[%s61 + $0x5c] sm:$0xf]
          %v4633 = vld [vmem:[%s61 + $0x60] sm:$0xf]
          %v4634 = vld [vmem:[%s61 + $0x64] sm:$0xf]
          %v4635 = vld [vmem:[%s61 + $0x68] sm:$0xf]
          %v4636 = vld [vmem:[%s61 + $0x6c] sm:$0xf]
          %v4637 = vld [vmem:[%s61 + $0x70] sm:$0xf]
          %v4638 = vld [vmem:[%s61 + $0x74] sm:$0xf]
          %v4639 = vld [vmem:[%s61 + $0x78] sm:$0xf]
          %v4640 = vld [vmem:[%s61 + $0x7c] sm:$0xf]
          %v4641 = vld [vmem:[#allocation46] sm:$0x1]
          %v4674 = vunpack.c.l.b16 %v4609
          %v4675 = vunpack.c.l.b16 %v4610
          %v4676 = vunpack.c.l.b16 %v4611
          %v4677 = vunpack.c.l.b16 %v4612
          %v4678 = vunpack.c.l.b16 %v4613
          %v4679 = vunpack.c.l.b16 %v4614
          %v4680 = vunpack.c.l.b16 %v4615
          %v4681 = vunpack.c.l.b16 %v4616
          %v4682 = vunpack.c.l.b16 %v4617
          %v4683 = vunpack.c.l.b16 %v4618
          %v4684 = vunpack.c.l.b16 %v4619
          %v4685 = vunpack.c.l.b16 %v4620
          %v4686 = vunpack.c.l.b16 %v4621
          %v4687 = vunpack.c.l.b16 %v4622
          %v4688 = vunpack.c.l.b16 %v4623
          %v4689 = vunpack.c.l.b16 %v4624
          %v4690 = vunpack.c.l.b16 %v4625
          %v4691 = vunpack.c.l.b16 %v4626
          %v4692 = vunpack.c.l.b16 %v4627
          %v4693 = vunpack.c.l.b16 %v4628
          %v4694 = vunpack.c.l.b16 %v4629
          %v4695 = vunpack.c.l.b16 %v4630
          %v4696 = vunpack.c.l.b16 %v4631
          %v4697 = vunpack.c.l.b16 %v4632
          %v4698 = vunpack.c.l.b16 %v4633
          %v4699 = vunpack.c.l.b16 %v4634
          %v4700 = vunpack.c.l.b16 %v4635
          %v4701 = vunpack.c.l.b16 %v4636
          %v4702 = vunpack.c.l.b16 %v4637
          %v4703 = vunpack.c.l.b16 %v4638
          %v4704 = vunpack.c.l.b16 %v4639
          %v4705 = vunpack.c.l.b16 %v4640
          %v4706 = vpack.c.b16 %v4675, %v4674
          %v4707 = vpack.c.b16 %v4677, %v4676
          %v4708 = vpack.c.b16 %v4679, %v4678
          %v4709 = vpack.c.b16 %v4681, %v4680
          %v4710 = vpack.c.b16 %v4683, %v4682
          %v4711 = vpack.c.b16 %v4685, %v4684
          %v4712 = vpack.c.b16 %v4687, %v4686
          %v4713 = vpack.c.b16 %v4689, %v4688
          %v4714 = vpack.c.b16 %v4691, %v4690
          %v4715 = vpack.c.b16 %v4693, %v4692
          %v4716 = vpack.c.b16 %v4695, %v4694
          %v4717 = vpack.c.b16 %v4697, %v4696
          %v4718 = vpack.c.b16 %v4699, %v4698
          %v4719 = vpack.c.b16 %v4701, %v4700
          %v4720 = vpack.c.b16 %v4703, %v4702
          %v4721 = vpack.c.b16 %v4705, %v4704
          %4738 = vmatprep.subr.bf16.mxu0 0
          %4739 = vmatpush1.bf16.msra.mxu0 %v4713
          %4740 = vmatprep.subr.bf16.mxu0 0
          %4741 = vmatpush1.bf16.msra.mxu0 %v4712
          %4742 = vmatprep.subr.bf16.mxu0 0
          %4743 = vmatpush1.bf16.msra.mxu0 %v4711
          %4744 = vmatprep.subr.bf16.mxu0 0
          %4745 = vmatpush1.bf16.msra.mxu0 %v4710
          %4746 = vmatprep.subr.bf16.mxu0 0
          %4747 = vmatpush1.bf16.msra.mxu0 %v4709
          %4748 = vmatprep.subr.bf16.mxu0 0
          %4749 = vmatpush1.bf16.msra.mxu0 %v4708
          %4750 = vmatprep.subr.bf16.mxu0 0
          %4751 = vmatpush1.bf16.msra.mxu0 %v4707
          %4752 = vmatprep.subr.bf16.mxu0 0
          %4753 = vmatpush1.bf16.msra.mxu0 %v4706
          %4754 = vmatprep.subr.bf16.mxu0 0
          %4755 = vmatpush2.bf16.msra.mxu0 %v4721
          %4756 = vmatprep.subr.bf16.mxu0 0
          %4757 = vmatpush2.bf16.msra.mxu0 %v4720
          %4758 = vmatprep.subr.bf16.mxu0 0
          %4759 = vmatpush2.bf16.msra.mxu0 %v4719
          %4760 = vmatprep.subr.bf16.mxu0 0
          %4761 = vmatpush2.bf16.msra.mxu0 %v4718
          %4762 = vmatprep.subr.bf16.mxu0 0
          %4763 = vmatpush2.bf16.msra.mxu0 %v4717
          %4764 = vmatprep.subr.bf16.mxu0 0
          %4765 = vmatpush2.bf16.msra.mxu0 %v4716
          %4766 = vmatprep.subr.bf16.mxu0 0
          %4767 = vmatpush2.bf16.msra.mxu0 %v4715
          %4768 = vmatprep.subr.bf16.mxu0 0
          %4769 = vmatpush2.bf16.msra.mxu0 %v4714
          %4770 = vmatprep.mubr.bf16.mxu0 %v4439
          %4771 = vmatmul.mubr.bf16.gmra.mxu0 %v4438
          %v4772 = vpop.f32.mrf.mxu0
          %v4773 = vadd.f32 %v4641, %v4772
          %v4774 = vpop.f32.mrf.mxu0
          %v4775 = vpop.f32.mrf.mxu0
          %v4776 = vpop.f32.mrf.mxu0
          %4777 = vdwg.mxu0
          %v4778 = vmax.f32 %v4773, 0.0
          %v4779 = vand.u32 2147483647, %v4773
          %v4780 = vsub.f32 0.0, %v4779
          %v4781 = vmul.f32 %v4780, 1.442695
          %v4782 = vpow.pop %v4781
          %v4783 = vadd.f32 %v4782, 1.0
          %v4784 = vlog2.pop %v4783
          %v4785 = vmul.f32 %v4784, 0.6931472
          %v4786 = vmul.f32 -0.5, %v4782
          %v4787 = vadd.f32 %v4786, 1.0
          %v4788 = vmul.f32 %v4787, %v4782
          %v4789 = vand.u32 2147483647, %v4782
          %vm4790 = vcmp.lt.f32.partialorder %v4789, 0.0004427343
          %v4791 = vsel %vm4790, %v4788, %v4785
          %v4792 = vadd.f32 %v4778, %v4791
          %v4793 = vld [vmem:[#allocation9] sm:$0x1]
          %v4794 = vmul.f32 %v4792, %v4793
          %v4795 = vadd.f32 %v4604, %v4794
          %v4796 = vtanh.pop %v4795
          %vm4797 = vcmask 24576
          %4798 = vst.msk [vmem:[#allocation47] sm:$0x1] %vm4797, %v4796
        $region272: #{actor_forward.1} parent=147 // pred_fallthru
          _
        // Predicated region
        $region273: #{actor_forward.1} parent=147 // pred_check
          %p4799 = pneg %p783
        $region274: #{actor_forward.1} parent=147 // pred_check_branch
          %4801 = sbr.rel (%p4799) target = $region276
        $region275: #{actor_forward.1} parent=147 // pred_region
          %s4803 = ssub.s32 16, 16
          %4804 = vsyncadd [#allocation8], %s4803
          %s4806 = sshll.u32 [#allocation47], 4
          %s4807 = int_to_ptr.vmem [resolvable:$true] %s4806
          %4809 = dma.vmem_to_hbm [thread:$0]  %s4807, 16, %s65, [#allocation8]
        $region276: #{actor_forward.1} parent=147 // pred_fallthru
          _
        // Predicated region
        $region277: #{actor_forward.1} parent=147 // pred_check
          %p4810 = pneg %p783
        $region278: #{actor_forward.1} parent=147 // pred_check_branch
          %4812 = sbr.rel (%p4810) target = $region280
        $region279: #{actor_forward.1} parent=147 // pred_region
          %4813 = dma.done [#allocation8], 16
        $region280: #{actor_forward.1} parent=147 // pred_fallthru
          _
      $region148: #{actor_forward.1} parent=5 // pred_fallthru
        _
      %p4814 = scmp.le.s32.totalorder 2, %s83
      // Predicated region
      $region281: #{actor_forward.1} parent=5 // pred_check
        %p4815 = pneg %p4814
      $region282: #{actor_forward.1} parent=5 // pred_check_branch
        %4817 = sbr.rel (%p4815) target = $region284
      $region283: #{actor_forward.1} parent=5 // pred_region
        %s4818 = ssub.s32 %s83, 2
      $region284: #{actor_forward.1} parent=5 // pred_fallthru
        _
    $region6: #{actor_forward.1} parent=1 // loop_footer
      %s87 = sadd.s32 1, %s83
    $region7: #{actor_forward.1} parent=1 // loop_footer_branch
      %82 = sbr.rel target = $region3
    $region8: #{actor_forward.1} parent=1 // loop_exit
      _
    %4819 = vsyncpa [#allocation7], 1
    %s4820 = scalar_lea.sflag [#allocation7], 1
    %4821 = vsyncpa %s4820, 1
    %4822 = vsyncpa [#allocation10], 1
    %4823 = vsyncpa [#allocation13], 1
    %4824 = vsyncpa [#allocation16], 1
    %4825 = vsyncpa [#allocation19], 1
    %4826 = vsyncpa [#allocation22], 1
    %4827 = vsyncpa [#allocation25], 1
    %4828 = vsyncpa [#allocation28], 1
    %4829 = vsyncpa [#allocation39], 1
    %4830 = vsyncpa [#allocation42], 1
    %4831 = vsyncpa [#allocation45], 1
    %4832 = vsyncpa [#allocation8], 1
    %s4833 = scalar_lea.sflag [#allocation8], 1
    %4834 = vsyncpa %s4833, 1

</llo_original>
